<compile_context>
chip_gen: v6e
topology: v6e:2x2x1
jax: 0.10.0
libtpu: 0.0.40
codegen_flags: <defaults>
</compile_context>

<pallas_src>
import functools

import jax
import jax.numpy as jnp
from jax import lax
from jax.experimental import pallas as pl
from jax.experimental.pallas import tpu as pltpu

SINKHORN_ITERS = 5


# ----------------------------------------------------------------------------
# Kernel 1: descriptor similarity (MXU) + log-space Sinkhorn with carried
# potentials + fused, normalized soft matching.  Transposed layout in-kernel:
#   z0 : (M, N)   (reference index on sublanes, query index on the 128 lanes)
# Output slab (3, N): rows 0,1 = normalized soft-matched targets, row 2 = pw.
# ----------------------------------------------------------------------------
def _ot_kernel(xd_ref, yd_ref, ykt_ref, bias_ref, out_ref, *,
               sinkhorn_iters, bblk, exp_dtype):
    for bi in range(bblk):
        xd = xd_ref[bi]            # (N, D) bf16   (transpose folded into the MXU)
        yd = yd_ref[bi]            # (M, D) bf16
        ykt = ykt_ref[bi]          # (3, M) f32, rows = [x; y; 1]
        bias = bias_ref[bi]        # (M, N) bf16 additive mask bias (0 valid / -1e9 masked)

        m_dim, n_dim = bias.shape
        d = xd.shape[1]
        scale = 1.0 / float(d) ** 0.5

        # similarity in the transposed (M, N) layout straight off the MXU:
        # (M, D) x (N, D), contracting D on both sides.
        s = lax.dot_general(yd, xd, (((1,), (1,)), ((), ())),
                            preferred_element_type=jnp.float32) * scale
        z0 = s + bias.astype(jnp.float32)          # masked logits (M, N)

        ones_m = jnp.ones((1, m_dim), exp_dtype)   # sums over M via the MXU
        ones_n = jnp.ones((n_dim, 1), exp_dtype)   # sums over N via the MXU

        def body(_, carry):
            f, g = carry
            # row step: normalize over M for every query n
            t = z0 + g
            mx = jnp.max(t, axis=0, keepdims=True)                           # (1, N)
            e = jnp.exp((t - mx).astype(exp_dtype))
            ssum = jnp.dot(ones_m, e, preferred_element_type=jnp.float32)    # (1, N)
            f = jnp.minimum(-(mx + jnp.log(ssum)), 1e6)
            # column step: normalize over N for every reference m
            t2 = z0 + f
            mx2 = jnp.max(t2, axis=1, keepdims=True)                          # (M, 1)
            e2 = jnp.exp((t2 - mx2).astype(exp_dtype))
            ssum2 = jnp.dot(e2, ones_n, preferred_element_type=jnp.float32)   # (M, 1)
            g = jnp.minimum(-(mx2 + jnp.log(ssum2)), 1e6)
            return f, g

        f0 = jnp.zeros((1, n_dim), jnp.float32)
        g0 = jnp.zeros((m_dim, 1), jnp.float32)
        unroll = (m_dim * n_dim) <= 256 * 256      # unroll only for small tiles
        f, g = lax.fori_loop(0, sinkhorn_iters, body, (f0, g0), unroll=unroll)

        # transport plan (transposed); masked entries (z0=-1e9, f,g <= 1e6) underflow
        # exactly to 0 through exp, so no extra select is needed.
        w_t = jnp.exp((z0 + f + g).astype(exp_dtype))                         # (M, N)

        # fused soft matches + row sums on the MXU: (3, M) @ (M, N) -> (3, N)
        res = jnp.dot(ykt.astype(exp_dtype), w_t,
                      preferred_element_type=jnp.float32)
        pw = res[2:3, :]                                                      # (1, N)
        inv = pl.reciprocal(pw + 1e-8, approx=True)                           # EUP slot
        out_ref[bi] = jnp.concatenate([res[0:2, :] * inv, pw], axis=0)        # (3, N)


# ----------------------------------------------------------------------------
# Kernel 2: vectorized RANSAC hypothesis evaluation.  One matmul transforms all
# keypoints under all hypotheses, weighted inlier scores are MXU reductions,
# the best hypothesis is a single argmax, and everything (best errors, inlier
# flags, best 2x3 model) is packed into ONE lane-dense (1, 2N+128) row via
# one-hot / placement matmuls (single wide unmasked store, single output DMA).
# ----------------------------------------------------------------------------
def _ransac_eval_kernel(xkht_ref, slab_ref, a_ref, out_ref, *,
                        ransac_it, thr2, bblk):
    for bi in range(bblk):
        xkht = xkht_ref[bi]        # (3, N) homogeneous keypoints, transposed
        slab = slab_ref[bi]        # (3, N): rows 0,1 = soft targets, row 2 = pw
        a = a_ref[bi]              # (2*it, 3): rows [ax_0..ax_{it-1}, ay_0..ay_{it-1}]

        n = xkht.shape[1]
        width = 2 * n + 128
        tgt_x = slab[0:1, :]
        tgt_y = slab[1:2, :]
        pw = slab[2:3, :]

        # all hypotheses at once: (2*it, 3) @ (3, N) -> (2*it, N)
        preds = jnp.dot(a, xkht, preferred_element_type=jnp.float32)
        dx = preds[:ransac_it, :] - tgt_x
        dy = preds[ransac_it:, :] - tgt_y
        err = dx * dx + dy * dy                            # evaluator: squared L2
        inl = (err < thr2).astype(jnp.float32)

        # weighted inlier scores on the MXU: (it, N) @ (N, 1) -> (it, 1)
        ones_n = jnp.ones((n, 1), jnp.float32)
        scores = jnp.dot(inl * pw, ones_n, preferred_element_type=jnp.float32)

        # first argmax (matches the strict-`>` update rule)
        best = jnp.max(scores)
        it_col = lax.broadcasted_iota(jnp.int32, (ransac_it, 1), 0)
        best_idx = jnp.min(jnp.where(scores >= best, it_col, ransac_it + 1))

        # best-row extraction via one-hot matmuls
        onehot = (lax.broadcasted_iota(jnp.int32, (1, ransac_it), 1)
                  == best_idx).astype(jnp.float32)                              # (1, it)
        best_err = jnp.dot(onehot, err, preferred_element_type=jnp.float32)     # (1, N)
        best_inl = jnp.dot(onehot, inl, preferred_element_type=jnp.float32)     # (1, N)

        lane2 = lax.broadcasted_iota(jnp.int32, (1, 2 * ransac_it), 1)
        oh_x = (lane2 == best_idx).astype(jnp.float32)
        oh_y = (lane2 == best_idx + ransac_it).astype(jnp.float32)
        ax = jnp.dot(oh_x, a, preferred_element_type=jnp.float32)               # (1, 3)
        ay = jnp.dot(oh_y, a, preferred_element_type=jnp.float32)               # (1, 3)

        # lane-placement constants (iota comparisons): scatter each piece into its
        # lane range of the packed output row (no minor-dim concatenation needed).
        lane_n = lax.broadcasted_iota(jnp.int32, (n, width), 1)
        sub_n = lax.broadcasted_iota(jnp.int32, (n, width), 0)
        place_err = (lane_n == sub_n).astype(jnp.float32)                # lanes [0, N)
        place_inl = (lane_n == sub_n + n).astype(jnp.float32)            # lanes [N, 2N)
        lane_3 = lax.broadcasted_iota(jnp.int32, (3, width), 1)
        sub_3 = lax.broadcasted_iota(jnp.int32, (3, width), 0)
        place_ax = (lane_3 == sub_3 + 2 * n).astype(jnp.float32)         # lanes [2N, 2N+3)
        place_ay = (lane_3 == sub_3 + 2 * n + 3).astype(jnp.float32)     # lanes [2N+3, 2N+6)

        packed = (jnp.dot(best_err, place_err, preferred_element_type=jnp.float32)
                  + jnp.dot(best_inl, place_inl, preferred_element_type=jnp.float32)
                  + jnp.dot(ax, place_ax, preferred_element_type=jnp.float32)
                  + jnp.dot(ay, place_ay, preferred_element_type=jnp.float32))
        out_ref[bi] = packed                                              # (1, 2N+128)


# ----------------------------------------------------------------------------
# Solver glue (plain JAX): weighted least-squares 2D affine fit on sampled
# subsets, solved in closed form (symmetric 3x3 adjugate) -> no LU custom calls.
# ----------------------------------------------------------------------------
def _fit_affine_closed_form(xk, tgt, pw, sample_idx, reg=1e-4):
    """xk (B,N,2), tgt (B,N,2), pw (B,N), sample_idx (B,it,S) -> (B, 2*it, 3)."""
    def gather_b(vals, idx):               # vals (N, ...) , idx (it, S)
        return vals[idx]
    gx = jax.vmap(gather_b)(xk, sample_idx)          # (B, it, S, 2)
    gt = jax.vmap(gather_b)(tgt, sample_idx)         # (B, it, S, 2)
    w = jax.vmap(gather_b)(pw, sample_idx)           # (B, it, S)

    xs, ys = gx[..., 0], gx[..., 1]
    tx, ty = gt[..., 0], gt[..., 1]

    def ws(v):
        return jnp.sum(w * v, axis=-1)

    # normal equations G a = b with G = X^T W X + reg*I  (X = [x, y, 1])
    sxx = ws(xs * xs) + reg
    sxy = ws(xs * ys)
    sx = ws(xs)
    syy = ws(ys * ys) + reg
    sy = ws(ys)
    sw = jnp.sum(w, axis=-1) + reg
    bx0, bx1, bx2 = ws(xs * tx), ws(ys * tx), ws(tx)
    by0, by1, by2 = ws(xs * ty), ws(ys * ty), ws(ty)

    # adjugate of the symmetric 3x3
    c00 = syy * sw - sy * sy
    c01 = sx * sy - sxy * sw
    c02 = sxy * sy - syy * sx
    c11 = sxx * sw - sx * sx
    c12 = sxy * sx - sxx * sy
    c22 = sxx * syy - sxy * sxy
    det = sxx * c00 + sxy * c01 + sx * c02
    inv_det = 1.0 / det

    ax = jnp.stack([c00 * bx0 + c01 * bx1 + c02 * bx2,
                    c01 * bx0 + c11 * bx1 + c12 * bx2,
                    c02 * bx0 + c12 * bx1 + c22 * bx2], axis=-1) * inv_det[..., None]
    ay = jnp.stack([c00 * by0 + c01 * by1 + c02 * by2,
                    c01 * by0 + c11 * by1 + c12 * by2,
                    c02 * by0 + c12 * by1 + c22 * by2], axis=-1) * inv_det[..., None]
    return jnp.concatenate([ax, ay], axis=1)          # (B, 2*it, 3)


def _vmem_limit_bytes(block_bytes, live_bytes):
    """Scoped-VMEM request derived from the actual per-step footprint
    (double-buffered DMA blocks + live intermediates), clamped to v7x's 64 MiB."""
    est = 2 * block_bytes + live_bytes
    est = (est * 3) // 2 + (2 << 20)                  # 1.5x + compiler scratch headroom
    return int(min(max(est, 16 << 20), 64 << 20))


@functools.partial(jax.jit,
                   static_argnames=("ransac_ratio", "ransac_it", "ransac_thr",
                                    "batch_block", "bf16_sinkhorn"))
def ransac_matcher(xk, xd, yk, yd, mask, key, *,
                   ransac_ratio=0.6, ransac_it=16, ransac_thr=0.75,
                   batch_block=None, bf16_sinkhorn=False):
    b, n, _ = xk.shape
    m = yk.shape[1]
    d = xd.shape[2]

    # Batch blocking: keep >= 2 grid steps so dimension_semantics=("parallel",)
    # can shard the batch across v7x's two TensorCores, while folding several
    # items per step to amortize the ~0.35us/step grid overhead on v5e/v6e.
    # Override (e.g. batch_block=B -> single step) for per-chip tuning.
    if batch_block is None:
        batch_block = b // 2 if (b > 2 and b % 2 == 0) else 1
    assert b % batch_block == 0, "batch_block must divide the batch size"
    grid_b = b // batch_block

    # bf16 Sinkhorn intermediates help on v6e/v7x (bf16 EUP/VPU, halves the
    # resident (M, N) working set); keep False on v5e (no bf16 VPU/EUP path).
    exp_dtype = jnp.bfloat16 if bf16_sinkhorn else jnp.float32

    # --- compact inputs for kernel 1 (no xd transpose; mask as additive bias) ---
    xd_b = xd.astype(jnp.bfloat16)                                        # (B, N, D)
    yd_b = yd.astype(jnp.bfloat16)                                        # (B, M, D)
    yk_aug_t = jnp.concatenate(
        [jnp.swapaxes(yk, 1, 2), jnp.ones((b, 1, m), jnp.float32)], axis=1)   # (B, 3, M)
    bias_t = jnp.where(jnp.swapaxes(mask, 1, 2) > 0, 0.0, -1e9).astype(jnp.bfloat16)

    k1_block = batch_block * (n * d * 2 + m * d * 2 + 3 * m * 4 + m * n * 2 + 3 * n * 4)
    k1_live = batch_block * 8 * m * n * 4

    # --- optimal transport + fused, normalized soft matching (Pallas kernel 1) ---
    slab = pl.pallas_call(
        functools.partial(_ot_kernel, sinkhorn_iters=SINKHORN_ITERS,
                          bblk=batch_block, exp_dtype=exp_dtype),
        out_shape=jax.ShapeDtypeStruct((b, 3, n), jnp.float32),
        grid_spec=pltpu.PrefetchScalarGridSpec(
            num_scalar_prefetch=0,
            grid=(grid_b,),
            in_specs=[
                pl.BlockSpec((batch_block, n, d), lambda i: (i, 0, 0)),
                pl.BlockSpec((batch_block, m, d), lambda i: (i, 0, 0)),
                pl.BlockSpec((batch_block, 3, m), lambda i: (i, 0, 0)),
                pl.BlockSpec((batch_block, m, n), lambda i: (i, 0, 0)),
            ],
            out_specs=pl.BlockSpec((batch_block, 3, n), lambda i: (i, 0, 0)),
        ),
        compiler_params=pltpu.CompilerParams(
            dimension_semantics=("parallel",),
            vmem_limit_bytes=_vmem_limit_bytes(k1_block, k1_live)),
    )(xd_b, yd_b, yk_aug_t, bias_t)

    tgt = jnp.swapaxes(slab[:, 0:2, :], 1, 2)        # (B, N, 2) normalized soft targets
    pw = slab[:, 2, :]                               # (B, N) soft-match weights

    # --- solver: deterministic subset sampling + closed-form weighted affine LSQ ---
    n_sample = max(3, int(round(ransac_ratio * n)))
    sample_idx = jax.random.randint(key, (b, ransac_it, n_sample), 0, n)
    a_both = _fit_affine_closed_form(xk, tgt, pw, sample_idx)             # (B, 2*it, 3)

    xkh_t = jnp.concatenate(
        [jnp.swapaxes(xk, 1, 2), jnp.ones((b, 1, n), jnp.float32)], axis=1)   # (B, 3, N)

    width = 2 * n + 128
    k2_block = batch_block * (3 * n * 4 + 3 * n * 4 + 2 * ransac_it * 3 * 4 + width * 4)
    k2_live = batch_block * (10 * ransac_it * n * 4 + 2 * n * width * 4)

    # --- evaluator + best-hypothesis selection (Pallas kernel 2, packed output) ---
    packed = pl.pallas_call(
        functools.partial(_ransac_eval_kernel,
                          ransac_it=ransac_it,
                          thr2=float(ransac_thr) ** 2,
                          bblk=batch_block),
        out_shape=jax.ShapeDtypeStruct((b, 1, width), jnp.float32),
        grid_spec=pltpu.PrefetchScalarGridSpec(
            num_scalar_prefetch=0,
            grid=(grid_b,),
            in_specs=[
                pl.BlockSpec((batch_block, 3, n), lambda i: (i, 0, 0)),
                pl.BlockSpec((batch_block, 3, n), lambda i: (i, 0, 0)),
                pl.BlockSpec((batch_block, 2 * ransac_it, 3), lambda i: (i, 0, 0)),
            ],
            out_specs=pl.BlockSpec((batch_block, 1, width), lambda i: (i, 0, 0)),
        ),
        compiler_params=pltpu.CompilerParams(
            dimension_semantics=("parallel",),
            vmem_limit_bytes=_vmem_limit_bytes(k2_block, k2_live)),
    )(xkh_t, slab, a_both)

    best_errors = packed[:, 0, 0:n]                              # (B, N)
    inliers = packed[:, 0, n:2 * n] > 0.5                        # (B, N) bool
    best_model = packed[:, 0, 2 * n:2 * n + 6].reshape(b, 2, 3)  # (B, 2, 3)
    return inliers, best_model, best_errors


if __name__ == "__main__":
    key = jax.random.PRNGKey(0)
    k1, k2, k3, k4, k5, k6 = jax.random.split(key, 6)

    B, N, M, D = 2, 64, 64, 32
    xk = jax.random.uniform(k1, (B, N, 2), jnp.float32) * 10.0
    yk = jax.random.uniform(k2, (B, M, 2), jnp.float32) * 10.0
    xd = jax.random.normal(k3, (B, N, D), jnp.float32)
    yd = jax.random.normal(k4, (B, M, D), jnp.float32)
    mask = (jax.random.uniform(k5, (B, N, M), jnp.float32) > 0.1).astype(jnp.float32)

    inliers, best_model, best_errors = ransac_matcher(
        xk, xd, yk, yd, mask, k6,
        ransac_ratio=0.6, ransac_it=16, ransac_thr=0.75)
    jax.block_until_ready((inliers, best_model, best_errors))

    assert inliers.shape == (B, N)
    assert best_model.shape == (B, 2, 3)
    assert best_errors.shape == (B, N)
    assert bool(jnp.all(jnp.isfinite(best_model)))
    assert bool(jnp.all(jnp.isfinite(best_errors)))
    print("KERNEL_OK")
</pallas_src>

<mosaic_0001>
module attributes {stable_mosaic.version = 11 : i64} {
  func.func @_ot_kernel(%arg0: i32, %arg1: memref<1x64x32xbf16, #tpu.memory_space<vmem>>, %arg2: memref<1x64x32xbf16, #tpu.memory_space<vmem>>, %arg3: memref<1x3x64xf32, #tpu.memory_space<vmem>>, %arg4: memref<1x64x64xbf16, #tpu.memory_space<vmem>>, %arg5: memref<1x3x64xf32, #tpu.memory_space<vmem>>) attributes {dimension_semantics = [#tpu.dimension_semantics<parallel>], iteration_bounds = array<i64: 2>, scalar_prefetch = 0 : i64, scratch_operands = 0 : i64, tpu.core_type = #tpu.core_type<tc>, window_params = [{transform_indices = @transform_0, window_bounds = array<i64: 1, 64, 32>}, {transform_indices = @transform_1, window_bounds = array<i64: 1, 64, 32>}, {transform_indices = @transform_2, window_bounds = array<i64: 1, 3, 64>}, {transform_indices = @transform_3, window_bounds = array<i64: 1, 64, 64>}, {transform_indices = @transform_4, window_bounds = array<i64: 1, 3, 64>}]} {
    %c0 = arith.constant 0 : index
    %c0_0 = arith.constant 0 : index
    %c0_1 = arith.constant 0 : index
    %0 = vector.load %arg1[%c0, %c0_0, %c0_1] : memref<1x64x32xbf16, #tpu.memory_space<vmem>>, vector<1x64x32xbf16>
    %1 = vector.shape_cast %0 : vector<1x64x32xbf16> to vector<64x32xbf16>
    %c0_2 = arith.constant 0 : index
    %c0_3 = arith.constant 0 : index
    %c0_4 = arith.constant 0 : index
    %2 = vector.load %arg2[%c0_2, %c0_3, %c0_4] : memref<1x64x32xbf16, #tpu.memory_space<vmem>>, vector<1x64x32xbf16>
    %3 = vector.shape_cast %2 : vector<1x64x32xbf16> to vector<64x32xbf16>
    %c0_5 = arith.constant 0 : index
    %c0_6 = arith.constant 0 : index
    %c0_7 = arith.constant 0 : index
    %4 = vector.load %arg3[%c0_5, %c0_6, %c0_7] : memref<1x3x64xf32, #tpu.memory_space<vmem>>, vector<1x3x64xf32>
    %5 = vector.shape_cast %4 : vector<1x3x64xf32> to vector<3x64xf32>
    %c0_8 = arith.constant 0 : index
    %c0_9 = arith.constant 0 : index
    %c0_10 = arith.constant 0 : index
    %6 = vector.load %arg4[%c0_8, %c0_9, %c0_10] : memref<1x64x64xbf16, #tpu.memory_space<vmem>>, vector<1x64x64xbf16>
    %7 = vector.shape_cast %6 : vector<1x64x64xbf16> to vector<64x64xbf16>
    %cst = arith.constant dense<0.000000e+00> : vector<64x64xf32>
    %8 = tpu.matmul %3, %1, %cst {dimension_numbers = #tpu.dot_dimension_numbers<[1], [1], [0], [0], [0, 0, 1, 0], [], []>} : vector<64x32xbf16>, vector<64x32xbf16>, vector<64x64xf32> -> vector<64x64xf32>
    %cst_11 = arith.constant 0.176776692 : f32
    %9 = vector.broadcast %cst_11 : f32 to vector<64x64xf32>
    %10 = arith.mulf %8, %9 : vector<64x64xf32>
    %11 = arith.extf %7 : vector<64x64xbf16> to vector<64x64xf32>
    %12 = arith.addf %10, %11 : vector<64x64xf32>
    %cst_12 = arith.constant 1.000000e+00 : f32
    %13 = vector.broadcast %cst_12 : f32 to vector<1x64xf32>
    %cst_13 = arith.constant 1.000000e+00 : f32
    %14 = vector.broadcast %cst_13 : f32 to vector<64x1xf32>
    %cst_14 = arith.constant 0.000000e+00 : f32
    %15 = vector.broadcast %cst_14 : f32 to vector<1x64xf32>
    %cst_15 = arith.constant 0.000000e+00 : f32
    %16 = vector.broadcast %cst_15 : f32 to vector<64x1xf32>
    %c0_i32 = arith.constant 0 : i32
    %17 = vector.broadcast %16 : vector<64x1xf32> to vector<64x64xf32>
    %18 = arith.addf %12, %17 : vector<64x64xf32>
    %cst_16 = arith.constant dense<0xFF800000> : vector<64xf32>
    %19 = vector.multi_reduction <maximumf>, %18, %cst_16 [0] : vector<64x64xf32> to vector<64xf32>
    %20 = vector.shape_cast %19 : vector<64xf32> to vector<1x64xf32>
    %21 = vector.broadcast %20 : vector<1x64xf32> to vector<64x64xf32>
    %22 = arith.subf %18, %21 : vector<64x64xf32>
    %23 = math.exp %22 : vector<64x64xf32>
    %cst_17 = arith.constant dense<0.000000e+00> : vector<1x64xf32>
    %24 = tpu.matmul %13, %23, %cst_17 {dimension_numbers = #tpu.dot_dimension_numbers<[1], [0], [0], [1], [0, 0, 1, 1], [], []>} : vector<1x64xf32>, vector<64x64xf32>, vector<1x64xf32> -> vector<1x64xf32>
    %25 = math.log %24 : vector<1x64xf32>
    %26 = arith.addf %20, %25 : vector<1x64xf32>
    %cst_18 = arith.constant 0.000000e+00 : f32
    %27 = vector.broadcast %cst_18 : f32 to vector<1x64xf32>
    %28 = arith.subf %27, %26 : vector<1x64xf32>
    %cst_19 = arith.constant 1.000000e+06 : f32
    %29 = vector.broadcast %cst_19 : f32 to vector<1x64xf32>
    %30 = arith.minimumf %28, %29 : vector<1x64xf32>
    %31 = vector.broadcast %30 : vector<1x64xf32> to vector<64x64xf32>
    %32 = arith.addf %12, %31 : vector<64x64xf32>
    %cst_20 = arith.constant dense<0xFF800000> : vector<64xf32>
    %33 = vector.multi_reduction <maximumf>, %32, %cst_20 [1] : vector<64x64xf32> to vector<64xf32>
    %34 = vector.shape_cast %33 : vector<64xf32> to vector<64x1xf32>
    %35 = vector.broadcast %34 : vector<64x1xf32> to vector<64x64xf32>
    %36 = arith.subf %32, %35 : vector<64x64xf32>
    %37 = math.exp %36 : vector<64x64xf32>
    %cst_21 = arith.constant dense<0.000000e+00> : vector<64x1xf32>
    %38 = tpu.matmul %37, %14, %cst_21 {dimension_numbers = #tpu.dot_dimension_numbers<[1], [0], [0], [1], [0, 0, 1, 1], [], []>} : vector<64x64xf32>, vector<64x1xf32>, vector<64x1xf32> -> vector<64x1xf32>
    %39 = math.log %38 : vector<64x1xf32>
    %40 = arith.addf %34, %39 : vector<64x1xf32>
    %cst_22 = arith.constant 0.000000e+00 : f32
    %41 = vector.broadcast %cst_22 : f32 to vector<64x1xf32>
    %42 = arith.subf %41, %40 : vector<64x1xf32>
    %cst_23 = arith.constant 1.000000e+06 : f32
    %43 = vector.broadcast %cst_23 : f32 to vector<64x1xf32>
    %44 = arith.minimumf %42, %43 : vector<64x1xf32>
    %c1_i32 = arith.constant 1 : i32
    %45 = vector.broadcast %44 : vector<64x1xf32> to vector<64x64xf32>
    %46 = arith.addf %12, %45 : vector<64x64xf32>
    %cst_24 = arith.constant dense<0xFF800000> : vector<64xf32>
    %47 = vector.multi_reduction <maximumf>, %46, %cst_24 [0] : vector<64x64xf32> to vector<64xf32>
    %48 = vector.shape_cast %47 : vector<64xf32> to vector<1x64xf32>
    %49 = vector.broadcast %48 : vector<1x64xf32> to vector<64x64xf32>
    %50 = arith.subf %46, %49 : vector<64x64xf32>
    %51 = math.exp %50 : vector<64x64xf32>
    %cst_25 = arith.constant dense<0.000000e+00> : vector<1x64xf32>
    %52 = tpu.matmul %13, %51, %cst_25 {dimension_numbers = #tpu.dot_dimension_numbers<[1], [0], [0], [1], [0, 0, 1, 1], [], []>} : vector<1x64xf32>, vector<64x64xf32>, vector<1x64xf32> -> vector<1x64xf32>
    %53 = math.log %52 : vector<1x64xf32>
    %54 = arith.addf %48, %53 : vector<1x64xf32>
    %cst_26 = arith.constant 0.000000e+00 : f32
    %55 = vector.broadcast %cst_26 : f32 to vector<1x64xf32>
    %56 = arith.subf %55, %54 : vector<1x64xf32>
    %cst_27 = arith.constant 1.000000e+06 : f32
    %57 = vector.broadcast %cst_27 : f32 to vector<1x64xf32>
    %58 = arith.minimumf %56, %57 : vector<1x64xf32>
    %59 = vector.broadcast %58 : vector<1x64xf32> to vector<64x64xf32>
    %60 = arith.addf %12, %59 : vector<64x64xf32>
    %cst_28 = arith.constant dense<0xFF800000> : vector<64xf32>
    %61 = vector.multi_reduction <maximumf>, %60, %cst_28 [1] : vector<64x64xf32> to vector<64xf32>
    %62 = vector.shape_cast %61 : vector<64xf32> to vector<64x1xf32>
    %63 = vector.broadcast %62 : vector<64x1xf32> to vector<64x64xf32>
    %64 = arith.subf %60, %63 : vector<64x64xf32>
    %65 = math.exp %64 : vector<64x64xf32>
    %cst_29 = arith.constant dense<0.000000e+00> : vector<64x1xf32>
    %66 = tpu.matmul %65, %14, %cst_29 {dimension_numbers = #tpu.dot_dimension_numbers<[1], [0], [0], [1], [0, 0, 1, 1], [], []>} : vector<64x64xf32>, vector<64x1xf32>, vector<64x1xf32> -> vector<64x1xf32>
    %67 = math.log %66 : vector<64x1xf32>
    %68 = arith.addf %62, %67 : vector<64x1xf32>
    %cst_30 = arith.constant 0.000000e+00 : f32
    %69 = vector.broadcast %cst_30 : f32 to vector<64x1xf32>
    %70 = arith.subf %69, %68 : vector<64x1xf32>
    %cst_31 = arith.constant 1.000000e+06 : f32
    %71 = vector.broadcast %cst_31 : f32 to vector<64x1xf32>
    %72 = arith.minimumf %70, %71 : vector<64x1xf32>
    %c2_i32 = arith.constant 2 : i32
    %73 = vector.broadcast %72 : vector<64x1xf32> to vector<64x64xf32>
    %74 = arith.addf %12, %73 : vector<64x64xf32>
    %cst_32 = arith.constant dense<0xFF800000> : vector<64xf32>
    %75 = vector.multi_reduction <maximumf>, %74, %cst_32 [0] : vector<64x64xf32> to vector<64xf32>
    %76 = vector.shape_cast %75 : vector<64xf32> to vector<1x64xf32>
    %77 = vector.broadcast %76 : vector<1x64xf32> to vector<64x64xf32>
    %78 = arith.subf %74, %77 : vector<64x64xf32>
    %79 = math.exp %78 : vector<64x64xf32>
    %cst_33 = arith.constant dense<0.000000e+00> : vector<1x64xf32>
    %80 = tpu.matmul %13, %79, %cst_33 {dimension_numbers = #tpu.dot_dimension_numbers<[1], [0], [0], [1], [0, 0, 1, 1], [], []>} : vector<1x64xf32>, vector<64x64xf32>, vector<1x64xf32> -> vector<1x64xf32>
    %81 = math.log %80 : vector<1x64xf32>
    %82 = arith.addf %76, %81 : vector<1x64xf32>
    %cst_34 = arith.constant 0.000000e+00 : f32
    %83 = vector.broadcast %cst_34 : f32 to vector<1x64xf32>
    %84 = arith.subf %83, %82 : vector<1x64xf32>
    %cst_35 = arith.constant 1.000000e+06 : f32
    %85 = vector.broadcast %cst_35 : f32 to vector<1x64xf32>
    %86 = arith.minimumf %84, %85 : vector<1x64xf32>
    %87 = vector.broadcast %86 : vector<1x64xf32> to vector<64x64xf32>
    %88 = arith.addf %12, %87 : vector<64x64xf32>
    %cst_36 = arith.constant dense<0xFF800000> : vector<64xf32>
    %89 = vector.multi_reduction <maximumf>, %88, %cst_36 [1] : vector<64x64xf32> to vector<64xf32>
    %90 = vector.shape_cast %89 : vector<64xf32> to vector<64x1xf32>
    %91 = vector.broadcast %90 : vector<64x1xf32> to vector<64x64xf32>
    %92 = arith.subf %88, %91 : vector<64x64xf32>
    %93 = math.exp %92 : vector<64x64xf32>
    %cst_37 = arith.constant dense<0.000000e+00> : vector<64x1xf32>
    %94 = tpu.matmul %93, %14, %cst_37 {dimension_numbers = #tpu.dot_dimension_numbers<[1], [0], [0], [1], [0, 0, 1, 1], [], []>} : vector<64x64xf32>, vector<64x1xf32>, vector<64x1xf32> -> vector<64x1xf32>
    %95 = math.log %94 : vector<64x1xf32>
    %96 = arith.addf %90, %95 : vector<64x1xf32>
    %cst_38 = arith.constant 0.000000e+00 : f32
    %97 = vector.broadcast %cst_38 : f32 to vector<64x1xf32>
    %98 = arith.subf %97, %96 : vector<64x1xf32>
    %cst_39 = arith.constant 1.000000e+06 : f32
    %99 = vector.broadcast %cst_39 : f32 to vector<64x1xf32>
    %100 = arith.minimumf %98, %99 : vector<64x1xf32>
    %c3_i32 = arith.constant 3 : i32
    %101 = vector.broadcast %100 : vector<64x1xf32> to vector<64x64xf32>
    %102 = arith.addf %12, %101 : vector<64x64xf32>
    %cst_40 = arith.constant dense<0xFF800000> : vector<64xf32>
    %103 = vector.multi_reduction <maximumf>, %102, %cst_40 [0] : vector<64x64xf32> to vector<64xf32>
    %104 = vector.shape_cast %103 : vector<64xf32> to vector<1x64xf32>
    %105 = vector.broadcast %104 : vector<1x64xf32> to vector<64x64xf32>
    %106 = arith.subf %102, %105 : vector<64x64xf32>
    %107 = math.exp %106 : vector<64x64xf32>
    %cst_41 = arith.constant dense<0.000000e+00> : vector<1x64xf32>
    %108 = tpu.matmul %13, %107, %cst_41 {dimension_numbers = #tpu.dot_dimension_numbers<[1], [0], [0], [1], [0, 0, 1, 1], [], []>} : vector<1x64xf32>, vector<64x64xf32>, vector<1x64xf32> -> vector<1x64xf32>
    %109 = math.log %108 : vector<1x64xf32>
    %110 = arith.addf %104, %109 : vector<1x64xf32>
    %cst_42 = arith.constant 0.000000e+00 : f32
    %111 = vector.broadcast %cst_42 : f32 to vector<1x64xf32>
    %112 = arith.subf %111, %110 : vector<1x64xf32>
    %cst_43 = arith.constant 1.000000e+06 : f32
    %113 = vector.broadcast %cst_43 : f32 to vector<1x64xf32>
    %114 = arith.minimumf %112, %113 : vector<1x64xf32>
    %115 = vector.broadcast %114 : vector<1x64xf32> to vector<64x64xf32>
    %116 = arith.addf %12, %115 : vector<64x64xf32>
    %cst_44 = arith.constant dense<0xFF800000> : vector<64xf32>
    %117 = vector.multi_reduction <maximumf>, %116, %cst_44 [1] : vector<64x64xf32> to vector<64xf32>
    %118 = vector.shape_cast %117 : vector<64xf32> to vector<64x1xf32>
    %119 = vector.broadcast %118 : vector<64x1xf32> to vector<64x64xf32>
    %120 = arith.subf %116, %119 : vector<64x64xf32>
    %121 = math.exp %120 : vector<64x64xf32>
    %cst_45 = arith.constant dense<0.000000e+00> : vector<64x1xf32>
    %122 = tpu.matmul %121, %14, %cst_45 {dimension_numbers = #tpu.dot_dimension_numbers<[1], [0], [0], [1], [0, 0, 1, 1], [], []>} : vector<64x64xf32>, vector<64x1xf32>, vector<64x1xf32> -> vector<64x1xf32>
    %123 = math.log %122 : vector<64x1xf32>
    %124 = arith.addf %118, %123 : vector<64x1xf32>
    %cst_46 = arith.constant 0.000000e+00 : f32
    %125 = vector.broadcast %cst_46 : f32 to vector<64x1xf32>
    %126 = arith.subf %125, %124 : vector<64x1xf32>
    %cst_47 = arith.constant 1.000000e+06 : f32
    %127 = vector.broadcast %cst_47 : f32 to vector<64x1xf32>
    %128 = arith.minimumf %126, %127 : vector<64x1xf32>
    %c4_i32 = arith.constant 4 : i32
    %129 = vector.broadcast %128 : vector<64x1xf32> to vector<64x64xf32>
    %130 = arith.addf %12, %129 : vector<64x64xf32>
    %cst_48 = arith.constant dense<0xFF800000> : vector<64xf32>
    %131 = vector.multi_reduction <maximumf>, %130, %cst_48 [0] : vector<64x64xf32> to vector<64xf32>
    %132 = vector.shape_cast %131 : vector<64xf32> to vector<1x64xf32>
    %133 = vector.broadcast %132 : vector<1x64xf32> to vector<64x64xf32>
    %134 = arith.subf %130, %133 : vector<64x64xf32>
    %135 = math.exp %134 : vector<64x64xf32>
    %cst_49 = arith.constant dense<0.000000e+00> : vector<1x64xf32>
    %136 = tpu.matmul %13, %135, %cst_49 {dimension_numbers = #tpu.dot_dimension_numbers<[1], [0], [0], [1], [0, 0, 1, 1], [], []>} : vector<1x64xf32>, vector<64x64xf32>, vector<1x64xf32> -> vector<1x64xf32>
    %137 = math.log %136 : vector<1x64xf32>
    %138 = arith.addf %132, %137 : vector<1x64xf32>
    %cst_50 = arith.constant 0.000000e+00 : f32
    %139 = vector.broadcast %cst_50 : f32 to vector<1x64xf32>
    %140 = arith.subf %139, %138 : vector<1x64xf32>
    %cst_51 = arith.constant 1.000000e+06 : f32
    %141 = vector.broadcast %cst_51 : f32 to vector<1x64xf32>
    %142 = arith.minimumf %140, %141 : vector<1x64xf32>
    %143 = vector.broadcast %142 : vector<1x64xf32> to vector<64x64xf32>
    %144 = arith.addf %12, %143 : vector<64x64xf32>
    %cst_52 = arith.constant dense<0xFF800000> : vector<64xf32>
    %145 = vector.multi_reduction <maximumf>, %144, %cst_52 [1] : vector<64x64xf32> to vector<64xf32>
    %146 = vector.shape_cast %145 : vector<64xf32> to vector<64x1xf32>
    %147 = vector.broadcast %146 : vector<64x1xf32> to vector<64x64xf32>
    %148 = arith.subf %144, %147 : vector<64x64xf32>
    %149 = math.exp %148 : vector<64x64xf32>
    %cst_53 = arith.constant dense<0.000000e+00> : vector<64x1xf32>
    %150 = tpu.matmul %149, %14, %cst_53 {dimension_numbers = #tpu.dot_dimension_numbers<[1], [0], [0], [1], [0, 0, 1, 1], [], []>} : vector<64x64xf32>, vector<64x1xf32>, vector<64x1xf32> -> vector<64x1xf32>
    %151 = math.log %150 : vector<64x1xf32>
    %152 = arith.addf %146, %151 : vector<64x1xf32>
    %cst_54 = arith.constant 0.000000e+00 : f32
    %153 = vector.broadcast %cst_54 : f32 to vector<64x1xf32>
    %154 = arith.subf %153, %152 : vector<64x1xf32>
    %cst_55 = arith.constant 1.000000e+06 : f32
    %155 = vector.broadcast %cst_55 : f32 to vector<64x1xf32>
    %156 = arith.minimumf %154, %155 : vector<64x1xf32>
    %157 = vector.broadcast %142 : vector<1x64xf32> to vector<64x64xf32>
    %158 = arith.addf %12, %157 : vector<64x64xf32>
    %159 = vector.broadcast %156 : vector<64x1xf32> to vector<64x64xf32>
    %160 = arith.addf %158, %159 : vector<64x64xf32>
    %161 = math.exp %160 : vector<64x64xf32>
    %cst_56 = arith.constant dense<0.000000e+00> : vector<3x64xf32>
    %162 = tpu.matmul %5, %161, %cst_56 {dimension_numbers = #tpu.dot_dimension_numbers<[1], [0], [0], [1], [0, 0, 1, 1], [], []>} : vector<3x64xf32>, vector<64x64xf32>, vector<3x64xf32> -> vector<3x64xf32>
    %163 = vector.extract_strided_slice %162 {offsets = [2, 0], sizes = [1, 64], strides = [1, 1]} : vector<3x64xf32> to vector<1x64xf32>
    %cst_57 = arith.constant 9.99999993E-9 : f32
    %164 = vector.broadcast %cst_57 : f32 to vector<1x64xf32>
    %165 = arith.addf %163, %164 : vector<1x64xf32>
    %166 = tpu.reciprocal %165 {approx = true} : vector<1x64xf32> -> vector<1x64xf32>
    %167 = vector.extract_strided_slice %162 {offsets = [0, 0], sizes = [2, 64], strides = [1, 1]} : vector<3x64xf32> to vector<2x64xf32>
    %168 = vector.broadcast %166 : vector<1x64xf32> to vector<2x64xf32>
    %169 = arith.mulf %167, %168 : vector<2x64xf32>
    %170 = tpu.concatenate %169, %163 in 0 : vector<2x64xf32>, vector<1x64xf32> -> vector<3x64xf32>
    %c0_58 = arith.constant 0 : index
    %c0_59 = arith.constant 0 : index
    %c0_60 = arith.constant 0 : index
    %171 = vector.load %arg5[%c0_58, %c0_59, %c0_60] : memref<1x3x64xf32, #tpu.memory_space<vmem>>, vector<1x3x64xf32>
    %172 = vector.shape_cast %171 : vector<1x3x64xf32> to vector<3x64xf32>
    %173 = vector.shape_cast %170 : vector<3x64xf32> to vector<1x3x64xf32>
    tpu.vector_store %arg5[%c0_58, %c0_59, %c0_60], %173 {strides = array<i32>} : memref<1x3x64xf32, #tpu.memory_space<vmem>>, vector<1x3x64xf32>,
    return
  }
  func.func @transform_0(%arg0: i32) -> (i32, i32, i32) {
    %c0_i32 = arith.constant 0 : i32
    %c0_i32_0 = arith.constant 0 : i32
    %c0_i32_1 = arith.constant 0 : i32
    return %arg0, %c0_i32, %c0_i32_0 : i32, i32, i32
  }
  func.func @transform_1(%arg0: i32) -> (i32, i32, i32) {
    %c0_i32 = arith.constant 0 : i32
    %c0_i32_0 = arith.constant 0 : i32
    %c0_i32_1 = arith.constant 0 : i32
    return %arg0, %c0_i32, %c0_i32_0 : i32, i32, i32
  }
  func.func @transform_2(%arg0: i32) -> (i32, i32, i32) {
    %c0_i32 = arith.constant 0 : i32
    %c0_i32_0 = arith.constant 0 : i32
    %c0_i32_1 = arith.constant 0 : i32
    return %arg0, %c0_i32, %c0_i32_0 : i32, i32, i32
  }
  func.func @transform_3(%arg0: i32) -> (i32, i32, i32) {
    %c0_i32 = arith.constant 0 : i32
    %c0_i32_0 = arith.constant 0 : i32
    %c0_i32_1 = arith.constant 0 : i32
    return %arg0, %c0_i32, %c0_i32_0 : i32, i32, i32
  }
  func.func @transform_4(%arg0: i32) -> (i32, i32, i32) {
    %c0_i32 = arith.constant 0 : i32
    %c0_i32_0 = arith.constant 0 : i32
    %c0_i32_1 = arith.constant 0 : i32
    return %arg0, %c0_i32, %c0_i32_0 : i32, i32, i32
  }
}

module attributes {stable_mosaic.version = 11 : i64} {
  func.func @_ransac_eval_kernel(%arg0: i32, %arg1: memref<1x3x64xf32, #tpu.memory_space<vmem>>, %arg2: memref<1x3x64xf32, #tpu.memory_space<vmem>>, %arg3: memref<1x32x3xf32, #tpu.memory_space<vmem>>, %arg4: memref<1x1x256xf32, #tpu.memory_space<vmem>>) attributes {dimension_semantics = [#tpu.dimension_semantics<parallel>], iteration_bounds = array<i64: 2>, scalar_prefetch = 0 : i64, scratch_operands = 0 : i64, tpu.core_type = #tpu.core_type<tc>, window_params = [{transform_indices = @transform_0, window_bounds = array<i64: 1, 3, 64>}, {transform_indices = @transform_1, window_bounds = array<i64: 1, 3, 64>}, {transform_indices = @transform_2, window_bounds = array<i64: 1, 32, 3>}, {transform_indices = @transform_3, window_bounds = array<i64: 1, 1, 256>}]} {
    %c0 = arith.constant 0 : index
    %c0_0 = arith.constant 0 : index
    %c0_1 = arith.constant 0 : index
    %0 = vector.load %arg1[%c0, %c0_0, %c0_1] : memref<1x3x64xf32, #tpu.memory_space<vmem>>, vector<1x3x64xf32>
    %1 = vector.shape_cast %0 : vector<1x3x64xf32> to vector<3x64xf32>
    %c0_2 = arith.constant 0 : index
    %c0_3 = arith.constant 0 : index
    %c0_4 = arith.constant 0 : index
    %2 = vector.load %arg2[%c0_2, %c0_3, %c0_4] : memref<1x3x64xf32, #tpu.memory_space<vmem>>, vector<1x3x64xf32>
    %3 = vector.shape_cast %2 : vector<1x3x64xf32> to vector<3x64xf32>
    %c0_5 = arith.constant 0 : index
    %c0_6 = arith.constant 0 : index
    %c0_7 = arith.constant 0 : index
    %4 = vector.load %arg3[%c0_5, %c0_6, %c0_7] : memref<1x32x3xf32, #tpu.memory_space<vmem>>, vector<1x32x3xf32>
    %5 = vector.shape_cast %4 : vector<1x32x3xf32> to vector<32x3xf32>
    %6 = vector.extract_strided_slice %3 {offsets = [0, 0], sizes = [1, 64], strides = [1, 1]} : vector<3x64xf32> to vector<1x64xf32>
    %7 = vector.extract_strided_slice %3 {offsets = [1, 0], sizes = [1, 64], strides = [1, 1]} : vector<3x64xf32> to vector<1x64xf32>
    %8 = vector.extract_strided_slice %3 {offsets = [2, 0], sizes = [1, 64], strides = [1, 1]} : vector<3x64xf32> to vector<1x64xf32>
    %cst = arith.constant dense<0.000000e+00> : vector<32x64xf32>
    %9 = tpu.matmul %5, %1, %cst {dimension_numbers = #tpu.dot_dimension_numbers<[1], [0], [0], [1], [0, 0, 1, 1], [], []>} : vector<32x3xf32>, vector<3x64xf32>, vector<32x64xf32> -> vector<32x64xf32>
    %10 = vector.extract_strided_slice %9 {offsets = [0, 0], sizes = [16, 64], strides = [1, 1]} : vector<32x64xf32> to vector<16x64xf32>
    %11 = vector.broadcast %6 : vector<1x64xf32> to vector<16x64xf32>
    %12 = arith.subf %10, %11 : vector<16x64xf32>
    %13 = vector.extract_strided_slice %9 {offsets = [16, 0], sizes = [16, 64], strides = [1, 1]} : vector<32x64xf32> to vector<16x64xf32>
    %14 = vector.broadcast %7 : vector<1x64xf32> to vector<16x64xf32>
    %15 = arith.subf %13, %14 : vector<16x64xf32>
    %16 = arith.mulf %12, %12 : vector<16x64xf32>
    %17 = arith.mulf %15, %15 : vector<16x64xf32>
    %18 = arith.addf %16, %17 : vector<16x64xf32>
    %cst_8 = arith.constant 5.625000e-01 : f32
    %19 = vector.broadcast %cst_8 : f32 to vector<16x64xf32>
    %20 = arith.cmpf olt, %18, %19 : vector<16x64xf32>
    %21 = arith.extui %20 : vector<16x64xi1> to vector<16x64xi32>
    %22 = arith.sitofp %21 : vector<16x64xi32> to vector<16x64xf32>
    %cst_9 = arith.constant 1.000000e+00 : f32
    %23 = vector.broadcast %cst_9 : f32 to vector<64x1xf32>
    %24 = vector.broadcast %8 : vector<1x64xf32> to vector<16x64xf32>
    %25 = arith.mulf %22, %24 : vector<16x64xf32>
    %cst_10 = arith.constant dense<0.000000e+00> : vector<16x1xf32>
    %26 = tpu.matmul %25, %23, %cst_10 {dimension_numbers = #tpu.dot_dimension_numbers<[1], [0], [0], [1], [0, 0, 1, 1], [], []>} : vector<16x64xf32>, vector<64x1xf32>, vector<16x1xf32> -> vector<16x1xf32>
    %27 = vector.shape_cast %26 : vector<16x1xf32> to vector<1x16x1xf32>
    %cst_11 = arith.constant dense<0xFF800000> : vector<1xf32>
    %28 = vector.multi_reduction <maximumf>, %27, %cst_11 [1, 2] : vector<1x16x1xf32> to vector<1xf32>
    %29 = vector.shape_cast %28 : vector<1xf32> to vector<1x1x1xf32>
    %30 = vector.extract %29[0, 0, 0] : f32 from vector<1x1x1xf32>
    %31 = tpu.iota {dimensions = array<i32: 0>} : vector<16x1xi32>
    %32 = vector.broadcast %30 : f32 to vector<16x1xf32>
    %33 = arith.cmpf oge, %26, %32 : vector<16x1xf32>
    %c17_i32 = arith.constant 17 : i32
    %34 = vector.broadcast %c17_i32 : i32 to vector<16x1xi32>
    %35 = arith.select %33, %31, %34 : vector<16x1xi1>, vector<16x1xi32>
    %36 = vector.shape_cast %35 : vector<16x1xi32> to vector<1x16x1xi32>
    %cst_12 = arith.constant dense<2147483647> : vector<1xi32>
    %37 = vector.multi_reduction <minsi>, %36, %cst_12 [1, 2] : vector<1x16x1xi32> to vector<1xi32>
    %38 = vector.shape_cast %37 : vector<1xi32> to vector<1x1x1xi32>
    %39 = vector.extract %38[0, 0, 0] : i32 from vector<1x1x1xi32>
    %40 = tpu.iota {dimensions = array<i32: 1>} : vector<1x16xi32>
    %41 = vector.broadcast %39 : i32 to vector<1x16xi32>
    %42 = arith.cmpi eq, %40, %41 : vector<1x16xi32>
    %43 = arith.extui %42 : vector<1x16xi1> to vector<1x16xi32>
    %44 = arith.sitofp %43 : vector<1x16xi32> to vector<1x16xf32>
    %cst_13 = arith.constant dense<0.000000e+00> : vector<1x64xf32>
    %45 = tpu.matmul %44, %18, %cst_13 {dimension_numbers = #tpu.dot_dimension_numbers<[1], [0], [0], [1], [0, 0, 1, 1], [], []>} : vector<1x16xf32>, vector<16x64xf32>, vector<1x64xf32> -> vector<1x64xf32>
    %cst_14 = arith.constant dense<0.000000e+00> : vector<1x64xf32>
    %46 = tpu.matmul %44, %22, %cst_14 {dimension_numbers = #tpu.dot_dimension_numbers<[1], [0], [0], [1], [0, 0, 1, 1], [], []>} : vector<1x16xf32>, vector<16x64xf32>, vector<1x64xf32> -> vector<1x64xf32>
    %47 = tpu.iota {dimensions = array<i32: 1>} : vector<1x32xi32>
    %48 = vector.broadcast %39 : i32 to vector<1x32xi32>
    %49 = arith.cmpi eq, %47, %48 : vector<1x32xi32>
    %50 = arith.extui %49 : vector<1x32xi1> to vector<1x32xi32>
    %51 = arith.sitofp %50 : vector<1x32xi32> to vector<1x32xf32>
    %c16_i32 = arith.constant 16 : i32
    %52 = arith.addi %39, %c16_i32 : i32
    %53 = vector.broadcast %52 : i32 to vector<1x32xi32>
    %54 = arith.cmpi eq, %47, %53 : vector<1x32xi32>
    %55 = arith.extui %54 : vector<1x32xi1> to vector<1x32xi32>
    %56 = arith.sitofp %55 : vector<1x32xi32> to vector<1x32xf32>
    %cst_15 = arith.constant dense<0.000000e+00> : vector<1x3xf32>
    %57 = tpu.matmul %51, %5, %cst_15 {dimension_numbers = #tpu.dot_dimension_numbers<[1], [0], [0], [1], [0, 0, 1, 1], [], []>} : vector<1x32xf32>, vector<32x3xf32>, vector<1x3xf32> -> vector<1x3xf32>
    %cst_16 = arith.constant dense<0.000000e+00> : vector<1x3xf32>
    %58 = tpu.matmul %56, %5, %cst_16 {dimension_numbers = #tpu.dot_dimension_numbers<[1], [0], [0], [1], [0, 0, 1, 1], [], []>} : vector<1x32xf32>, vector<32x3xf32>, vector<1x3xf32> -> vector<1x3xf32>
    %59 = tpu.iota {dimensions = array<i32: 1>} : vector<64x256xi32>
    %60 = tpu.iota {dimensions = array<i32: 0>} : vector<64x256xi32>
    %61 = arith.cmpi eq, %59, %60 : vector<64x256xi32>
    %62 = arith.extui %61 : vector<64x256xi1> to vector<64x256xi32>
    %63 = arith.sitofp %62 : vector<64x256xi32> to vector<64x256xf32>
    %c64_i32 = arith.constant 64 : i32
    %64 = vector.broadcast %c64_i32 : i32 to vector<64x256xi32>
    %65 = arith.addi %60, %64 : vector<64x256xi32>
    %66 = arith.cmpi eq, %59, %65 : vector<64x256xi32>
    %67 = arith.extui %66 : vector<64x256xi1> to vector<64x256xi32>
    %68 = arith.sitofp %67 : vector<64x256xi32> to vector<64x256xf32>
    %69 = tpu.iota {dimensions = array<i32: 1>} : vector<3x256xi32>
    %70 = tpu.iota {dimensions = array<i32: 0>} : vector<3x256xi32>
    %c128_i32 = arith.constant 128 : i32
    %71 = vector.broadcast %c128_i32 : i32 to vector<3x256xi32>
    %72 = arith.addi %70, %71 : vector<3x256xi32>
    %73 = arith.cmpi eq, %69, %72 : vector<3x256xi32>
    %74 = arith.extui %73 : vector<3x256xi1> to vector<3x256xi32>
    %75 = arith.sitofp %74 : vector<3x256xi32> to vector<3x256xf32>
    %c128_i32_17 = arith.constant 128 : i32
    %76 = vector.broadcast %c128_i32_17 : i32 to vector<3x256xi32>
    %77 = arith.addi %70, %76 : vector<3x256xi32>
    %c3_i32 = arith.constant 3 : i32
    %78 = vector.broadcast %c3_i32 : i32 to vector<3x256xi32>
    %79 = arith.addi %77, %78 : vector<3x256xi32>
    %80 = arith.cmpi eq, %69, %79 : vector<3x256xi32>
    %81 = arith.extui %80 : vector<3x256xi1> to vector<3x256xi32>
    %82 = arith.sitofp %81 : vector<3x256xi32> to vector<3x256xf32>
    %cst_18 = arith.constant dense<0.000000e+00> : vector<1x256xf32>
    %83 = tpu.matmul %45, %63, %cst_18 {dimension_numbers = #tpu.dot_dimension_numbers<[1], [0], [0], [1], [0, 0, 1, 1], [], []>} : vector<1x64xf32>, vector<64x256xf32>, vector<1x256xf32> -> vector<1x256xf32>
    %cst_19 = arith.constant dense<0.000000e+00> : vector<1x256xf32>
    %84 = tpu.matmul %46, %68, %cst_19 {dimension_numbers = #tpu.dot_dimension_numbers<[1], [0], [0], [1], [0, 0, 1, 1], [], []>} : vector<1x64xf32>, vector<64x256xf32>, vector<1x256xf32> -> vector<1x256xf32>
    %85 = arith.addf %83, %84 : vector<1x256xf32>
    %cst_20 = arith.constant dense<0.000000e+00> : vector<1x256xf32>
    %86 = tpu.matmul %57, %75, %cst_20 {dimension_numbers = #tpu.dot_dimension_numbers<[1], [0], [0], [1], [0, 0, 1, 1], [], []>} : vector<1x3xf32>, vector<3x256xf32>, vector<1x256xf32> -> vector<1x256xf32>
    %87 = arith.addf %85, %86 : vector<1x256xf32>
    %cst_21 = arith.constant dense<0.000000e+00> : vector<1x256xf32>
    %88 = tpu.matmul %58, %82, %cst_21 {dimension_numbers = #tpu.dot_dimension_numbers<[1], [0], [0], [1], [0, 0, 1, 1], [], []>} : vector<1x3xf32>, vector<3x256xf32>, vector<1x256xf32> -> vector<1x256xf32>
    %89 = arith.addf %87, %88 : vector<1x256xf32>
    %c0_22 = arith.constant 0 : index
    %c0_23 = arith.constant 0 : index
    %c0_24 = arith.constant 0 : index
    %90 = vector.load %arg4[%c0_22, %c0_23, %c0_24] : memref<1x1x256xf32, #tpu.memory_space<vmem>>, vector<1x1x256xf32>
    %91 = vector.shape_cast %90 : vector<1x1x256xf32> to vector<1x256xf32>
    %92 = vector.shape_cast %89 : vector<1x256xf32> to vector<1x1x256xf32>
    tpu.vector_store %arg4[%c0_22, %c0_23, %c0_24], %92 {strides = array<i32>} : memref<1x1x256xf32, #tpu.memory_space<vmem>>, vector<1x1x256xf32>,
    return
  }
  func.func @transform_0(%arg0: i32) -> (i32, i32, i32) {
    %c0_i32 = arith.constant 0 : i32
    %c0_i32_0 = arith.constant 0 : i32
    %c0_i32_1 = arith.constant 0 : i32
    return %arg0, %c0_i32, %c0_i32_0 : i32, i32, i32
  }
  func.func @transform_1(%arg0: i32) -> (i32, i32, i32) {
    %c0_i32 = arith.constant 0 : i32
    %c0_i32_0 = arith.constant 0 : i32
    %c0_i32_1 = arith.constant 0 : i32
    return %arg0, %c0_i32, %c0_i32_0 : i32, i32, i32
  }
  func.func @transform_2(%arg0: i32) -> (i32, i32, i32) {
    %c0_i32 = arith.constant 0 : i32
    %c0_i32_0 = arith.constant 0 : i32
    %c0_i32_1 = arith.constant 0 : i32
    return %arg0, %c0_i32, %c0_i32_0 : i32, i32, i32
  }
  func.func @transform_3(%arg0: i32) -> (i32, i32, i32) {
    %c0_i32 = arith.constant 0 : i32
    %c0_i32_0 = arith.constant 0 : i32
    %c0_i32_1 = arith.constant 0 : i32
    return %arg0, %c0_i32, %c0_i32_0 : i32, i32, i32
  }
}

</mosaic_0001>

<llo_original>
// kernel: ransac_matcher.2
$region0: #{ransac_matcher.2}
  #allocation0 [shape = 'u32[]', space=smem, size = 0x4, offset = 0x4, fixed_abs, tag = 'smem constant byte address 0x4 - core index']
  #allocation1 [shape = 'u32[144,128]{1,0:T(1,128)}', space=vmem, size = 0x12000, scoped, tag = 'internal scratch']
  %s0 = inlined_call_operand.vmem [shape: bf16[2,64,32], index: 0, kind: input, shape index: {}]
  %s1 = inlined_call_operand.vmem [shape: bf16[2,64,32], index: 1, kind: input, shape index: {}]
  %s2 = inlined_call_operand.vmem [shape: f32[2,3,64], index: 2, kind: input, shape index: {}]
  %s3 = inlined_call_operand.vmem [shape: bf16[2,64,64], index: 3, kind: input, shape index: {}]
  %s4 = inlined_call_operand.vmem [shape: f32[2,3,64], index: 4, kind: output, shape index: {}]
  %s5 = sld [smem:[#allocation0]]
  $region49: #{ransac_matcher.2} parent=0
    _
  %s7 = ssub.s32 1, %s5
  %s8 = scalar_select 0, %s7, %s5
  loop: start=0, step=1, limit=4
  $region2: #{ransac_matcher.2} parent=0 // loop_pre_header
    _
  $region3: #{ransac_matcher.2} parent=0 // loop_header
    %s10 = sphi 0, %s14
    %p11 = scmp.ge.s32.totalorder %s10, 4
    %s20 = sphi 0, %s22
    %s23 = sphi 0, %s20
    %s24 = sphi 0, %s23
    %s40 = sphi 0, %s24
    %s46 = sphi 0, %s48
    %s49 = sphi 0, %s46
    %s50 = sphi 0, %s49
    %s66 = sphi 0, %s50
    %s72 = sphi 0, %s74
    %s75 = sphi 0, %s72
    %s76 = sphi 0, %s75
    %s92 = sphi 0, %s76
    %s98 = sphi 0, %s100
    %s101 = sphi 0, %s98
    %s102 = sphi 0, %s101
    %s118 = sphi 0, %s102
    %s124 = sphi 0, %s126
    %s127 = sphi 0, %s124
    %s128 = sphi 0, %s127
    %s144 = sphi 0, %s128
  $region4: #{ransac_matcher.2} parent=0 // loop_header_branch
    %13 = sbr.rel (%p11) target = $region8
  $region5: #{ransac_matcher.2} parent=0 // loop_body
    %s15 = ssub.s32 %s10, 1
    %s16 = ssub.s32 %s10, 2
    %s17 = sadd.s32 %s10, 1
    %s18 = ssub.s32 %s10, %s17
    %p19 = scmp.eq.s32.totalorder %s18, 0
    %s21 = sadd.s32 %s20, 1
    %s22 = scalar_select %p19, %s20, %s21
    %p25 = pneg %p19
    %p26 = scmp.eq.s32.totalorder %s10, 1
    %p27 = por %p25, %p26
    %p28 = scmp.ne.s32.totalorder %s20, %s23
    %p29 = scmp.eq.s32.totalorder %s10, 0
    %p30 = por %p28, %p29
    %p31 = scmp.ne.s32.totalorder %s20, %s23
    %p32 = scmp.eq.s32.totalorder %s15, 1
    %p33 = por %p31, %p32
    %p34 = scmp.ne.s32.totalorder %s23, %s24
    %p35 = scmp.eq.s32.totalorder %s15, 0
    %p36 = por %p34, %p35
    %p37 = scmp.ne.s32.totalorder %s23, %s24
    %p38 = scmp.eq.s32.totalorder %s16, 1
    %p39 = por %p37, %p38
    %p41 = scmp.ne.s32.totalorder %s24, %s40
    %p42 = scmp.eq.s32.totalorder %s16, 0
    %p43 = por %p41, %p42
    %s44 = ssub.s32 %s10, %s17
    %p45 = scmp.eq.s32.totalorder %s44, 0
    %s47 = sadd.s32 %s46, 1
    %s48 = scalar_select %p45, %s46, %s47
    %p51 = pneg %p45
    %p52 = scmp.eq.s32.totalorder %s10, 1
    %p53 = por %p51, %p52
    %p54 = scmp.ne.s32.totalorder %s46, %s49
    %p55 = scmp.eq.s32.totalorder %s10, 0
    %p56 = por %p54, %p55
    %p57 = scmp.ne.s32.totalorder %s46, %s49
    %p58 = scmp.eq.s32.totalorder %s15, 1
    %p59 = por %p57, %p58
    %p60 = scmp.ne.s32.totalorder %s49, %s50
    %p61 = scmp.eq.s32.totalorder %s15, 0
    %p62 = por %p60, %p61
    %p63 = scmp.ne.s32.totalorder %s49, %s50
    %p64 = scmp.eq.s32.totalorder %s16, 1
    %p65 = por %p63, %p64
    %p67 = scmp.ne.s32.totalorder %s50, %s66
    %p68 = scmp.eq.s32.totalorder %s16, 0
    %p69 = por %p67, %p68
    %s70 = ssub.s32 %s10, %s17
    %p71 = scmp.eq.s32.totalorder %s70, 0
    %s73 = sadd.s32 %s72, 1
    %s74 = scalar_select %p71, %s72, %s73
    %p77 = pneg %p71
    %p78 = scmp.eq.s32.totalorder %s10, 1
    %p79 = por %p77, %p78
    %p80 = scmp.ne.s32.totalorder %s72, %s75
    %p81 = scmp.eq.s32.totalorder %s10, 0
    %p82 = por %p80, %p81
    %p83 = scmp.ne.s32.totalorder %s72, %s75
    %p84 = scmp.eq.s32.totalorder %s15, 1
    %p85 = por %p83, %p84
    %p86 = scmp.ne.s32.totalorder %s75, %s76
    %p87 = scmp.eq.s32.totalorder %s15, 0
    %p88 = por %p86, %p87
    %p89 = scmp.ne.s32.totalorder %s75, %s76
    %p90 = scmp.eq.s32.totalorder %s16, 1
    %p91 = por %p89, %p90
    %p93 = scmp.ne.s32.totalorder %s76, %s92
    %p94 = scmp.eq.s32.totalorder %s16, 0
    %p95 = por %p93, %p94
    %s96 = ssub.s32 %s10, %s17
    %p97 = scmp.eq.s32.totalorder %s96, 0
    %s99 = sadd.s32 %s98, 1
    %s100 = scalar_select %p97, %s98, %s99
    %p103 = pneg %p97
    %p104 = scmp.eq.s32.totalorder %s10, 1
    %p105 = por %p103, %p104
    %p106 = scmp.ne.s32.totalorder %s98, %s101
    %p107 = scmp.eq.s32.totalorder %s10, 0
    %p108 = por %p106, %p107
    %p109 = scmp.ne.s32.totalorder %s98, %s101
    %p110 = scmp.eq.s32.totalorder %s15, 1
    %p111 = por %p109, %p110
    %p112 = scmp.ne.s32.totalorder %s101, %s102
    %p113 = scmp.eq.s32.totalorder %s15, 0
    %p114 = por %p112, %p113
    %p115 = scmp.ne.s32.totalorder %s101, %s102
    %p116 = scmp.eq.s32.totalorder %s16, 1
    %p117 = por %p115, %p116
    %p119 = scmp.ne.s32.totalorder %s102, %s118
    %p120 = scmp.eq.s32.totalorder %s16, 0
    %p121 = por %p119, %p120
    %s122 = ssub.s32 %s10, %s17
    %p123 = scmp.eq.s32.totalorder %s122, 0
    %s125 = sadd.s32 %s124, 1
    %s126 = scalar_select %p123, %s124, %s125
    %p129 = pneg %p123
    %p130 = scmp.eq.s32.totalorder %s10, 1
    %p131 = por %p129, %p130
    %p132 = scmp.ne.s32.totalorder %s124, %s127
    %p133 = scmp.eq.s32.totalorder %s10, 0
    %p134 = por %p132, %p133
    %p135 = scmp.ne.s32.totalorder %s124, %s127
    %p136 = scmp.eq.s32.totalorder %s15, 1
    %p137 = por %p135, %p136
    %p138 = scmp.ne.s32.totalorder %s127, %s128
    %p139 = scmp.eq.s32.totalorder %s15, 0
    %p140 = por %p138, %p139
    %p141 = scmp.ne.s32.totalorder %s127, %s128
    %p142 = scmp.eq.s32.totalorder %s16, 1
    %p143 = por %p141, %p142
    %p145 = scmp.ne.s32.totalorder %s128, %s144
    %p146 = scmp.eq.s32.totalorder %s16, 0
    %p147 = por %p145, %p146
    %p148 = scmp.le.s32.totalorder 1, %s10
    %p149 = scmp.lt.s32.totalorder %s10, 3
    %p150 = pnand %p148, %p149
    %p151 = pneg %p150
    // Predicated region
    $region9: #{ransac_matcher.2} parent=5 // pred_check
      _
    $region10: #{ransac_matcher.2} parent=5 // pred_check_branch
      %153 = sbr.rel (%p150) target = $region12
    $region11: #{ransac_matcher.2} parent=5 // pred_region
      %s154 = ssub.s32 %s10, 1
    $region12: #{ransac_matcher.2} parent=5 // pred_fallthru
      _
    %p155 = scmp.lt.s32.totalorder %s10, 2
    // Predicated region
    $region13: #{ransac_matcher.2} parent=5 // pred_check
      %p156 = pneg %p155
    $region14: #{ransac_matcher.2} parent=5 // pred_check_branch
      %158 = sbr.rel (%p156) target = $region16
    $region15: #{ransac_matcher.2} parent=5 // pred_region
      // Predicated region
      $region17: #{ransac_matcher.2} parent=15 // pred_check
        %p159 = pneg %p30
      $region18: #{ransac_matcher.2} parent=15 // pred_check_branch
        %161 = sbr.rel (%p159) target = $region20
      $region19: #{ransac_matcher.2} parent=15 // pred_region
        %p162 = scmp.lt.s32.totalorder %s10, 1
        %s163 = scalar_select %p162, %s10, 1
        %s164 = smul.addr %s163, 8
        %s165 = smul.addr %s164, 4
        %s166 = scalar_lea.vmem %s0, %s165
      $region20: #{ransac_matcher.2} parent=15 // pred_fallthru
        _
      // Predicated region
      $region21: #{ransac_matcher.2} parent=15 // pred_check
        %p167 = pneg %p56
      $region22: #{ransac_matcher.2} parent=15 // pred_check_branch
        %169 = sbr.rel (%p167) target = $region24
      $region23: #{ransac_matcher.2} parent=15 // pred_region
        %p170 = scmp.lt.s32.totalorder %s10, 1
        %s171 = scalar_select %p170, %s10, 1
        %s172 = smul.addr %s171, 8
        %s173 = smul.addr %s172, 4
        %s174 = scalar_lea.vmem %s1, %s173
      $region24: #{ransac_matcher.2} parent=15 // pred_fallthru
        _
      // Predicated region
      $region25: #{ransac_matcher.2} parent=15 // pred_check
        %p175 = pneg %p82
      $region26: #{ransac_matcher.2} parent=15 // pred_check_branch
        %177 = sbr.rel (%p175) target = $region28
      $region27: #{ransac_matcher.2} parent=15 // pred_region
        %p178 = scmp.lt.s32.totalorder %s10, 1
        %s179 = scalar_select %p178, %s10, 1
        %s180 = smul.addr %s179, 4
        %s181 = scalar_lea.vmem %s2, %s180
      $region28: #{ransac_matcher.2} parent=15 // pred_fallthru
        _
      // Predicated region
      $region29: #{ransac_matcher.2} parent=15 // pred_check
        %p182 = pneg %p108
      $region30: #{ransac_matcher.2} parent=15 // pred_check_branch
        %184 = sbr.rel (%p182) target = $region32
      $region31: #{ransac_matcher.2} parent=15 // pred_region
        %p185 = scmp.lt.s32.totalorder %s10, 1
        %s186 = scalar_select %p185, %s10, 1
        %s187 = smul.addr %s186, 8
        %s188 = smul.addr %s187, 4
        %s189 = scalar_lea.vmem %s3, %s188
      $region32: #{ransac_matcher.2} parent=15 // pred_fallthru
        _
    $region16: #{ransac_matcher.2} parent=5 // pred_fallthru
      _
    %p190 = scmp.le.s32.totalorder 1, %s10
    %p191 = scmp.lt.s32.totalorder %s10, 3
    %p192 = pnand %p190, %p191
    %p193 = pneg %p192
    // Predicated region
    $region33: #{ransac_matcher.2} parent=5 // pred_check
      _
    $region34: #{ransac_matcher.2} parent=5 // pred_check_branch
      %195 = sbr.rel (%p192) target = $region36
    $region35: #{ransac_matcher.2} parent=5 // pred_region
      %s196 = ssub.s32 %s10, 1
      %p197 = scmp.lt.s32.totalorder %s15, 1
      %s198 = scalar_select %p197, %s15, 1
      %s199 = smul.addr %s198, 8
      %s200 = smul.addr %s199, 4
      %s201 = scalar_lea.vmem %s0, %s200
      %p202 = pneg %p36
      %p203 = pneg %p33
      %p204 = scmp.lt.s32.totalorder %s15, 1
      %s205 = scalar_select %p204, %s15, 1
      %s206 = smul.addr %s205, 8
      %s207 = smul.addr %s206, 4
      %s208 = scalar_lea.vmem %s1, %s207
      %p209 = pneg %p62
      %p210 = pneg %p59
      %p211 = scmp.lt.s32.totalorder %s15, 1
      %s212 = scalar_select %p211, %s15, 1
      %s213 = smul.addr %s212, 4
      %s214 = scalar_lea.vmem %s2, %s213
      %p215 = pneg %p88
      %p216 = pneg %p85
      %p217 = scmp.lt.s32.totalorder %s15, 1
      %s218 = scalar_select %p217, %s15, 1
      %s219 = smul.addr %s218, 8
      %s220 = smul.addr %s219, 4
      %s221 = scalar_lea.vmem %s3, %s220
      %p222 = pneg %p114
      %p223 = pneg %p111
      %p224 = pneg %p140
      %p225 = pneg %p137
      %p226 = scmp.lt.s32.totalorder %s15, 1
      %s227 = scalar_select %p226, %s15, 1
      %s228 = smul.addr %s227, 4
      %s229 = scalar_lea.vmem %s4, %s228
      %p230 = scmp.lt.s32.totalorder %s15, 1
      %s231 = scalar_select %p230, %s15, 1
      %s232 = smul.addr %s231, 8
      %s233 = smul.addr %s232, 4
      %s234 = scalar_lea.vmem %s0, %s233
      %p235 = scmp.lt.s32.totalorder %s15, 1
      %s236 = scalar_select %p235, %s15, 1
      %s237 = smul.addr %s236, 8
      %s238 = smul.addr %s237, 4
      %s239 = scalar_lea.vmem %s1, %s238
      %p240 = scmp.lt.s32.totalorder %s15, 1
      %s241 = scalar_select %p240, %s15, 1
      %s242 = smul.addr %s241, 4
      %s243 = scalar_lea.vmem %s2, %s242
      %p244 = scmp.lt.s32.totalorder %s15, 1
      %s245 = scalar_select %p244, %s15, 1
      %s246 = smul.addr %s245, 8
      %s247 = smul.addr %s246, 4
      %s248 = scalar_lea.vmem %s3, %s247
      %p249 = scmp.lt.s32.totalorder %s15, 1
      %s250 = scalar_select %p249, %s15, 1
      %s251 = smul.addr %s250, 4
      %s252 = scalar_lea.vmem %s4, %s251
      %v254 = vld [vmem:[%s234] sm:$0xf]
      %v255 = vld [vmem:[%s234 + $0x4] sm:$0xf]
      %v256 = vld [vmem:[%s234 + $0x8] sm:$0xf]
      %v257 = vld [vmem:[%s234 + $0xc] sm:$0xf]
      %v258 = vld [vmem:[%s234 + $0x10] sm:$0xf]
      %v259 = vld [vmem:[%s234 + $0x14] sm:$0xf]
      %v260 = vld [vmem:[%s234 + $0x18] sm:$0xf]
      %v261 = vld [vmem:[%s234 + $0x1c] sm:$0xf]
      %v262 = vld [vmem:[%s239] sm:$0xf]
      %v263 = vld [vmem:[%s239 + $0x4] sm:$0xf]
      %v264 = vld [vmem:[%s239 + $0x8] sm:$0xf]
      %v265 = vld [vmem:[%s239 + $0xc] sm:$0xf]
      %v266 = vld [vmem:[%s239 + $0x10] sm:$0xf]
      %v267 = vld [vmem:[%s239 + $0x14] sm:$0xf]
      %v268 = vld [vmem:[%s239 + $0x18] sm:$0xf]
      %v269 = vld [vmem:[%s239 + $0x1c] sm:$0xf]
      %v270 = vld [vmem:[%s243] sm:$0x7]
      %v271 = vld [vmem:[%s248] sm:$0xf]
      %v272 = vld [vmem:[%s248 + $0x4] sm:$0xf]
      %v273 = vld [vmem:[%s248 + $0x8] sm:$0xf]
      %v274 = vld [vmem:[%s248 + $0xc] sm:$0xf]
      %v275 = vld [vmem:[%s248 + $0x10] sm:$0xf]
      %v276 = vld [vmem:[%s248 + $0x14] sm:$0xf]
      %v277 = vld [vmem:[%s248 + $0x18] sm:$0xf]
      %v278 = vld [vmem:[%s248 + $0x1c] sm:$0xf]
      %v287 = vunpack.c.l.b16 %v262
      %v288 = vunpack.c.l.b16 %v263
      %v289 = vunpack.c.l.b16 %v264
      %v290 = vunpack.c.l.b16 %v265
      %v291 = vunpack.c.l.b16 %v266
      %v292 = vunpack.c.l.b16 %v267
      %v293 = vunpack.c.l.b16 %v268
      %v294 = vunpack.c.l.b16 %v269
      %v295 = vpack.c.b16 %v288, %v287
      %v296 = vpack.c.b16 %v290, %v289
      %v297 = vpack.c.b16 %v292, %v291
      %v298 = vpack.c.b16 %v294, %v293
      %v307 = vunpack.c.l.b16 %v254
      %v308 = vunpack.c.l.b16 %v255
      %v309 = vunpack.c.l.b16 %v256
      %v310 = vunpack.c.l.b16 %v257
      %v311 = vunpack.c.l.b16 %v258
      %v312 = vunpack.c.l.b16 %v259
      %v313 = vunpack.c.l.b16 %v260
      %v314 = vunpack.c.l.b16 %v261
      %v315 = vpack.c.b16 %v308, %v307
      %v316 = vpack.c.b16 %v310, %v309
      %v317 = vpack.c.b16 %v312, %v311
      %v318 = vpack.c.b16 %v314, %v313
      %vm319 = vcmask 261120
      %v321 = vsel %vm319, %v295, 0
      %v324 = vsel %vm319, %v296, 0
      %v327 = vsel %vm319, %v297, 0
      %v330 = vsel %vm319, %v298, 0
      %v333 = vsel %vm319, %v315, 0
      %v336 = vsel %vm319, %v316, 0
      %v339 = vsel %vm319, %v317, 0
      %v342 = vsel %vm319, %v318, 0
      %344 = vmatprep.subr.bf16.mxu0 0
      %345 = vmatpush1.bf16.xpose.msra.mxu0 0
      %346 = vmatprep.subr.bf16.mxu0 0
      %347 = vmatpush1.bf16.xpose.msra.mxu0 0
      %348 = vmatprep.subr.bf16.mxu0 0
      %349 = vmatpush1.bf16.xpose.msra.mxu0 0
      %350 = vmatprep.subr.bf16.mxu0 0
      %351 = vmatpush1.bf16.xpose.msra.mxu0 0
      %352 = vmatprep.subr.bf16.mxu0 0
      %353 = vmatpush1.bf16.xpose.msra.mxu0 %v342
      %354 = vmatprep.subr.bf16.mxu0 0
      %355 = vmatpush1.bf16.xpose.msra.mxu0 %v339
      %356 = vmatprep.subr.bf16.mxu0 0
      %357 = vmatpush1.bf16.xpose.msra.mxu0 %v336
      %358 = vmatprep.subr.bf16.mxu0 0
      %359 = vmatpush1.bf16.xpose.msra.mxu0 %v333
      %360 = vmatprep.subr.bf16.mxu0 0
      %361 = vmatpush2.bf16.xpose.msra.mxu0 0
      %362 = vmatprep.subr.bf16.mxu0 0
      %363 = vmatpush2.bf16.xpose.msra.mxu0 0
      %364 = vmatprep.subr.bf16.mxu0 0
      %365 = vmatpush2.bf16.xpose.msra.mxu0 0
      %366 = vmatprep.subr.bf16.mxu0 0
      %367 = vmatpush2.bf16.xpose.msra.mxu0 0
      %368 = vmatprep.subr.bf16.mxu0 0
      %369 = vmatpush2.bf16.xpose.msra.mxu0 0
      %370 = vmatprep.subr.bf16.mxu0 0
      %371 = vmatpush2.bf16.xpose.msra.mxu0 0
      %372 = vmatprep.subr.bf16.mxu0 0
      %373 = vmatpush2.bf16.xpose.msra.mxu0 0
      %374 = vmatprep.subr.bf16.mxu0 0
      %375 = vmatpush2.bf16.xpose.msra.mxu0 0
      %376 = vmatprep.mubr.bf16.mxu0 0
      %377 = vmatmul.mubr.bf16.gmra.mxu0 %v321
      %v378 = vpop.f32.mrf.mxu0
      %v379 = vadd.f32 0.0, %v378
      %v380 = vpop.f32.mrf.mxu0
      %v381 = vpop.f32.mrf.mxu0
      %v382 = vadd.f32 0.0, %v381
      %v383 = vpop.f32.mrf.mxu0
      %384 = vmatprep.mubr.bf16.mxu0 0
      %385 = vmatmul.mubr.bf16.gmra.mxu0 %v324
      %v386 = vpop.f32.mrf.mxu0
      %v387 = vadd.f32 0.0, %v386
      %v388 = vpop.f32.mrf.mxu0
      %v389 = vpop.f32.mrf.mxu0
      %v390 = vadd.f32 0.0, %v389
      %v391 = vpop.f32.mrf.mxu0
      %392 = vmatprep.mubr.bf16.mxu0 0
      %393 = vmatmul.mubr.bf16.gmra.mxu0 %v327
      %v394 = vpop.f32.mrf.mxu0
      %v395 = vadd.f32 0.0, %v394
      %v396 = vpop.f32.mrf.mxu0
      %v397 = vpop.f32.mrf.mxu0
      %v398 = vadd.f32 0.0, %v397
      %v399 = vpop.f32.mrf.mxu0
      %400 = vmatprep.mubr.bf16.mxu0 0
      %401 = vmatmul.mubr.bf16.gmra.mxu0 %v330
      %v402 = vpop.f32.mrf.mxu0
      %v403 = vadd.f32 0.0, %v402
      %v404 = vpop.f32.mrf.mxu0
      %v405 = vpop.f32.mrf.mxu0
      %v406 = vadd.f32 0.0, %v405
      %v407 = vpop.f32.mrf.mxu0
      %408 = vdwg.mxu0
      %v409 = vmul.f32 %v379, 0.17677669
      %v410 = vmul.f32 %v382, 0.17677669
      %v411 = vmul.f32 %v387, 0.17677669
      %v412 = vmul.f32 %v390, 0.17677669
      %v413 = vmul.f32 %v395, 0.17677669
      %v414 = vmul.f32 %v398, 0.17677669
      %v415 = vmul.f32 %v403, 0.17677669
      %v416 = vmul.f32 %v406, 0.17677669
      %v417 = vunpack.c.l.bf16 %v271
      %v418 = vunpack.c.l.bf16 %v272
      %v419 = vunpack.c.l.bf16 %v273
      %v420 = vunpack.c.l.bf16 %v274
      %v421 = vunpack.c.l.bf16 %v275
      %v422 = vunpack.c.l.bf16 %v276
      %v423 = vunpack.c.l.bf16 %v277
      %v424 = vunpack.c.l.bf16 %v278
      %v425 = vadd.f32 %v409, %v417
      %v426 = vadd.f32 %v410, %v418
      %v427 = vadd.f32 %v411, %v419
      %v428 = vadd.f32 %v412, %v420
      %v429 = vadd.f32 %v413, %v421
      %v430 = vadd.f32 %v414, %v422
      %v431 = vadd.f32 %v415, %v423
      %v432 = vadd.f32 %v416, %v424
      %v433 = vadd.f32 %v425, 0.0
      %v434 = vadd.f32 %v426, 0.0
      %v435 = vadd.f32 %v427, 0.0
      %v436 = vadd.f32 %v428, 0.0
      %v437 = vadd.f32 %v429, 0.0
      %v438 = vadd.f32 %v430, 0.0
      %v439 = vadd.f32 %v431, 0.0
      %v440 = vadd.f32 %v432, 0.0
      %vm441 = vcmask 523264
      %v442 = vsel %vm441, %v433, -inf
      %v443 = vsel %vm441, %v434, -inf
      %v444 = vsel %vm441, %v435, -inf
      %v445 = vsel %vm441, %v436, -inf
      %v446 = vsel %vm441, %v437, -inf
      %v447 = vmax.f32 %v442, %v446
      %v448 = vsel %vm441, %v438, -inf
      %v449 = vmax.f32 %v443, %v448
      %v450 = vsel %vm441, %v439, -inf
      %v451 = vmax.f32 %v444, %v450
      %v452 = vsel %vm441, %v440, -inf
      %v453 = vmax.f32 %v445, %v452
      %v454 = vmax.f32 %v447, %v449
      %v455 = vmax.f32 %v451, %v453
      %v456 = vmax.f32 %v454, %v455
      %v457 = vrot.slane %v456, 4
      %v458 = vmax.f32 %v456, %v457
      %v459 = vrot.slane %v458, 2
      %v460 = vmax.f32 %v458, %v459
      %v461 = vrot.slane %v460, 1
      %v462 = vmax.f32 %v460, %v461
      %v463 = vsub.f32 %v433, %v462
      %v464 = vsub.f32 %v434, %v462
      %v465 = vsub.f32 %v435, %v462
      %v466 = vsub.f32 %v436, %v462
      %v467 = vsub.f32 %v437, %v462
      %v468 = vsub.f32 %v438, %v462
      %v469 = vsub.f32 %v439, %v462
      %v470 = vsub.f32 %v440, %v462
      %v471 = vmul.f32 %v463, 1.442695
      %v472 = vpow.pop %v471
      %v473 = vmul.f32 %v464, 1.442695
      %v474 = vpow.pop %v473
      %v475 = vmul.f32 %v465, 1.442695
      %v476 = vpow.pop %v475
      %v477 = vmul.f32 %v466, 1.442695
      %v478 = vpow.pop %v477
      %v479 = vmul.f32 %v467, 1.442695
      %v480 = vpow.pop %v479
      %v481 = vmul.f32 %v468, 1.442695
      %v482 = vpow.pop %v481
      %v483 = vmul.f32 %v469, 1.442695
      %v484 = vpow.pop %v483
      %v485 = vmul.f32 %v470, 1.442695
      %v486 = vpow.pop %v485
      %v488 = vsel %vm441, 1.0, 0
      %490 = vmatprep.subr.mxu0 0.0
      %491 = vmatpush1.msra.mxu0 0.0
      %492 = vmatprep.subr.mxu0 0.0
      %493 = vmatpush1.msra.mxu0 0.0
      %494 = vmatprep.subr.mxu0 0.0
      %495 = vmatpush1.msra.mxu0 0.0
      %496 = vmatprep.subr.mxu0 0.0
      %497 = vmatpush1.msra.mxu0 0.0
      %498 = vmatprep.subr.mxu0 0.0
      %499 = vmatpush1.msra.mxu0 0.0
      %500 = vmatprep.subr.mxu0 0.0
      %501 = vmatpush1.msra.mxu0 0.0
      %502 = vmatprep.subr.mxu0 0.0
      %503 = vmatpush1.msra.mxu0 0.0
      %504 = vmatprep.subr.mxu0 0.0
      %505 = vmatpush1.msra.mxu0 0.0
      %506 = vmatprep.subr.mxu0 0.0
      %507 = vmatpush1.msra.mxu0 %v486
      %508 = vmatprep.subr.mxu0 0.0
      %509 = vmatpush1.msra.mxu0 %v484
      %510 = vmatprep.subr.mxu0 0.0
      %511 = vmatpush1.msra.mxu0 %v482
      %512 = vmatprep.subr.mxu0 0.0
      %513 = vmatpush1.msra.mxu0 %v480
      %514 = vmatprep.subr.mxu0 0.0
      %515 = vmatpush1.msra.mxu0 %v478
      %516 = vmatprep.subr.mxu0 0.0
      %517 = vmatpush1.msra.mxu0 %v476
      %518 = vmatprep.subr.mxu0 0.0
      %519 = vmatpush1.msra.mxu0 %v474
      %520 = vmatprep.subr.mxu0 0.0
      %521 = vmatpush1.msra.mxu0 %v472
      %522 = vmatprep.subr.mxu0 0.0
      %523 = vmatpush2.msra.mxu0 0.0
      %524 = vmatprep.subr.mxu0 0.0
      %525 = vmatpush2.msra.mxu0 0.0
      %526 = vmatprep.subr.mxu0 0.0
      %527 = vmatpush2.msra.mxu0 0.0
      %528 = vmatprep.subr.mxu0 0.0
      %529 = vmatpush2.msra.mxu0 0.0
      %530 = vmatprep.subr.mxu0 0.0
      %531 = vmatpush2.msra.mxu0 0.0
      %532 = vmatprep.subr.mxu0 0.0
      %533 = vmatpush2.msra.mxu0 0.0
      %534 = vmatprep.subr.mxu0 0.0
      %535 = vmatpush2.msra.mxu0 0.0
      %536 = vmatprep.subr.mxu0 0.0
      %537 = vmatpush2.msra.mxu0 0.0
      %538 = vmatprep.subr.mxu0 0.0
      %539 = vmatpush2.msra.mxu0 0.0
      %540 = vmatprep.subr.mxu0 0.0
      %541 = vmatpush2.msra.mxu0 0.0
      %542 = vmatprep.subr.mxu0 0.0
      %543 = vmatpush2.msra.mxu0 0.0
      %544 = vmatprep.subr.mxu0 0.0
      %545 = vmatpush2.msra.mxu0 0.0
      %546 = vmatprep.subr.mxu0 0.0
      %547 = vmatpush2.msra.mxu0 0.0
      %548 = vmatprep.subr.mxu0 0.0
      %549 = vmatpush2.msra.mxu0 0.0
      %550 = vmatprep.subr.mxu0 0.0
      %551 = vmatpush2.msra.mxu0 0.0
      %552 = vmatprep.subr.mxu0 0.0
      %553 = vmatpush2.msra.mxu0 0.0
      %554 = vmatprep.mubr.f32.mxu0 0.0
      %555 = vmatmul.mubr.f32.gmra.mxu0 %v488
      %v556 = vpop.f32.mrf.mxu0
      %v557 = vadd.f32 0.0, %v556
      %v558 = vpop.f32.mrf.mxu0
      %559 = vdwg.mxu0
      %v560 = vlog2.pop %v557
      %v561 = vmul.f32 %v560, 0.6931472
      %v562 = vadd.f32 %v462, %v561
      %v563 = vsub.f32 0.0, %v562
      %v564 = vmin.f32 %v563, 1000000.0
      %v565 = vlaneseq
      %v566 = vshrl.u32 %v565, 7
      %v567 = vsub.s32 0, %v566
      %v568 = vrot.slane %v564, %v567
      %v569 = vadd.f32 %v425, %v568
      %v570 = vadd.f32 %v426, %v568
      %v571 = vadd.f32 %v427, %v568
      %v572 = vadd.f32 %v428, %v568
      %v573 = vadd.f32 %v429, %v568
      %v574 = vadd.f32 %v430, %v568
      %v575 = vadd.f32 %v431, %v568
      %v576 = vadd.f32 %v432, %v568
      %v577 = vsel %vm441, %v569, -inf
      %578 = vmax.xlane.f32.xlu0 %v577
      %v579 = vpop.xlane.xlu0 %578
      %v580 = vsel %vm441, %v570, -inf
      %581 = vmax.xlane.f32.xlu0 %v580
      %v582 = vpop.xlane.xlu0 %581
      %v583 = vsel %vm441, %v571, -inf
      %584 = vmax.xlane.f32.xlu0 %v583
      %v585 = vpop.xlane.xlu0 %584
      %v586 = vsel %vm441, %v572, -inf
      %587 = vmax.xlane.f32.xlu0 %v586
      %v588 = vpop.xlane.xlu0 %587
      %v589 = vsel %vm441, %v573, -inf
      %590 = vmax.xlane.f32.xlu0 %v589
      %v591 = vpop.xlane.xlu0 %590
      %v592 = vsel %vm441, %v574, -inf
      %593 = vmax.xlane.f32.xlu0 %v592
      %v594 = vpop.xlane.xlu0 %593
      %v595 = vsel %vm441, %v575, -inf
      %596 = vmax.xlane.f32.xlu0 %v595
      %v597 = vpop.xlane.xlu0 %596
      %v598 = vsel %vm441, %v576, -inf
      %599 = vmax.xlane.f32.xlu0 %v598
      %v600 = vpop.xlane.xlu0 %599
      %v601 = vsub.f32 %v569, %v579
      %v602 = vsub.f32 %v570, %v582
      %v603 = vsub.f32 %v571, %v585
      %v604 = vsub.f32 %v572, %v588
      %v605 = vsub.f32 %v573, %v591
      %v606 = vsub.f32 %v574, %v594
      %v607 = vsub.f32 %v575, %v597
      %v608 = vsub.f32 %v576, %v600
      %v609 = vmul.f32 %v601, 1.442695
      %v610 = vpow.pop %v609
      %v611 = vmul.f32 %v602, 1.442695
      %v612 = vpow.pop %v611
      %v613 = vmul.f32 %v603, 1.442695
      %v614 = vpow.pop %v613
      %v615 = vmul.f32 %v604, 1.442695
      %v616 = vpow.pop %v615
      %v617 = vmul.f32 %v605, 1.442695
      %v618 = vpow.pop %v617
      %v619 = vmul.f32 %v606, 1.442695
      %v620 = vpow.pop %v619
      %v621 = vmul.f32 %v607, 1.442695
      %v622 = vpow.pop %v621
      %v623 = vmul.f32 %v608, 1.442695
      %v624 = vpow.pop %v623
      %v626 = vsel %vm441, %v610, 0
      %v629 = vsel %vm441, %v612, 0
      %v632 = vsel %vm441, %v614, 0
      %v635 = vsel %vm441, %v616, 0
      %v638 = vsel %vm441, %v618, 0
      %v641 = vsel %vm441, %v620, 0
      %v644 = vsel %vm441, %v622, 0
      %v647 = vsel %vm441, %v624, 0
      %649 = vmatprep.subr.mxu0 0.0
      %650 = vmatpush1.msra.mxu0 0.0
      %651 = vmatprep.subr.mxu0 0.0
      %652 = vmatpush1.msra.mxu0 0.0
      %653 = vmatprep.subr.mxu0 0.0
      %654 = vmatpush1.msra.mxu0 0.0
      %655 = vmatprep.subr.mxu0 0.0
      %656 = vmatpush1.msra.mxu0 0.0
      %657 = vmatprep.subr.mxu0 0.0
      %658 = vmatpush1.msra.mxu0 0.0
      %659 = vmatprep.subr.mxu0 0.0
      %660 = vmatpush1.msra.mxu0 0.0
      %661 = vmatprep.subr.mxu0 0.0
      %662 = vmatpush1.msra.mxu0 0.0
      %663 = vmatprep.subr.mxu0 0.0
      %664 = vmatpush1.msra.mxu0 0.0
      %665 = vmatprep.subr.mxu0 0.0
      %666 = vmatpush1.msra.mxu0 1.0
      %667 = vmatprep.subr.mxu0 0.0
      %668 = vmatpush1.msra.mxu0 1.0
      %669 = vmatprep.subr.mxu0 0.0
      %670 = vmatpush1.msra.mxu0 1.0
      %671 = vmatprep.subr.mxu0 0.0
      %672 = vmatpush1.msra.mxu0 1.0
      %673 = vmatprep.subr.mxu0 0.0
      %674 = vmatpush1.msra.mxu0 1.0
      %675 = vmatprep.subr.mxu0 0.0
      %676 = vmatpush1.msra.mxu0 1.0
      %677 = vmatprep.subr.mxu0 0.0
      %678 = vmatpush1.msra.mxu0 1.0
      %679 = vmatprep.subr.mxu0 0.0
      %680 = vmatpush1.msra.mxu0 1.0
      %681 = vmatprep.subr.mxu0 0.0
      %682 = vmatpush2.msra.mxu0 0.0
      %683 = vmatprep.subr.mxu0 0.0
      %684 = vmatpush2.msra.mxu0 0.0
      %685 = vmatprep.subr.mxu0 0.0
      %686 = vmatpush2.msra.mxu0 0.0
      %687 = vmatprep.subr.mxu0 0.0
      %688 = vmatpush2.msra.mxu0 0.0
      %689 = vmatprep.subr.mxu0 0.0
      %690 = vmatpush2.msra.mxu0 0.0
      %691 = vmatprep.subr.mxu0 0.0
      %692 = vmatpush2.msra.mxu0 0.0
      %693 = vmatprep.subr.mxu0 0.0
      %694 = vmatpush2.msra.mxu0 0.0
      %695 = vmatprep.subr.mxu0 0.0
      %696 = vmatpush2.msra.mxu0 0.0
      %697 = vmatprep.subr.mxu0 0.0
      %698 = vmatpush2.msra.mxu0 0.0
      %699 = vmatprep.subr.mxu0 0.0
      %700 = vmatpush2.msra.mxu0 0.0
      %701 = vmatprep.subr.mxu0 0.0
      %702 = vmatpush2.msra.mxu0 0.0
      %703 = vmatprep.subr.mxu0 0.0
      %704 = vmatpush2.msra.mxu0 0.0
      %705 = vmatprep.subr.mxu0 0.0
      %706 = vmatpush2.msra.mxu0 0.0
      %707 = vmatprep.subr.mxu0 0.0
      %708 = vmatpush2.msra.mxu0 0.0
      %709 = vmatprep.subr.mxu0 0.0
      %710 = vmatpush2.msra.mxu0 0.0
      %711 = vmatprep.subr.mxu0 0.0
      %712 = vmatpush2.msra.mxu0 0.0
      %713 = vmatprep.mubr.f32.mxu0 0.0
      %714 = vmatmul.mubr.f32.gmra.mxu0 %v626
      %v715 = vpop.f32.mrf.mxu0
      %v716 = vadd.f32 0.0, %v715
      %v717 = vpop.f32.mrf.mxu0
      %718 = vmatprep.mubr.f32.mxu0 0.0
      %719 = vmatmul.mubr.f32.gmra.mxu0 %v629
      %v720 = vpop.f32.mrf.mxu0
      %v721 = vadd.f32 0.0, %v720
      %v722 = vpop.f32.mrf.mxu0
      %723 = vmatprep.mubr.f32.mxu0 0.0
      %724 = vmatmul.mubr.f32.gmra.mxu0 %v632
      %v725 = vpop.f32.mrf.mxu0
      %v726 = vadd.f32 0.0, %v725
      %v727 = vpop.f32.mrf.mxu0
      %728 = vmatprep.mubr.f32.mxu0 0.0
      %729 = vmatmul.mubr.f32.gmra.mxu0 %v635
      %v730 = vpop.f32.mrf.mxu0
      %v731 = vadd.f32 0.0, %v730
      %v732 = vpop.f32.mrf.mxu0
      %733 = vmatprep.mubr.f32.mxu0 0.0
      %734 = vmatmul.mubr.f32.gmra.mxu0 %v638
      %v735 = vpop.f32.mrf.mxu0
      %v736 = vadd.f32 0.0, %v735
      %v737 = vpop.f32.mrf.mxu0
      %738 = vmatprep.mubr.f32.mxu0 0.0
      %739 = vmatmul.mubr.f32.gmra.mxu0 %v641
      %v740 = vpop.f32.mrf.mxu0
      %v741 = vadd.f32 0.0, %v740
      %v742 = vpop.f32.mrf.mxu0
      %743 = vmatprep.mubr.f32.mxu0 0.0
      %744 = vmatmul.mubr.f32.gmra.mxu0 %v644
      %v745 = vpop.f32.mrf.mxu0
      %v746 = vadd.f32 0.0, %v745
      %v747 = vpop.f32.mrf.mxu0
      %748 = vmatprep.mubr.f32.mxu0 0.0
      %749 = vmatmul.mubr.f32.gmra.mxu0 %v647
      %v750 = vpop.f32.mrf.mxu0
      %v751 = vadd.f32 0.0, %v750
      %v752 = vpop.f32.mrf.mxu0
      %753 = vdwg.mxu0
      %v754 = vlog2.pop %v716
      %v755 = vmul.f32 %v754, 0.6931472
      %v756 = vlog2.pop %v721
      %v757 = vmul.f32 %v756, 0.6931472
      %v758 = vlog2.pop %v726
      %v759 = vmul.f32 %v758, 0.6931472
      %v760 = vlog2.pop %v731
      %v761 = vmul.f32 %v760, 0.6931472
      %v762 = vlog2.pop %v736
      %v763 = vmul.f32 %v762, 0.6931472
      %v764 = vlog2.pop %v741
      %v765 = vmul.f32 %v764, 0.6931472
      %v766 = vlog2.pop %v746
      %v767 = vmul.f32 %v766, 0.6931472
      %v768 = vlog2.pop %v751
      %v769 = vmul.f32 %v768, 0.6931472
      %v770 = vadd.f32 %v579, %v755
      %v771 = vadd.f32 %v582, %v757
      %v772 = vadd.f32 %v585, %v759
      %v773 = vadd.f32 %v588, %v761
      %v774 = vadd.f32 %v591, %v763
      %v775 = vadd.f32 %v594, %v765
      %v776 = vadd.f32 %v597, %v767
      %v777 = vadd.f32 %v600, %v769
      %v778 = vsub.f32 0.0, %v770
      %v779 = vsub.f32 0.0, %v771
      %v780 = vsub.f32 0.0, %v772
      %v781 = vsub.f32 0.0, %v773
      %v782 = vsub.f32 0.0, %v774
      %v783 = vsub.f32 0.0, %v775
      %v784 = vsub.f32 0.0, %v776
      %v785 = vsub.f32 0.0, %v777
      %v786 = vmin.f32 %v778, 1000000.0
      %v787 = vmin.f32 %v779, 1000000.0
      %v788 = vmin.f32 %v780, 1000000.0
      %v789 = vmin.f32 %v781, 1000000.0
      %v790 = vmin.f32 %v782, 1000000.0
      %v791 = vmin.f32 %v783, 1000000.0
      %v792 = vmin.f32 %v784, 1000000.0
      %v793 = vmin.f32 %v785, 1000000.0
      %795 = vset.pattern.permute.xlu0 0
      %796 = vperm.xlu0 %795, %v786
      %v797 = vpop.permute.xlu0 %796
      %800 = vset.pattern.permute.xlu0 0
      %801 = vperm.xlu0 %800, %v787
      %v802 = vpop.permute.xlu0 %801
      %805 = vset.pattern.permute.xlu0 0
      %806 = vperm.xlu0 %805, %v788
      %v807 = vpop.permute.xlu0 %806
      %810 = vset.pattern.permute.xlu0 0
      %811 = vperm.xlu0 %810, %v789
      %v812 = vpop.permute.xlu0 %811
      %815 = vset.pattern.permute.xlu0 0
      %816 = vperm.xlu0 %815, %v790
      %v817 = vpop.permute.xlu0 %816
      %820 = vset.pattern.permute.xlu0 0
      %821 = vperm.xlu0 %820, %v791
      %v822 = vpop.permute.xlu0 %821
      %825 = vset.pattern.permute.xlu0 0
      %826 = vperm.xlu0 %825, %v792
      %v827 = vpop.permute.xlu0 %826
      %830 = vset.pattern.permute.xlu0 0
      %831 = vperm.xlu0 %830, %v793
      %v832 = vpop.permute.xlu0 %831
      %v834 = vadd.f32 %v425, %v797
      %v835 = vadd.f32 %v426, %v802
      %v836 = vadd.f32 %v427, %v807
      %v837 = vadd.f32 %v428, %v812
      %v838 = vadd.f32 %v429, %v817
      %v839 = vadd.f32 %v430, %v822
      %v840 = vadd.f32 %v431, %v827
      %v841 = vadd.f32 %v432, %v832
      %v842 = vsel %vm441, %v834, -inf
      %v843 = vsel %vm441, %v835, -inf
      %v844 = vsel %vm441, %v836, -inf
      %v845 = vsel %vm441, %v837, -inf
      %v846 = vsel %vm441, %v838, -inf
      %v847 = vmax.f32 %v842, %v846
      %v848 = vsel %vm441, %v839, -inf
      %v849 = vmax.f32 %v843, %v848
      %v850 = vsel %vm441, %v840, -inf
      %v851 = vmax.f32 %v844, %v850
      %v852 = vsel %vm441, %v841, -inf
      %v853 = vmax.f32 %v845, %v852
      %v854 = vmax.f32 %v847, %v849
      %v855 = vmax.f32 %v851, %v853
      %v856 = vmax.f32 %v854, %v855
      %v857 = vrot.slane %v856, 4
      %v858 = vmax.f32 %v856, %v857
      %v859 = vrot.slane %v858, 2
      %v860 = vmax.f32 %v858, %v859
      %v861 = vrot.slane %v860, 1
      %v862 = vmax.f32 %v860, %v861
      %v863 = vsub.f32 %v834, %v862
      %v864 = vsub.f32 %v835, %v862
      %v865 = vsub.f32 %v836, %v862
      %v866 = vsub.f32 %v837, %v862
      %v867 = vsub.f32 %v838, %v862
      %v868 = vsub.f32 %v839, %v862
      %v869 = vsub.f32 %v840, %v862
      %v870 = vsub.f32 %v841, %v862
      %v871 = vmul.f32 %v863, 1.442695
      %v872 = vpow.pop %v871
      %v873 = vmul.f32 %v864, 1.442695
      %v874 = vpow.pop %v873
      %v875 = vmul.f32 %v865, 1.442695
      %v876 = vpow.pop %v875
      %v877 = vmul.f32 %v866, 1.442695
      %v878 = vpow.pop %v877
      %v879 = vmul.f32 %v867, 1.442695
      %v880 = vpow.pop %v879
      %v881 = vmul.f32 %v868, 1.442695
      %v882 = vpow.pop %v881
      %v883 = vmul.f32 %v869, 1.442695
      %v884 = vpow.pop %v883
      %v885 = vmul.f32 %v870, 1.442695
      %v886 = vpow.pop %v885
      %887 = vmatprep.subr.mxu0 0.0
      %888 = vmatpush1.msra.mxu0 0.0
      %889 = vmatprep.subr.mxu0 0.0
      %890 = vmatpush1.msra.mxu0 0.0
      %891 = vmatprep.subr.mxu0 0.0
      %892 = vmatpush1.msra.mxu0 0.0
      %893 = vmatprep.subr.mxu0 0.0
      %894 = vmatpush1.msra.mxu0 0.0
      %895 = vmatprep.subr.mxu0 0.0
      %896 = vmatpush1.msra.mxu0 0.0
      %897 = vmatprep.subr.mxu0 0.0
      %898 = vmatpush1.msra.mxu0 0.0
      %899 = vmatprep.subr.mxu0 0.0
      %900 = vmatpush1.msra.mxu0 0.0
      %901 = vmatprep.subr.mxu0 0.0
      %902 = vmatpush1.msra.mxu0 0.0
      %903 = vmatprep.subr.mxu0 0.0
      %904 = vmatpush1.msra.mxu0 %v886
      %905 = vmatprep.subr.mxu0 0.0
      %906 = vmatpush1.msra.mxu0 %v884
      %907 = vmatprep.subr.mxu0 0.0
      %908 = vmatpush1.msra.mxu0 %v882
      %909 = vmatprep.subr.mxu0 0.0
      %910 = vmatpush1.msra.mxu0 %v880
      %911 = vmatprep.subr.mxu0 0.0
      %912 = vmatpush1.msra.mxu0 %v878
      %913 = vmatprep.subr.mxu0 0.0
      %914 = vmatpush1.msra.mxu0 %v876
      %915 = vmatprep.subr.mxu0 0.0
      %916 = vmatpush1.msra.mxu0 %v874
      %917 = vmatprep.subr.mxu0 0.0
      %918 = vmatpush1.msra.mxu0 %v872
      %919 = vmatprep.subr.mxu0 0.0
      %920 = vmatpush2.msra.mxu0 0.0
      %921 = vmatprep.subr.mxu0 0.0
      %922 = vmatpush2.msra.mxu0 0.0
      %923 = vmatprep.subr.mxu0 0.0
      %924 = vmatpush2.msra.mxu0 0.0
      %925 = vmatprep.subr.mxu0 0.0
      %926 = vmatpush2.msra.mxu0 0.0
      %927 = vmatprep.subr.mxu0 0.0
      %928 = vmatpush2.msra.mxu0 0.0
      %929 = vmatprep.subr.mxu0 0.0
      %930 = vmatpush2.msra.mxu0 0.0
      %931 = vmatprep.subr.mxu0 0.0
      %932 = vmatpush2.msra.mxu0 0.0
      %933 = vmatprep.subr.mxu0 0.0
      %934 = vmatpush2.msra.mxu0 0.0
      %935 = vmatprep.subr.mxu0 0.0
      %936 = vmatpush2.msra.mxu0 0.0
      %937 = vmatprep.subr.mxu0 0.0
      %938 = vmatpush2.msra.mxu0 0.0
      %939 = vmatprep.subr.mxu0 0.0
      %940 = vmatpush2.msra.mxu0 0.0
      %941 = vmatprep.subr.mxu0 0.0
      %942 = vmatpush2.msra.mxu0 0.0
      %943 = vmatprep.subr.mxu0 0.0
      %944 = vmatpush2.msra.mxu0 0.0
      %945 = vmatprep.subr.mxu0 0.0
      %946 = vmatpush2.msra.mxu0 0.0
      %947 = vmatprep.subr.mxu0 0.0
      %948 = vmatpush2.msra.mxu0 0.0
      %949 = vmatprep.subr.mxu0 0.0
      %950 = vmatpush2.msra.mxu0 0.0
      %951 = vmatprep.mubr.f32.mxu0 0.0
      %952 = vmatmul.mubr.f32.gmra.mxu0 %v488
      %v953 = vpop.f32.mrf.mxu0
      %v954 = vadd.f32 0.0, %v953
      %v955 = vpop.f32.mrf.mxu0
      %956 = vdwg.mxu0
      %v957 = vlog2.pop %v954
      %v958 = vmul.f32 %v957, 0.6931472
      %v959 = vadd.f32 %v862, %v958
      %v960 = vsub.f32 0.0, %v959
      %v961 = vmin.f32 %v960, 1000000.0
      %v962 = vlaneseq
      %v963 = vshrl.u32 %v962, 7
      %v964 = vsub.s32 0, %v963
      %v965 = vrot.slane %v961, %v964
      %v966 = vadd.f32 %v425, %v965
      %v967 = vadd.f32 %v426, %v965
      %v968 = vadd.f32 %v427, %v965
      %v969 = vadd.f32 %v428, %v965
      %v970 = vadd.f32 %v429, %v965
      %v971 = vadd.f32 %v430, %v965
      %v972 = vadd.f32 %v431, %v965
      %v973 = vadd.f32 %v432, %v965
      %v974 = vsel %vm441, %v966, -inf
      %975 = vmax.xlane.f32.xlu0 %v974
      %v976 = vpop.xlane.xlu0 %975
      %v977 = vsel %vm441, %v967, -inf
      %978 = vmax.xlane.f32.xlu0 %v977
      %v979 = vpop.xlane.xlu0 %978
      %v980 = vsel %vm441, %v968, -inf
      %981 = vmax.xlane.f32.xlu0 %v980
      %v982 = vpop.xlane.xlu0 %981
      %v983 = vsel %vm441, %v969, -inf
      %984 = vmax.xlane.f32.xlu0 %v983
      %v985 = vpop.xlane.xlu0 %984
      %v986 = vsel %vm441, %v970, -inf
      %987 = vmax.xlane.f32.xlu0 %v986
      %v988 = vpop.xlane.xlu0 %987
      %v989 = vsel %vm441, %v971, -inf
      %990 = vmax.xlane.f32.xlu0 %v989
      %v991 = vpop.xlane.xlu0 %990
      %v992 = vsel %vm441, %v972, -inf
      %993 = vmax.xlane.f32.xlu0 %v992
      %v994 = vpop.xlane.xlu0 %993
      %v995 = vsel %vm441, %v973, -inf
      %996 = vmax.xlane.f32.xlu0 %v995
      %v997 = vpop.xlane.xlu0 %996
      %v998 = vsub.f32 %v966, %v976
      %v999 = vsub.f32 %v967, %v979
      %v1000 = vsub.f32 %v968, %v982
      %v1001 = vsub.f32 %v969, %v985
      %v1002 = vsub.f32 %v970, %v988
      %v1003 = vsub.f32 %v971, %v991
      %v1004 = vsub.f32 %v972, %v994
      %v1005 = vsub.f32 %v973, %v997
      %v1006 = vmul.f32 %v998, 1.442695
      %v1007 = vpow.pop %v1006
      %v1008 = vmul.f32 %v999, 1.442695
      %v1009 = vpow.pop %v1008
      %v1010 = vmul.f32 %v1000, 1.442695
      %v1011 = vpow.pop %v1010
      %v1012 = vmul.f32 %v1001, 1.442695
      %v1013 = vpow.pop %v1012
      %v1014 = vmul.f32 %v1002, 1.442695
      %v1015 = vpow.pop %v1014
      %v1016 = vmul.f32 %v1003, 1.442695
      %v1017 = vpow.pop %v1016
      %v1018 = vmul.f32 %v1004, 1.442695
      %v1019 = vpow.pop %v1018
      %v1020 = vmul.f32 %v1005, 1.442695
      %v1021 = vpow.pop %v1020
      %v1023 = vsel %vm441, %v1007, 0
      %v1026 = vsel %vm441, %v1009, 0
      %v1029 = vsel %vm441, %v1011, 0
      %v1032 = vsel %vm441, %v1013, 0
      %v1035 = vsel %vm441, %v1015, 0
      %v1038 = vsel %vm441, %v1017, 0
      %v1041 = vsel %vm441, %v1019, 0
      %v1044 = vsel %vm441, %v1021, 0
      %1046 = vmatprep.subr.mxu0 0.0
      %1047 = vmatpush1.msra.mxu0 0.0
      %1048 = vmatprep.subr.mxu0 0.0
      %1049 = vmatpush1.msra.mxu0 0.0
      %1050 = vmatprep.subr.mxu0 0.0
      %1051 = vmatpush1.msra.mxu0 0.0
      %1052 = vmatprep.subr.mxu0 0.0
      %1053 = vmatpush1.msra.mxu0 0.0
      %1054 = vmatprep.subr.mxu0 0.0
      %1055 = vmatpush1.msra.mxu0 0.0
      %1056 = vmatprep.subr.mxu0 0.0
      %1057 = vmatpush1.msra.mxu0 0.0
      %1058 = vmatprep.subr.mxu0 0.0
      %1059 = vmatpush1.msra.mxu0 0.0
      %1060 = vmatprep.subr.mxu0 0.0
      %1061 = vmatpush1.msra.mxu0 0.0
      %1062 = vmatprep.subr.mxu0 0.0
      %1063 = vmatpush1.msra.mxu0 1.0
      %1064 = vmatprep.subr.mxu0 0.0
      %1065 = vmatpush1.msra.mxu0 1.0
      %1066 = vmatprep.subr.mxu0 0.0
      %1067 = vmatpush1.msra.mxu0 1.0
      %1068 = vmatprep.subr.mxu0 0.0
      %1069 = vmatpush1.msra.mxu0 1.0
      %1070 = vmatprep.subr.mxu0 0.0
      %1071 = vmatpush1.msra.mxu0 1.0
      %1072 = vmatprep.subr.mxu0 0.0
      %1073 = vmatpush1.msra.mxu0 1.0
      %1074 = vmatprep.subr.mxu0 0.0
      %1075 = vmatpush1.msra.mxu0 1.0
      %1076 = vmatprep.subr.mxu0 0.0
      %1077 = vmatpush1.msra.mxu0 1.0
      %1078 = vmatprep.subr.mxu0 0.0
      %1079 = vmatpush2.msra.mxu0 0.0
      %1080 = vmatprep.subr.mxu0 0.0
      %1081 = vmatpush2.msra.mxu0 0.0
      %1082 = vmatprep.subr.mxu0 0.0
      %1083 = vmatpush2.msra.mxu0 0.0
      %1084 = vmatprep.subr.mxu0 0.0
      %1085 = vmatpush2.msra.mxu0 0.0
      %1086 = vmatprep.subr.mxu0 0.0
      %1087 = vmatpush2.msra.mxu0 0.0
      %1088 = vmatprep.subr.mxu0 0.0
      %1089 = vmatpush2.msra.mxu0 0.0
      %1090 = vmatprep.subr.mxu0 0.0
      %1091 = vmatpush2.msra.mxu0 0.0
      %1092 = vmatprep.subr.mxu0 0.0
      %1093 = vmatpush2.msra.mxu0 0.0
      %1094 = vmatprep.subr.mxu0 0.0
      %1095 = vmatpush2.msra.mxu0 0.0
      %1096 = vmatprep.subr.mxu0 0.0
      %1097 = vmatpush2.msra.mxu0 0.0
      %1098 = vmatprep.subr.mxu0 0.0
      %1099 = vmatpush2.msra.mxu0 0.0
      %1100 = vmatprep.subr.mxu0 0.0
      %1101 = vmatpush2.msra.mxu0 0.0
      %1102 = vmatprep.subr.mxu0 0.0
      %1103 = vmatpush2.msra.mxu0 0.0
      %1104 = vmatprep.subr.mxu0 0.0
      %1105 = vmatpush2.msra.mxu0 0.0
      %1106 = vmatprep.subr.mxu0 0.0
      %1107 = vmatpush2.msra.mxu0 0.0
      %1108 = vmatprep.subr.mxu0 0.0
      %1109 = vmatpush2.msra.mxu0 0.0
      %1110 = vmatprep.mubr.f32.mxu0 0.0
      %1111 = vmatmul.mubr.f32.gmra.mxu0 %v1023
      %v1112 = vpop.f32.mrf.mxu0
      %v1113 = vadd.f32 0.0, %v1112
      %v1114 = vpop.f32.mrf.mxu0
      %1115 = vmatprep.mubr.f32.mxu0 0.0
      %1116 = vmatmul.mubr.f32.gmra.mxu0 %v1026
      %v1117 = vpop.f32.mrf.mxu0
      %v1118 = vadd.f32 0.0, %v1117
      %v1119 = vpop.f32.mrf.mxu0
      %1120 = vmatprep.mubr.f32.mxu0 0.0
      %1121 = vmatmul.mubr.f32.gmra.mxu0 %v1029
      %v1122 = vpop.f32.mrf.mxu0
      %v1123 = vadd.f32 0.0, %v1122
      %v1124 = vpop.f32.mrf.mxu0
      %1125 = vmatprep.mubr.f32.mxu0 0.0
      %1126 = vmatmul.mubr.f32.gmra.mxu0 %v1032
      %v1127 = vpop.f32.mrf.mxu0
      %v1128 = vadd.f32 0.0, %v1127
      %v1129 = vpop.f32.mrf.mxu0
      %1130 = vmatprep.mubr.f32.mxu0 0.0
      %1131 = vmatmul.mubr.f32.gmra.mxu0 %v1035
      %v1132 = vpop.f32.mrf.mxu0
      %v1133 = vadd.f32 0.0, %v1132
      %v1134 = vpop.f32.mrf.mxu0
      %1135 = vmatprep.mubr.f32.mxu0 0.0
      %1136 = vmatmul.mubr.f32.gmra.mxu0 %v1038
      %v1137 = vpop.f32.mrf.mxu0
      %v1138 = vadd.f32 0.0, %v1137
      %v1139 = vpop.f32.mrf.mxu0
      %1140 = vmatprep.mubr.f32.mxu0 0.0
      %1141 = vmatmul.mubr.f32.gmra.mxu0 %v1041
      %v1142 = vpop.f32.mrf.mxu0
      %v1143 = vadd.f32 0.0, %v1142
      %v1144 = vpop.f32.mrf.mxu0
      %1145 = vmatprep.mubr.f32.mxu0 0.0
      %1146 = vmatmul.mubr.f32.gmra.mxu0 %v1044
      %v1147 = vpop.f32.mrf.mxu0
      %v1148 = vadd.f32 0.0, %v1147
      %v1149 = vpop.f32.mrf.mxu0
      %1150 = vdwg.mxu0
      %v1151 = vlog2.pop %v1113
      %v1152 = vmul.f32 %v1151, 0.6931472
      %v1153 = vlog2.pop %v1118
      %v1154 = vmul.f32 %v1153, 0.6931472
      %v1155 = vlog2.pop %v1123
      %v1156 = vmul.f32 %v1155, 0.6931472
      %v1157 = vlog2.pop %v1128
      %v1158 = vmul.f32 %v1157, 0.6931472
      %v1159 = vlog2.pop %v1133
      %v1160 = vmul.f32 %v1159, 0.6931472
      %v1161 = vlog2.pop %v1138
      %v1162 = vmul.f32 %v1161, 0.6931472
      %v1163 = vlog2.pop %v1143
      %v1164 = vmul.f32 %v1163, 0.6931472
      %v1165 = vlog2.pop %v1148
      %v1166 = vmul.f32 %v1165, 0.6931472
      %v1167 = vadd.f32 %v976, %v1152
      %v1168 = vadd.f32 %v979, %v1154
      %v1169 = vadd.f32 %v982, %v1156
      %v1170 = vadd.f32 %v985, %v1158
      %v1171 = vadd.f32 %v988, %v1160
      %v1172 = vadd.f32 %v991, %v1162
      %v1173 = vadd.f32 %v994, %v1164
      %v1174 = vadd.f32 %v997, %v1166
      %v1175 = vsub.f32 0.0, %v1167
      %v1176 = vsub.f32 0.0, %v1168
      %v1177 = vsub.f32 0.0, %v1169
      %v1178 = vsub.f32 0.0, %v1170
      %v1179 = vsub.f32 0.0, %v1171
      %v1180 = vsub.f32 0.0, %v1172
      %v1181 = vsub.f32 0.0, %v1173
      %v1182 = vsub.f32 0.0, %v1174
      %v1183 = vmin.f32 %v1175, 1000000.0
      %v1184 = vmin.f32 %v1176, 1000000.0
      %v1185 = vmin.f32 %v1177, 1000000.0
      %v1186 = vmin.f32 %v1178, 1000000.0
      %v1187 = vmin.f32 %v1179, 1000000.0
      %v1188 = vmin.f32 %v1180, 1000000.0
      %v1189 = vmin.f32 %v1181, 1000000.0
      %v1190 = vmin.f32 %v1182, 1000000.0
      %1192 = vset.pattern.permute.xlu0 0
      %1193 = vperm.xlu0 %1192, %v1183
      %v1194 = vpop.permute.xlu0 %1193
      %1197 = vset.pattern.permute.xlu0 0
      %1198 = vperm.xlu0 %1197, %v1184
      %v1199 = vpop.permute.xlu0 %1198
      %1202 = vset.pattern.permute.xlu0 0
      %1203 = vperm.xlu0 %1202, %v1185
      %v1204 = vpop.permute.xlu0 %1203
      %1207 = vset.pattern.permute.xlu0 0
      %1208 = vperm.xlu0 %1207, %v1186
      %v1209 = vpop.permute.xlu0 %1208
      %1212 = vset.pattern.permute.xlu0 0
      %1213 = vperm.xlu0 %1212, %v1187
      %v1214 = vpop.permute.xlu0 %1213
      %1217 = vset.pattern.permute.xlu0 0
      %1218 = vperm.xlu0 %1217, %v1188
      %v1219 = vpop.permute.xlu0 %1218
      %1222 = vset.pattern.permute.xlu0 0
      %1223 = vperm.xlu0 %1222, %v1189
      %v1224 = vpop.permute.xlu0 %1223
      %1227 = vset.pattern.permute.xlu0 0
      %1228 = vperm.xlu0 %1227, %v1190
      %v1229 = vpop.permute.xlu0 %1228
      %v1231 = vadd.f32 %v425, %v1194
      %v1232 = vadd.f32 %v426, %v1199
      %v1233 = vadd.f32 %v427, %v1204
      %v1234 = vadd.f32 %v428, %v1209
      %v1235 = vadd.f32 %v429, %v1214
      %v1236 = vadd.f32 %v430, %v1219
      %v1237 = vadd.f32 %v431, %v1224
      %v1238 = vadd.f32 %v432, %v1229
      %v1239 = vsel %vm441, %v1231, -inf
      %v1240 = vsel %vm441, %v1232, -inf
      %v1241 = vsel %vm441, %v1233, -inf
      %v1242 = vsel %vm441, %v1234, -inf
      %v1243 = vsel %vm441, %v1235, -inf
      %v1244 = vmax.f32 %v1239, %v1243
      %v1245 = vsel %vm441, %v1236, -inf
      %v1246 = vmax.f32 %v1240, %v1245
      %v1247 = vsel %vm441, %v1237, -inf
      %v1248 = vmax.f32 %v1241, %v1247
      %v1249 = vsel %vm441, %v1238, -inf
      %v1250 = vmax.f32 %v1242, %v1249
      %v1251 = vmax.f32 %v1244, %v1246
      %v1252 = vmax.f32 %v1248, %v1250
      %v1253 = vmax.f32 %v1251, %v1252
      %v1254 = vrot.slane %v1253, 4
      %v1255 = vmax.f32 %v1253, %v1254
      %v1256 = vrot.slane %v1255, 2
      %v1257 = vmax.f32 %v1255, %v1256
      %v1258 = vrot.slane %v1257, 1
      %v1259 = vmax.f32 %v1257, %v1258
      %v1260 = vsub.f32 %v1231, %v1259
      %v1261 = vsub.f32 %v1232, %v1259
      %v1262 = vsub.f32 %v1233, %v1259
      %v1263 = vsub.f32 %v1234, %v1259
      %v1264 = vsub.f32 %v1235, %v1259
      %v1265 = vsub.f32 %v1236, %v1259
      %v1266 = vsub.f32 %v1237, %v1259
      %v1267 = vsub.f32 %v1238, %v1259
      %v1268 = vmul.f32 %v1260, 1.442695
      %v1269 = vpow.pop %v1268
      %v1270 = vmul.f32 %v1261, 1.442695
      %v1271 = vpow.pop %v1270
      %v1272 = vmul.f32 %v1262, 1.442695
      %v1273 = vpow.pop %v1272
      %v1274 = vmul.f32 %v1263, 1.442695
      %v1275 = vpow.pop %v1274
      %v1276 = vmul.f32 %v1264, 1.442695
      %v1277 = vpow.pop %v1276
      %v1278 = vmul.f32 %v1265, 1.442695
      %v1279 = vpow.pop %v1278
      %v1280 = vmul.f32 %v1266, 1.442695
      %v1281 = vpow.pop %v1280
      %v1282 = vmul.f32 %v1267, 1.442695
      %v1283 = vpow.pop %v1282
      %1284 = vmatprep.subr.mxu0 0.0
      %1285 = vmatpush1.msra.mxu0 0.0
      %1286 = vmatprep.subr.mxu0 0.0
      %1287 = vmatpush1.msra.mxu0 0.0
      %1288 = vmatprep.subr.mxu0 0.0
      %1289 = vmatpush1.msra.mxu0 0.0
      %1290 = vmatprep.subr.mxu0 0.0
      %1291 = vmatpush1.msra.mxu0 0.0
      %1292 = vmatprep.subr.mxu0 0.0
      %1293 = vmatpush1.msra.mxu0 0.0
      %1294 = vmatprep.subr.mxu0 0.0
      %1295 = vmatpush1.msra.mxu0 0.0
      %1296 = vmatprep.subr.mxu0 0.0
      %1297 = vmatpush1.msra.mxu0 0.0
      %1298 = vmatprep.subr.mxu0 0.0
      %1299 = vmatpush1.msra.mxu0 0.0
      %1300 = vmatprep.subr.mxu0 0.0
      %1301 = vmatpush1.msra.mxu0 %v1283
      %1302 = vmatprep.subr.mxu0 0.0
      %1303 = vmatpush1.msra.mxu0 %v1281
      %1304 = vmatprep.subr.mxu0 0.0
      %1305 = vmatpush1.msra.mxu0 %v1279
      %1306 = vmatprep.subr.mxu0 0.0
      %1307 = vmatpush1.msra.mxu0 %v1277
      %1308 = vmatprep.subr.mxu0 0.0
      %1309 = vmatpush1.msra.mxu0 %v1275
      %1310 = vmatprep.subr.mxu0 0.0
      %1311 = vmatpush1.msra.mxu0 %v1273
      %1312 = vmatprep.subr.mxu0 0.0
      %1313 = vmatpush1.msra.mxu0 %v1271
      %1314 = vmatprep.subr.mxu0 0.0
      %1315 = vmatpush1.msra.mxu0 %v1269
      %1316 = vmatprep.subr.mxu0 0.0
      %1317 = vmatpush2.msra.mxu0 0.0
      %1318 = vmatprep.subr.mxu0 0.0
      %1319 = vmatpush2.msra.mxu0 0.0
      %1320 = vmatprep.subr.mxu0 0.0
      %1321 = vmatpush2.msra.mxu0 0.0
      %1322 = vmatprep.subr.mxu0 0.0
      %1323 = vmatpush2.msra.mxu0 0.0
      %1324 = vmatprep.subr.mxu0 0.0
      %1325 = vmatpush2.msra.mxu0 0.0
      %1326 = vmatprep.subr.mxu0 0.0
      %1327 = vmatpush2.msra.mxu0 0.0
      %1328 = vmatprep.subr.mxu0 0.0
      %1329 = vmatpush2.msra.mxu0 0.0
      %1330 = vmatprep.subr.mxu0 0.0
      %1331 = vmatpush2.msra.mxu0 0.0
      %1332 = vmatprep.subr.mxu0 0.0
      %1333 = vmatpush2.msra.mxu0 0.0
      %1334 = vmatprep.subr.mxu0 0.0
      %1335 = vmatpush2.msra.mxu0 0.0
      %1336 = vmatprep.subr.mxu0 0.0
      %1337 = vmatpush2.msra.mxu0 0.0
      %1338 = vmatprep.subr.mxu0 0.0
      %1339 = vmatpush2.msra.mxu0 0.0
      %1340 = vmatprep.subr.mxu0 0.0
      %1341 = vmatpush2.msra.mxu0 0.0
      %1342 = vmatprep.subr.mxu0 0.0
      %1343 = vmatpush2.msra.mxu0 0.0
      %1344 = vmatprep.subr.mxu0 0.0
      %1345 = vmatpush2.msra.mxu0 0.0
      %1346 = vmatprep.subr.mxu0 0.0
      %1347 = vmatpush2.msra.mxu0 0.0
      %1348 = vmatprep.mubr.f32.mxu0 0.0
      %1349 = vmatmul.mubr.f32.gmra.mxu0 %v488
      %v1350 = vpop.f32.mrf.mxu0
      %v1351 = vadd.f32 0.0, %v1350
      %v1352 = vpop.f32.mrf.mxu0
      %1353 = vdwg.mxu0
      %v1354 = vlog2.pop %v1351
      %v1355 = vmul.f32 %v1354, 0.6931472
      %v1356 = vadd.f32 %v1259, %v1355
      %v1357 = vsub.f32 0.0, %v1356
      %v1358 = vmin.f32 %v1357, 1000000.0
      %v1359 = vlaneseq
      %v1360 = vshrl.u32 %v1359, 7
      %v1361 = vsub.s32 0, %v1360
      %v1362 = vrot.slane %v1358, %v1361
      %v1363 = vadd.f32 %v425, %v1362
      %v1364 = vadd.f32 %v426, %v1362
      %v1365 = vadd.f32 %v427, %v1362
      %v1366 = vadd.f32 %v428, %v1362
      %v1367 = vadd.f32 %v429, %v1362
      %v1368 = vadd.f32 %v430, %v1362
      %v1369 = vadd.f32 %v431, %v1362
      %v1370 = vadd.f32 %v432, %v1362
      %v1371 = vsel %vm441, %v1363, -inf
      %1372 = vmax.xlane.f32.xlu0 %v1371
      %v1373 = vpop.xlane.xlu0 %1372
      %v1374 = vsel %vm441, %v1364, -inf
      %1375 = vmax.xlane.f32.xlu0 %v1374
      %v1376 = vpop.xlane.xlu0 %1375
      %v1377 = vsel %vm441, %v1365, -inf
      %1378 = vmax.xlane.f32.xlu0 %v1377
      %v1379 = vpop.xlane.xlu0 %1378
      %v1380 = vsel %vm441, %v1366, -inf
      %1381 = vmax.xlane.f32.xlu0 %v1380
      %v1382 = vpop.xlane.xlu0 %1381
      %v1383 = vsel %vm441, %v1367, -inf
      %1384 = vmax.xlane.f32.xlu0 %v1383
      %v1385 = vpop.xlane.xlu0 %1384
      %v1386 = vsel %vm441, %v1368, -inf
      %1387 = vmax.xlane.f32.xlu0 %v1386
      %v1388 = vpop.xlane.xlu0 %1387
      %v1389 = vsel %vm441, %v1369, -inf
      %1390 = vmax.xlane.f32.xlu0 %v1389
      %v1391 = vpop.xlane.xlu0 %1390
      %v1392 = vsel %vm441, %v1370, -inf
      %1393 = vmax.xlane.f32.xlu0 %v1392
      %v1394 = vpop.xlane.xlu0 %1393
      %v1395 = vsub.f32 %v1363, %v1373
      %v1396 = vsub.f32 %v1364, %v1376
      %v1397 = vsub.f32 %v1365, %v1379
      %v1398 = vsub.f32 %v1366, %v1382
      %v1399 = vsub.f32 %v1367, %v1385
      %v1400 = vsub.f32 %v1368, %v1388
      %v1401 = vsub.f32 %v1369, %v1391
      %v1402 = vsub.f32 %v1370, %v1394
      %v1403 = vmul.f32 %v1395, 1.442695
      %v1404 = vpow.pop %v1403
      %v1405 = vmul.f32 %v1396, 1.442695
      %v1406 = vpow.pop %v1405
      %v1407 = vmul.f32 %v1397, 1.442695
      %v1408 = vpow.pop %v1407
      %v1409 = vmul.f32 %v1398, 1.442695
      %v1410 = vpow.pop %v1409
      %v1411 = vmul.f32 %v1399, 1.442695
      %v1412 = vpow.pop %v1411
      %v1413 = vmul.f32 %v1400, 1.442695
      %v1414 = vpow.pop %v1413
      %v1415 = vmul.f32 %v1401, 1.442695
      %v1416 = vpow.pop %v1415
      %v1417 = vmul.f32 %v1402, 1.442695
      %v1418 = vpow.pop %v1417
      %v1420 = vsel %vm441, %v1404, 0
      %v1423 = vsel %vm441, %v1406, 0
      %v1426 = vsel %vm441, %v1408, 0
      %v1429 = vsel %vm441, %v1410, 0
      %v1432 = vsel %vm441, %v1412, 0
      %v1435 = vsel %vm441, %v1414, 0
      %v1438 = vsel %vm441, %v1416, 0
      %v1441 = vsel %vm441, %v1418, 0
      %1443 = vmatprep.subr.mxu0 0.0
      %1444 = vmatpush1.msra.mxu0 0.0
      %1445 = vmatprep.subr.mxu0 0.0
      %1446 = vmatpush1.msra.mxu0 0.0
      %1447 = vmatprep.subr.mxu0 0.0
      %1448 = vmatpush1.msra.mxu0 0.0
      %1449 = vmatprep.subr.mxu0 0.0
      %1450 = vmatpush1.msra.mxu0 0.0
      %1451 = vmatprep.subr.mxu0 0.0
      %1452 = vmatpush1.msra.mxu0 0.0
      %1453 = vmatprep.subr.mxu0 0.0
      %1454 = vmatpush1.msra.mxu0 0.0
      %1455 = vmatprep.subr.mxu0 0.0
      %1456 = vmatpush1.msra.mxu0 0.0
      %1457 = vmatprep.subr.mxu0 0.0
      %1458 = vmatpush1.msra.mxu0 0.0
      %1459 = vmatprep.subr.mxu0 0.0
      %1460 = vmatpush1.msra.mxu0 1.0
      %1461 = vmatprep.subr.mxu0 0.0
      %1462 = vmatpush1.msra.mxu0 1.0
      %1463 = vmatprep.subr.mxu0 0.0
      %1464 = vmatpush1.msra.mxu0 1.0
      %1465 = vmatprep.subr.mxu0 0.0
      %1466 = vmatpush1.msra.mxu0 1.0
      %1467 = vmatprep.subr.mxu0 0.0
      %1468 = vmatpush1.msra.mxu0 1.0
      %1469 = vmatprep.subr.mxu0 0.0
      %1470 = vmatpush1.msra.mxu0 1.0
      %1471 = vmatprep.subr.mxu0 0.0
      %1472 = vmatpush1.msra.mxu0 1.0
      %1473 = vmatprep.subr.mxu0 0.0
      %1474 = vmatpush1.msra.mxu0 1.0
      %1475 = vmatprep.subr.mxu0 0.0
      %1476 = vmatpush2.msra.mxu0 0.0
      %1477 = vmatprep.subr.mxu0 0.0
      %1478 = vmatpush2.msra.mxu0 0.0
      %1479 = vmatprep.subr.mxu0 0.0
      %1480 = vmatpush2.msra.mxu0 0.0
      %1481 = vmatprep.subr.mxu0 0.0
      %1482 = vmatpush2.msra.mxu0 0.0
      %1483 = vmatprep.subr.mxu0 0.0
      %1484 = vmatpush2.msra.mxu0 0.0
      %1485 = vmatprep.subr.mxu0 0.0
      %1486 = vmatpush2.msra.mxu0 0.0
      %1487 = vmatprep.subr.mxu0 0.0
      %1488 = vmatpush2.msra.mxu0 0.0
      %1489 = vmatprep.subr.mxu0 0.0
      %1490 = vmatpush2.msra.mxu0 0.0
      %1491 = vmatprep.subr.mxu0 0.0
      %1492 = vmatpush2.msra.mxu0 0.0
      %1493 = vmatprep.subr.mxu0 0.0
      %1494 = vmatpush2.msra.mxu0 0.0
      %1495 = vmatprep.subr.mxu0 0.0
      %1496 = vmatpush2.msra.mxu0 0.0
      %1497 = vmatprep.subr.mxu0 0.0
      %1498 = vmatpush2.msra.mxu0 0.0
      %1499 = vmatprep.subr.mxu0 0.0
      %1500 = vmatpush2.msra.mxu0 0.0
      %1501 = vmatprep.subr.mxu0 0.0
      %1502 = vmatpush2.msra.mxu0 0.0
      %1503 = vmatprep.subr.mxu0 0.0
      %1504 = vmatpush2.msra.mxu0 0.0
      %1505 = vmatprep.subr.mxu0 0.0
      %1506 = vmatpush2.msra.mxu0 0.0
      %1507 = vmatprep.mubr.f32.mxu0 0.0
      %1508 = vmatmul.mubr.f32.gmra.mxu0 %v1420
      %v1509 = vpop.f32.mrf.mxu0
      %v1510 = vadd.f32 0.0, %v1509
      %v1511 = vpop.f32.mrf.mxu0
      %1512 = vmatprep.mubr.f32.mxu0 0.0
      %1513 = vmatmul.mubr.f32.gmra.mxu0 %v1423
      %v1514 = vpop.f32.mrf.mxu0
      %v1515 = vadd.f32 0.0, %v1514
      %v1516 = vpop.f32.mrf.mxu0
      %1517 = vmatprep.mubr.f32.mxu0 0.0
      %1518 = vmatmul.mubr.f32.gmra.mxu0 %v1426
      %v1519 = vpop.f32.mrf.mxu0
      %v1520 = vadd.f32 0.0, %v1519
      %v1521 = vpop.f32.mrf.mxu0
      %1522 = vmatprep.mubr.f32.mxu0 0.0
      %1523 = vmatmul.mubr.f32.gmra.mxu0 %v1429
      %v1524 = vpop.f32.mrf.mxu0
      %v1525 = vadd.f32 0.0, %v1524
      %v1526 = vpop.f32.mrf.mxu0
      %1527 = vmatprep.mubr.f32.mxu0 0.0
      %1528 = vmatmul.mubr.f32.gmra.mxu0 %v1432
      %v1529 = vpop.f32.mrf.mxu0
      %v1530 = vadd.f32 0.0, %v1529
      %v1531 = vpop.f32.mrf.mxu0
      %1532 = vmatprep.mubr.f32.mxu0 0.0
      %1533 = vmatmul.mubr.f32.gmra.mxu0 %v1435
      %v1534 = vpop.f32.mrf.mxu0
      %v1535 = vadd.f32 0.0, %v1534
      %v1536 = vpop.f32.mrf.mxu0
      %1537 = vmatprep.mubr.f32.mxu0 0.0
      %1538 = vmatmul.mubr.f32.gmra.mxu0 %v1438
      %v1539 = vpop.f32.mrf.mxu0
      %v1540 = vadd.f32 0.0, %v1539
      %v1541 = vpop.f32.mrf.mxu0
      %1542 = vmatprep.mubr.f32.mxu0 0.0
      %1543 = vmatmul.mubr.f32.gmra.mxu0 %v1441
      %v1544 = vpop.f32.mrf.mxu0
      %v1545 = vadd.f32 0.0, %v1544
      %v1546 = vpop.f32.mrf.mxu0
      %1547 = vdwg.mxu0
      %v1548 = vlog2.pop %v1510
      %v1549 = vmul.f32 %v1548, 0.6931472
      %v1550 = vlog2.pop %v1515
      %v1551 = vmul.f32 %v1550, 0.6931472
      %v1552 = vlog2.pop %v1520
      %v1553 = vmul.f32 %v1552, 0.6931472
      %v1554 = vlog2.pop %v1525
      %v1555 = vmul.f32 %v1554, 0.6931472
      %v1556 = vlog2.pop %v1530
      %v1557 = vmul.f32 %v1556, 0.6931472
      %v1558 = vlog2.pop %v1535
      %v1559 = vmul.f32 %v1558, 0.6931472
      %v1560 = vlog2.pop %v1540
      %v1561 = vmul.f32 %v1560, 0.6931472
      %v1562 = vlog2.pop %v1545
      %v1563 = vmul.f32 %v1562, 0.6931472
      %v1564 = vadd.f32 %v1373, %v1549
      %v1565 = vadd.f32 %v1376, %v1551
      %v1566 = vadd.f32 %v1379, %v1553
      %v1567 = vadd.f32 %v1382, %v1555
      %v1568 = vadd.f32 %v1385, %v1557
      %v1569 = vadd.f32 %v1388, %v1559
      %v1570 = vadd.f32 %v1391, %v1561
      %v1571 = vadd.f32 %v1394, %v1563
      %v1572 = vsub.f32 0.0, %v1564
      %v1573 = vsub.f32 0.0, %v1565
      %v1574 = vsub.f32 0.0, %v1566
      %v1575 = vsub.f32 0.0, %v1567
      %v1576 = vsub.f32 0.0, %v1568
      %v1577 = vsub.f32 0.0, %v1569
      %v1578 = vsub.f32 0.0, %v1570
      %v1579 = vsub.f32 0.0, %v1571
      %v1580 = vmin.f32 %v1572, 1000000.0
      %v1581 = vmin.f32 %v1573, 1000000.0
      %v1582 = vmin.f32 %v1574, 1000000.0
      %v1583 = vmin.f32 %v1575, 1000000.0
      %v1584 = vmin.f32 %v1576, 1000000.0
      %v1585 = vmin.f32 %v1577, 1000000.0
      %v1586 = vmin.f32 %v1578, 1000000.0
      %v1587 = vmin.f32 %v1579, 1000000.0
      %1589 = vset.pattern.permute.xlu0 0
      %1590 = vperm.xlu0 %1589, %v1580
      %v1591 = vpop.permute.xlu0 %1590
      %1594 = vset.pattern.permute.xlu0 0
      %1595 = vperm.xlu0 %1594, %v1581
      %v1596 = vpop.permute.xlu0 %1595
      %1599 = vset.pattern.permute.xlu0 0
      %1600 = vperm.xlu0 %1599, %v1582
      %v1601 = vpop.permute.xlu0 %1600
      %1604 = vset.pattern.permute.xlu0 0
      %1605 = vperm.xlu0 %1604, %v1583
      %v1606 = vpop.permute.xlu0 %1605
      %1609 = vset.pattern.permute.xlu0 0
      %1610 = vperm.xlu0 %1609, %v1584
      %v1611 = vpop.permute.xlu0 %1610
      %1614 = vset.pattern.permute.xlu0 0
      %1615 = vperm.xlu0 %1614, %v1585
      %v1616 = vpop.permute.xlu0 %1615
      %1619 = vset.pattern.permute.xlu0 0
      %1620 = vperm.xlu0 %1619, %v1586
      %v1621 = vpop.permute.xlu0 %1620
      %1624 = vset.pattern.permute.xlu0 0
      %1625 = vperm.xlu0 %1624, %v1587
      %v1626 = vpop.permute.xlu0 %1625
      %v1628 = vadd.f32 %v425, %v1591
      %v1629 = vadd.f32 %v426, %v1596
      %v1630 = vadd.f32 %v427, %v1601
      %v1631 = vadd.f32 %v428, %v1606
      %v1632 = vadd.f32 %v429, %v1611
      %v1633 = vadd.f32 %v430, %v1616
      %v1634 = vadd.f32 %v431, %v1621
      %v1635 = vadd.f32 %v432, %v1626
      %v1636 = vsel %vm441, %v1628, -inf
      %v1637 = vsel %vm441, %v1629, -inf
      %v1638 = vsel %vm441, %v1630, -inf
      %v1639 = vsel %vm441, %v1631, -inf
      %v1640 = vsel %vm441, %v1632, -inf
      %v1641 = vmax.f32 %v1636, %v1640
      %v1642 = vsel %vm441, %v1633, -inf
      %v1643 = vmax.f32 %v1637, %v1642
      %v1644 = vsel %vm441, %v1634, -inf
      %v1645 = vmax.f32 %v1638, %v1644
      %v1646 = vsel %vm441, %v1635, -inf
      %v1647 = vmax.f32 %v1639, %v1646
      %v1648 = vmax.f32 %v1641, %v1643
      %v1649 = vmax.f32 %v1645, %v1647
      %v1650 = vmax.f32 %v1648, %v1649
      %v1651 = vrot.slane %v1650, 4
      %v1652 = vmax.f32 %v1650, %v1651
      %v1653 = vrot.slane %v1652, 2
      %v1654 = vmax.f32 %v1652, %v1653
      %v1655 = vrot.slane %v1654, 1
      %v1656 = vmax.f32 %v1654, %v1655
      %v1657 = vsub.f32 %v1628, %v1656
      %v1658 = vsub.f32 %v1629, %v1656
      %v1659 = vsub.f32 %v1630, %v1656
      %v1660 = vsub.f32 %v1631, %v1656
      %v1661 = vsub.f32 %v1632, %v1656
      %v1662 = vsub.f32 %v1633, %v1656
      %v1663 = vsub.f32 %v1634, %v1656
      %v1664 = vsub.f32 %v1635, %v1656
      %v1665 = vmul.f32 %v1657, 1.442695
      %v1666 = vpow.pop %v1665
      %v1667 = vmul.f32 %v1658, 1.442695
      %v1668 = vpow.pop %v1667
      %v1669 = vmul.f32 %v1659, 1.442695
      %v1670 = vpow.pop %v1669
      %v1671 = vmul.f32 %v1660, 1.442695
      %v1672 = vpow.pop %v1671
      %v1673 = vmul.f32 %v1661, 1.442695
      %v1674 = vpow.pop %v1673
      %v1675 = vmul.f32 %v1662, 1.442695
      %v1676 = vpow.pop %v1675
      %v1677 = vmul.f32 %v1663, 1.442695
      %v1678 = vpow.pop %v1677
      %v1679 = vmul.f32 %v1664, 1.442695
      %v1680 = vpow.pop %v1679
      %1681 = vmatprep.subr.mxu0 0.0
      %1682 = vmatpush1.msra.mxu0 0.0
      %1683 = vmatprep.subr.mxu0 0.0
      %1684 = vmatpush1.msra.mxu0 0.0
      %1685 = vmatprep.subr.mxu0 0.0
      %1686 = vmatpush1.msra.mxu0 0.0
      %1687 = vmatprep.subr.mxu0 0.0
      %1688 = vmatpush1.msra.mxu0 0.0
      %1689 = vmatprep.subr.mxu0 0.0
      %1690 = vmatpush1.msra.mxu0 0.0
      %1691 = vmatprep.subr.mxu0 0.0
      %1692 = vmatpush1.msra.mxu0 0.0
      %1693 = vmatprep.subr.mxu0 0.0
      %1694 = vmatpush1.msra.mxu0 0.0
      %1695 = vmatprep.subr.mxu0 0.0
      %1696 = vmatpush1.msra.mxu0 0.0
      %1697 = vmatprep.subr.mxu0 0.0
      %1698 = vmatpush1.msra.mxu0 %v1680
      %1699 = vmatprep.subr.mxu0 0.0
      %1700 = vmatpush1.msra.mxu0 %v1678
      %1701 = vmatprep.subr.mxu0 0.0
      %1702 = vmatpush1.msra.mxu0 %v1676
      %1703 = vmatprep.subr.mxu0 0.0
      %1704 = vmatpush1.msra.mxu0 %v1674
      %1705 = vmatprep.subr.mxu0 0.0
      %1706 = vmatpush1.msra.mxu0 %v1672
      %1707 = vmatprep.subr.mxu0 0.0
      %1708 = vmatpush1.msra.mxu0 %v1670
      %1709 = vmatprep.subr.mxu0 0.0
      %1710 = vmatpush1.msra.mxu0 %v1668
      %1711 = vmatprep.subr.mxu0 0.0
      %1712 = vmatpush1.msra.mxu0 %v1666
      %1713 = vmatprep.subr.mxu0 0.0
      %1714 = vmatpush2.msra.mxu0 0.0
      %1715 = vmatprep.subr.mxu0 0.0
      %1716 = vmatpush2.msra.mxu0 0.0
      %1717 = vmatprep.subr.mxu0 0.0
      %1718 = vmatpush2.msra.mxu0 0.0
      %1719 = vmatprep.subr.mxu0 0.0
      %1720 = vmatpush2.msra.mxu0 0.0
      %1721 = vmatprep.subr.mxu0 0.0
      %1722 = vmatpush2.msra.mxu0 0.0
      %1723 = vmatprep.subr.mxu0 0.0
      %1724 = vmatpush2.msra.mxu0 0.0
      %1725 = vmatprep.subr.mxu0 0.0
      %1726 = vmatpush2.msra.mxu0 0.0
      %1727 = vmatprep.subr.mxu0 0.0
      %1728 = vmatpush2.msra.mxu0 0.0
      %1729 = vmatprep.subr.mxu0 0.0
      %1730 = vmatpush2.msra.mxu0 0.0
      %1731 = vmatprep.subr.mxu0 0.0
      %1732 = vmatpush2.msra.mxu0 0.0
      %1733 = vmatprep.subr.mxu0 0.0
      %1734 = vmatpush2.msra.mxu0 0.0
      %1735 = vmatprep.subr.mxu0 0.0
      %1736 = vmatpush2.msra.mxu0 0.0
      %1737 = vmatprep.subr.mxu0 0.0
      %1738 = vmatpush2.msra.mxu0 0.0
      %1739 = vmatprep.subr.mxu0 0.0
      %1740 = vmatpush2.msra.mxu0 0.0
      %1741 = vmatprep.subr.mxu0 0.0
      %1742 = vmatpush2.msra.mxu0 0.0
      %1743 = vmatprep.subr.mxu0 0.0
      %1744 = vmatpush2.msra.mxu0 0.0
      %1745 = vmatprep.mubr.f32.mxu0 0.0
      %1746 = vmatmul.mubr.f32.gmra.mxu0 %v488
      %v1747 = vpop.f32.mrf.mxu0
      %v1748 = vadd.f32 0.0, %v1747
      %v1749 = vpop.f32.mrf.mxu0
      %1750 = vdwg.mxu0
      %v1751 = vlog2.pop %v1748
      %v1752 = vmul.f32 %v1751, 0.6931472
      %v1753 = vadd.f32 %v1656, %v1752
      %v1754 = vsub.f32 0.0, %v1753
      %v1755 = vmin.f32 %v1754, 1000000.0
      %v1756 = vlaneseq
      %v1757 = vshrl.u32 %v1756, 7
      %v1758 = vsub.s32 0, %v1757
      %v1759 = vrot.slane %v1755, %v1758
      %v1760 = vadd.f32 %v425, %v1759
      %v1761 = vadd.f32 %v426, %v1759
      %v1762 = vadd.f32 %v427, %v1759
      %v1763 = vadd.f32 %v428, %v1759
      %v1764 = vadd.f32 %v429, %v1759
      %v1765 = vadd.f32 %v430, %v1759
      %v1766 = vadd.f32 %v431, %v1759
      %v1767 = vadd.f32 %v432, %v1759
      %v1768 = vsel %vm441, %v1760, -inf
      %1769 = vmax.xlane.f32.xlu0 %v1768
      %v1770 = vpop.xlane.xlu0 %1769
      %v1771 = vsel %vm441, %v1761, -inf
      %1772 = vmax.xlane.f32.xlu0 %v1771
      %v1773 = vpop.xlane.xlu0 %1772
      %v1774 = vsel %vm441, %v1762, -inf
      %1775 = vmax.xlane.f32.xlu0 %v1774
      %v1776 = vpop.xlane.xlu0 %1775
      %v1777 = vsel %vm441, %v1763, -inf
      %1778 = vmax.xlane.f32.xlu0 %v1777
      %v1779 = vpop.xlane.xlu0 %1778
      %v1780 = vsel %vm441, %v1764, -inf
      %1781 = vmax.xlane.f32.xlu0 %v1780
      %v1782 = vpop.xlane.xlu0 %1781
      %v1783 = vsel %vm441, %v1765, -inf
      %1784 = vmax.xlane.f32.xlu0 %v1783
      %v1785 = vpop.xlane.xlu0 %1784
      %v1786 = vsel %vm441, %v1766, -inf
      %1787 = vmax.xlane.f32.xlu0 %v1786
      %v1788 = vpop.xlane.xlu0 %1787
      %v1789 = vsel %vm441, %v1767, -inf
      %1790 = vmax.xlane.f32.xlu0 %v1789
      %v1791 = vpop.xlane.xlu0 %1790
      %v1792 = vsub.f32 %v1760, %v1770
      %v1793 = vsub.f32 %v1761, %v1773
      %v1794 = vsub.f32 %v1762, %v1776
      %v1795 = vsub.f32 %v1763, %v1779
      %v1796 = vsub.f32 %v1764, %v1782
      %v1797 = vsub.f32 %v1765, %v1785
      %v1798 = vsub.f32 %v1766, %v1788
      %v1799 = vsub.f32 %v1767, %v1791
      %v1800 = vmul.f32 %v1792, 1.442695
      %v1801 = vpow.pop %v1800
      %v1802 = vmul.f32 %v1793, 1.442695
      %v1803 = vpow.pop %v1802
      %v1804 = vmul.f32 %v1794, 1.442695
      %v1805 = vpow.pop %v1804
      %v1806 = vmul.f32 %v1795, 1.442695
      %v1807 = vpow.pop %v1806
      %v1808 = vmul.f32 %v1796, 1.442695
      %v1809 = vpow.pop %v1808
      %v1810 = vmul.f32 %v1797, 1.442695
      %v1811 = vpow.pop %v1810
      %v1812 = vmul.f32 %v1798, 1.442695
      %v1813 = vpow.pop %v1812
      %v1814 = vmul.f32 %v1799, 1.442695
      %v1815 = vpow.pop %v1814
      %v1817 = vsel %vm441, %v1801, 0
      %v1820 = vsel %vm441, %v1803, 0
      %v1823 = vsel %vm441, %v1805, 0
      %v1826 = vsel %vm441, %v1807, 0
      %v1829 = vsel %vm441, %v1809, 0
      %v1832 = vsel %vm441, %v1811, 0
      %v1835 = vsel %vm441, %v1813, 0
      %v1838 = vsel %vm441, %v1815, 0
      %1840 = vmatprep.subr.mxu0 0.0
      %1841 = vmatpush1.msra.mxu0 0.0
      %1842 = vmatprep.subr.mxu0 0.0
      %1843 = vmatpush1.msra.mxu0 0.0
      %1844 = vmatprep.subr.mxu0 0.0
      %1845 = vmatpush1.msra.mxu0 0.0
      %1846 = vmatprep.subr.mxu0 0.0
      %1847 = vmatpush1.msra.mxu0 0.0
      %1848 = vmatprep.subr.mxu0 0.0
      %1849 = vmatpush1.msra.mxu0 0.0
      %1850 = vmatprep.subr.mxu0 0.0
      %1851 = vmatpush1.msra.mxu0 0.0
      %1852 = vmatprep.subr.mxu0 0.0
      %1853 = vmatpush1.msra.mxu0 0.0
      %1854 = vmatprep.subr.mxu0 0.0
      %1855 = vmatpush1.msra.mxu0 0.0
      %1856 = vmatprep.subr.mxu0 0.0
      %1857 = vmatpush1.msra.mxu0 1.0
      %1858 = vmatprep.subr.mxu0 0.0
      %1859 = vmatpush1.msra.mxu0 1.0
      %1860 = vmatprep.subr.mxu0 0.0
      %1861 = vmatpush1.msra.mxu0 1.0
      %1862 = vmatprep.subr.mxu0 0.0
      %1863 = vmatpush1.msra.mxu0 1.0
      %1864 = vmatprep.subr.mxu0 0.0
      %1865 = vmatpush1.msra.mxu0 1.0
      %1866 = vmatprep.subr.mxu0 0.0
      %1867 = vmatpush1.msra.mxu0 1.0
      %1868 = vmatprep.subr.mxu0 0.0
      %1869 = vmatpush1.msra.mxu0 1.0
      %1870 = vmatprep.subr.mxu0 0.0
      %1871 = vmatpush1.msra.mxu0 1.0
      %1872 = vmatprep.subr.mxu0 0.0
      %1873 = vmatpush2.msra.mxu0 0.0
      %1874 = vmatprep.subr.mxu0 0.0
      %1875 = vmatpush2.msra.mxu0 0.0
      %1876 = vmatprep.subr.mxu0 0.0
      %1877 = vmatpush2.msra.mxu0 0.0
      %1878 = vmatprep.subr.mxu0 0.0
      %1879 = vmatpush2.msra.mxu0 0.0
      %1880 = vmatprep.subr.mxu0 0.0
      %1881 = vmatpush2.msra.mxu0 0.0
      %1882 = vmatprep.subr.mxu0 0.0
      %1883 = vmatpush2.msra.mxu0 0.0
      %1884 = vmatprep.subr.mxu0 0.0
      %1885 = vmatpush2.msra.mxu0 0.0
      %1886 = vmatprep.subr.mxu0 0.0
      %1887 = vmatpush2.msra.mxu0 0.0
      %1888 = vmatprep.subr.mxu0 0.0
      %1889 = vmatpush2.msra.mxu0 0.0
      %1890 = vmatprep.subr.mxu0 0.0
      %1891 = vmatpush2.msra.mxu0 0.0
      %1892 = vmatprep.subr.mxu0 0.0
      %1893 = vmatpush2.msra.mxu0 0.0
      %1894 = vmatprep.subr.mxu0 0.0
      %1895 = vmatpush2.msra.mxu0 0.0
      %1896 = vmatprep.subr.mxu0 0.0
      %1897 = vmatpush2.msra.mxu0 0.0
      %1898 = vmatprep.subr.mxu0 0.0
      %1899 = vmatpush2.msra.mxu0 0.0
      %1900 = vmatprep.subr.mxu0 0.0
      %1901 = vmatpush2.msra.mxu0 0.0
      %1902 = vmatprep.subr.mxu0 0.0
      %1903 = vmatpush2.msra.mxu0 0.0
      %1904 = vmatprep.mubr.f32.mxu0 0.0
      %1905 = vmatmul.mubr.f32.gmra.mxu0 %v1817
      %v1906 = vpop.f32.mrf.mxu0
      %v1907 = vadd.f32 0.0, %v1906
      %v1908 = vpop.f32.mrf.mxu0
      %1909 = vmatprep.mubr.f32.mxu0 0.0
      %1910 = vmatmul.mubr.f32.gmra.mxu0 %v1820
      %v1911 = vpop.f32.mrf.mxu0
      %v1912 = vadd.f32 0.0, %v1911
      %v1913 = vpop.f32.mrf.mxu0
      %1914 = vmatprep.mubr.f32.mxu0 0.0
      %1915 = vmatmul.mubr.f32.gmra.mxu0 %v1823
      %v1916 = vpop.f32.mrf.mxu0
      %v1917 = vadd.f32 0.0, %v1916
      %v1918 = vpop.f32.mrf.mxu0
      %1919 = vmatprep.mubr.f32.mxu0 0.0
      %1920 = vmatmul.mubr.f32.gmra.mxu0 %v1826
      %v1921 = vpop.f32.mrf.mxu0
      %v1922 = vadd.f32 0.0, %v1921
      %v1923 = vpop.f32.mrf.mxu0
      %1924 = vmatprep.mubr.f32.mxu0 0.0
      %1925 = vmatmul.mubr.f32.gmra.mxu0 %v1829
      %v1926 = vpop.f32.mrf.mxu0
      %v1927 = vadd.f32 0.0, %v1926
      %v1928 = vpop.f32.mrf.mxu0
      %1929 = vmatprep.mubr.f32.mxu0 0.0
      %1930 = vmatmul.mubr.f32.gmra.mxu0 %v1832
      %v1931 = vpop.f32.mrf.mxu0
      %v1932 = vadd.f32 0.0, %v1931
      %v1933 = vpop.f32.mrf.mxu0
      %1934 = vmatprep.mubr.f32.mxu0 0.0
      %1935 = vmatmul.mubr.f32.gmra.mxu0 %v1835
      %v1936 = vpop.f32.mrf.mxu0
      %v1937 = vadd.f32 0.0, %v1936
      %v1938 = vpop.f32.mrf.mxu0
      %1939 = vmatprep.mubr.f32.mxu0 0.0
      %1940 = vmatmul.mubr.f32.gmra.mxu0 %v1838
      %v1941 = vpop.f32.mrf.mxu0
      %v1942 = vadd.f32 0.0, %v1941
      %v1943 = vpop.f32.mrf.mxu0
      %1944 = vdwg.mxu0
      %v1945 = vlog2.pop %v1907
      %v1946 = vmul.f32 %v1945, 0.6931472
      %v1947 = vlog2.pop %v1912
      %v1948 = vmul.f32 %v1947, 0.6931472
      %v1949 = vlog2.pop %v1917
      %v1950 = vmul.f32 %v1949, 0.6931472
      %v1951 = vlog2.pop %v1922
      %v1952 = vmul.f32 %v1951, 0.6931472
      %v1953 = vlog2.pop %v1927
      %v1954 = vmul.f32 %v1953, 0.6931472
      %v1955 = vlog2.pop %v1932
      %v1956 = vmul.f32 %v1955, 0.6931472
      %v1957 = vlog2.pop %v1937
      %v1958 = vmul.f32 %v1957, 0.6931472
      %v1959 = vlog2.pop %v1942
      %v1960 = vmul.f32 %v1959, 0.6931472
      %v1961 = vadd.f32 %v1770, %v1946
      %v1962 = vadd.f32 %v1773, %v1948
      %v1963 = vadd.f32 %v1776, %v1950
      %v1964 = vadd.f32 %v1779, %v1952
      %v1965 = vadd.f32 %v1782, %v1954
      %v1966 = vadd.f32 %v1785, %v1956
      %v1967 = vadd.f32 %v1788, %v1958
      %v1968 = vadd.f32 %v1791, %v1960
      %v1969 = vsub.f32 0.0, %v1961
      %v1970 = vsub.f32 0.0, %v1962
      %v1971 = vsub.f32 0.0, %v1963
      %v1972 = vsub.f32 0.0, %v1964
      %v1973 = vsub.f32 0.0, %v1965
      %v1974 = vsub.f32 0.0, %v1966
      %v1975 = vsub.f32 0.0, %v1967
      %v1976 = vsub.f32 0.0, %v1968
      %v1977 = vmin.f32 %v1969, 1000000.0
      %v1978 = vmin.f32 %v1970, 1000000.0
      %v1979 = vmin.f32 %v1971, 1000000.0
      %v1980 = vmin.f32 %v1972, 1000000.0
      %v1981 = vmin.f32 %v1973, 1000000.0
      %v1982 = vmin.f32 %v1974, 1000000.0
      %v1983 = vmin.f32 %v1975, 1000000.0
      %v1984 = vmin.f32 %v1976, 1000000.0
      %1986 = vset.pattern.permute.xlu0 0
      %1987 = vperm.xlu0 %1986, %v1977
      %v1988 = vpop.permute.xlu0 %1987
      %1991 = vset.pattern.permute.xlu0 0
      %1992 = vperm.xlu0 %1991, %v1978
      %v1993 = vpop.permute.xlu0 %1992
      %1996 = vset.pattern.permute.xlu0 0
      %1997 = vperm.xlu0 %1996, %v1979
      %v1998 = vpop.permute.xlu0 %1997
      %2001 = vset.pattern.permute.xlu0 0
      %2002 = vperm.xlu0 %2001, %v1980
      %v2003 = vpop.permute.xlu0 %2002
      %2006 = vset.pattern.permute.xlu0 0
      %2007 = vperm.xlu0 %2006, %v1981
      %v2008 = vpop.permute.xlu0 %2007
      %2011 = vset.pattern.permute.xlu0 0
      %2012 = vperm.xlu0 %2011, %v1982
      %v2013 = vpop.permute.xlu0 %2012
      %2016 = vset.pattern.permute.xlu0 0
      %2017 = vperm.xlu0 %2016, %v1983
      %v2018 = vpop.permute.xlu0 %2017
      %2021 = vset.pattern.permute.xlu0 0
      %2022 = vperm.xlu0 %2021, %v1984
      %v2023 = vpop.permute.xlu0 %2022
      %v2025 = vadd.f32 %v425, %v1988
      %v2026 = vadd.f32 %v426, %v1993
      %v2027 = vadd.f32 %v427, %v1998
      %v2028 = vadd.f32 %v428, %v2003
      %v2029 = vadd.f32 %v429, %v2008
      %v2030 = vadd.f32 %v430, %v2013
      %v2031 = vadd.f32 %v431, %v2018
      %v2032 = vadd.f32 %v432, %v2023
      %v2033 = vsel %vm441, %v2025, -inf
      %v2034 = vsel %vm441, %v2026, -inf
      %v2035 = vsel %vm441, %v2027, -inf
      %v2036 = vsel %vm441, %v2028, -inf
      %v2037 = vsel %vm441, %v2029, -inf
      %v2038 = vmax.f32 %v2033, %v2037
      %v2039 = vsel %vm441, %v2030, -inf
      %v2040 = vmax.f32 %v2034, %v2039
      %v2041 = vsel %vm441, %v2031, -inf
      %v2042 = vmax.f32 %v2035, %v2041
      %v2043 = vsel %vm441, %v2032, -inf
      %v2044 = vmax.f32 %v2036, %v2043
      %v2045 = vmax.f32 %v2038, %v2040
      %v2046 = vmax.f32 %v2042, %v2044
      %v2047 = vmax.f32 %v2045, %v2046
      %v2048 = vrot.slane %v2047, 4
      %v2049 = vmax.f32 %v2047, %v2048
      %v2050 = vrot.slane %v2049, 2
      %v2051 = vmax.f32 %v2049, %v2050
      %v2052 = vrot.slane %v2051, 1
      %v2053 = vmax.f32 %v2051, %v2052
      %v2054 = vsub.f32 %v2025, %v2053
      %v2055 = vsub.f32 %v2026, %v2053
      %v2056 = vsub.f32 %v2027, %v2053
      %v2057 = vsub.f32 %v2028, %v2053
      %v2058 = vsub.f32 %v2029, %v2053
      %v2059 = vsub.f32 %v2030, %v2053
      %v2060 = vsub.f32 %v2031, %v2053
      %v2061 = vsub.f32 %v2032, %v2053
      %v2062 = vmul.f32 %v2054, 1.442695
      %v2063 = vpow.pop %v2062
      %v2064 = vmul.f32 %v2055, 1.442695
      %v2065 = vpow.pop %v2064
      %v2066 = vmul.f32 %v2056, 1.442695
      %v2067 = vpow.pop %v2066
      %v2068 = vmul.f32 %v2057, 1.442695
      %v2069 = vpow.pop %v2068
      %v2070 = vmul.f32 %v2058, 1.442695
      %v2071 = vpow.pop %v2070
      %v2072 = vmul.f32 %v2059, 1.442695
      %v2073 = vpow.pop %v2072
      %v2074 = vmul.f32 %v2060, 1.442695
      %v2075 = vpow.pop %v2074
      %v2076 = vmul.f32 %v2061, 1.442695
      %v2077 = vpow.pop %v2076
      %2078 = vmatprep.subr.mxu0 0.0
      %2079 = vmatpush1.msra.mxu0 0.0
      %2080 = vmatprep.subr.mxu0 0.0
      %2081 = vmatpush1.msra.mxu0 0.0
      %2082 = vmatprep.subr.mxu0 0.0
      %2083 = vmatpush1.msra.mxu0 0.0
      %2084 = vmatprep.subr.mxu0 0.0
      %2085 = vmatpush1.msra.mxu0 0.0
      %2086 = vmatprep.subr.mxu0 0.0
      %2087 = vmatpush1.msra.mxu0 0.0
      %2088 = vmatprep.subr.mxu0 0.0
      %2089 = vmatpush1.msra.mxu0 0.0
      %2090 = vmatprep.subr.mxu0 0.0
      %2091 = vmatpush1.msra.mxu0 0.0
      %2092 = vmatprep.subr.mxu0 0.0
      %2093 = vmatpush1.msra.mxu0 0.0
      %2094 = vmatprep.subr.mxu0 0.0
      %2095 = vmatpush1.msra.mxu0 %v2077
      %2096 = vmatprep.subr.mxu0 0.0
      %2097 = vmatpush1.msra.mxu0 %v2075
      %2098 = vmatprep.subr.mxu0 0.0
      %2099 = vmatpush1.msra.mxu0 %v2073
      %2100 = vmatprep.subr.mxu0 0.0
      %2101 = vmatpush1.msra.mxu0 %v2071
      %2102 = vmatprep.subr.mxu0 0.0
      %2103 = vmatpush1.msra.mxu0 %v2069
      %2104 = vmatprep.subr.mxu0 0.0
      %2105 = vmatpush1.msra.mxu0 %v2067
      %2106 = vmatprep.subr.mxu0 0.0
      %2107 = vmatpush1.msra.mxu0 %v2065
      %2108 = vmatprep.subr.mxu0 0.0
      %2109 = vmatpush1.msra.mxu0 %v2063
      %2110 = vmatprep.subr.mxu0 0.0
      %2111 = vmatpush2.msra.mxu0 0.0
      %2112 = vmatprep.subr.mxu0 0.0
      %2113 = vmatpush2.msra.mxu0 0.0
      %2114 = vmatprep.subr.mxu0 0.0
      %2115 = vmatpush2.msra.mxu0 0.0
      %2116 = vmatprep.subr.mxu0 0.0
      %2117 = vmatpush2.msra.mxu0 0.0
      %2118 = vmatprep.subr.mxu0 0.0
      %2119 = vmatpush2.msra.mxu0 0.0
      %2120 = vmatprep.subr.mxu0 0.0
      %2121 = vmatpush2.msra.mxu0 0.0
      %2122 = vmatprep.subr.mxu0 0.0
      %2123 = vmatpush2.msra.mxu0 0.0
      %2124 = vmatprep.subr.mxu0 0.0
      %2125 = vmatpush2.msra.mxu0 0.0
      %2126 = vmatprep.subr.mxu0 0.0
      %2127 = vmatpush2.msra.mxu0 0.0
      %2128 = vmatprep.subr.mxu0 0.0
      %2129 = vmatpush2.msra.mxu0 0.0
      %2130 = vmatprep.subr.mxu0 0.0
      %2131 = vmatpush2.msra.mxu0 0.0
      %2132 = vmatprep.subr.mxu0 0.0
      %2133 = vmatpush2.msra.mxu0 0.0
      %2134 = vmatprep.subr.mxu0 0.0
      %2135 = vmatpush2.msra.mxu0 0.0
      %2136 = vmatprep.subr.mxu0 0.0
      %2137 = vmatpush2.msra.mxu0 0.0
      %2138 = vmatprep.subr.mxu0 0.0
      %2139 = vmatpush2.msra.mxu0 0.0
      %2140 = vmatprep.subr.mxu0 0.0
      %2141 = vmatpush2.msra.mxu0 0.0
      %2142 = vmatprep.mubr.f32.mxu0 0.0
      %2143 = vmatmul.mubr.f32.gmra.mxu0 %v488
      %v2144 = vpop.f32.mrf.mxu0
      %v2145 = vadd.f32 0.0, %v2144
      %v2146 = vpop.f32.mrf.mxu0
      %2147 = vdwg.mxu0
      %v2148 = vlog2.pop %v2145
      %v2149 = vmul.f32 %v2148, 0.6931472
      %v2150 = vadd.f32 %v2053, %v2149
      %v2151 = vsub.f32 0.0, %v2150
      %v2152 = vmin.f32 %v2151, 1000000.0
      %v2153 = vlaneseq
      %v2154 = vshrl.u32 %v2153, 7
      %v2155 = vsub.s32 0, %v2154
      %v2156 = vrot.slane %v2152, %v2155
      %v2157 = vadd.f32 %v425, %v2156
      %v2158 = vadd.f32 %v426, %v2156
      %v2159 = vadd.f32 %v427, %v2156
      %v2160 = vadd.f32 %v428, %v2156
      %v2161 = vadd.f32 %v429, %v2156
      %v2162 = vadd.f32 %v430, %v2156
      %v2163 = vadd.f32 %v431, %v2156
      %v2164 = vadd.f32 %v432, %v2156
      %v2165 = vsel %vm441, %v2157, -inf
      %2166 = vmax.xlane.f32.xlu0 %v2165
      %v2167 = vpop.xlane.xlu0 %2166
      %v2168 = vsel %vm441, %v2158, -inf
      %2169 = vmax.xlane.f32.xlu0 %v2168
      %v2170 = vpop.xlane.xlu0 %2169
      %v2171 = vsel %vm441, %v2159, -inf
      %2172 = vmax.xlane.f32.xlu0 %v2171
      %v2173 = vpop.xlane.xlu0 %2172
      %v2174 = vsel %vm441, %v2160, -inf
      %2175 = vmax.xlane.f32.xlu0 %v2174
      %v2176 = vpop.xlane.xlu0 %2175
      %v2177 = vsel %vm441, %v2161, -inf
      %2178 = vmax.xlane.f32.xlu0 %v2177
      %v2179 = vpop.xlane.xlu0 %2178
      %v2180 = vsel %vm441, %v2162, -inf
      %2181 = vmax.xlane.f32.xlu0 %v2180
      %v2182 = vpop.xlane.xlu0 %2181
      %v2183 = vsel %vm441, %v2163, -inf
      %2184 = vmax.xlane.f32.xlu0 %v2183
      %v2185 = vpop.xlane.xlu0 %2184
      %v2186 = vsel %vm441, %v2164, -inf
      %2187 = vmax.xlane.f32.xlu0 %v2186
      %v2188 = vpop.xlane.xlu0 %2187
      %v2189 = vsub.f32 %v2157, %v2167
      %v2190 = vsub.f32 %v2158, %v2170
      %v2191 = vsub.f32 %v2159, %v2173
      %v2192 = vsub.f32 %v2160, %v2176
      %v2193 = vsub.f32 %v2161, %v2179
      %v2194 = vsub.f32 %v2162, %v2182
      %v2195 = vsub.f32 %v2163, %v2185
      %v2196 = vsub.f32 %v2164, %v2188
      %v2197 = vmul.f32 %v2189, 1.442695
      %v2198 = vpow.pop %v2197
      %v2199 = vmul.f32 %v2190, 1.442695
      %v2200 = vpow.pop %v2199
      %v2201 = vmul.f32 %v2191, 1.442695
      %v2202 = vpow.pop %v2201
      %v2203 = vmul.f32 %v2192, 1.442695
      %v2204 = vpow.pop %v2203
      %v2205 = vmul.f32 %v2193, 1.442695
      %v2206 = vpow.pop %v2205
      %v2207 = vmul.f32 %v2194, 1.442695
      %v2208 = vpow.pop %v2207
      %v2209 = vmul.f32 %v2195, 1.442695
      %v2210 = vpow.pop %v2209
      %v2211 = vmul.f32 %v2196, 1.442695
      %v2212 = vpow.pop %v2211
      %v2214 = vsel %vm441, %v2198, 0
      %v2217 = vsel %vm441, %v2200, 0
      %v2220 = vsel %vm441, %v2202, 0
      %v2223 = vsel %vm441, %v2204, 0
      %v2226 = vsel %vm441, %v2206, 0
      %v2229 = vsel %vm441, %v2208, 0
      %v2232 = vsel %vm441, %v2210, 0
      %v2235 = vsel %vm441, %v2212, 0
      %2237 = vmatprep.subr.mxu0 0.0
      %2238 = vmatpush1.msra.mxu0 0.0
      %2239 = vmatprep.subr.mxu0 0.0
      %2240 = vmatpush1.msra.mxu0 0.0
      %2241 = vmatprep.subr.mxu0 0.0
      %2242 = vmatpush1.msra.mxu0 0.0
      %2243 = vmatprep.subr.mxu0 0.0
      %2244 = vmatpush1.msra.mxu0 0.0
      %2245 = vmatprep.subr.mxu0 0.0
      %2246 = vmatpush1.msra.mxu0 0.0
      %2247 = vmatprep.subr.mxu0 0.0
      %2248 = vmatpush1.msra.mxu0 0.0
      %2249 = vmatprep.subr.mxu0 0.0
      %2250 = vmatpush1.msra.mxu0 0.0
      %2251 = vmatprep.subr.mxu0 0.0
      %2252 = vmatpush1.msra.mxu0 0.0
      %2253 = vmatprep.subr.mxu0 0.0
      %2254 = vmatpush1.msra.mxu0 1.0
      %2255 = vmatprep.subr.mxu0 0.0
      %2256 = vmatpush1.msra.mxu0 1.0
      %2257 = vmatprep.subr.mxu0 0.0
      %2258 = vmatpush1.msra.mxu0 1.0
      %2259 = vmatprep.subr.mxu0 0.0
      %2260 = vmatpush1.msra.mxu0 1.0
      %2261 = vmatprep.subr.mxu0 0.0
      %2262 = vmatpush1.msra.mxu0 1.0
      %2263 = vmatprep.subr.mxu0 0.0
      %2264 = vmatpush1.msra.mxu0 1.0
      %2265 = vmatprep.subr.mxu0 0.0
      %2266 = vmatpush1.msra.mxu0 1.0
      %2267 = vmatprep.subr.mxu0 0.0
      %2268 = vmatpush1.msra.mxu0 1.0
      %2269 = vmatprep.subr.mxu0 0.0
      %2270 = vmatpush2.msra.mxu0 0.0
      %2271 = vmatprep.subr.mxu0 0.0
      %2272 = vmatpush2.msra.mxu0 0.0
      %2273 = vmatprep.subr.mxu0 0.0
      %2274 = vmatpush2.msra.mxu0 0.0
      %2275 = vmatprep.subr.mxu0 0.0
      %2276 = vmatpush2.msra.mxu0 0.0
      %2277 = vmatprep.subr.mxu0 0.0
      %2278 = vmatpush2.msra.mxu0 0.0
      %2279 = vmatprep.subr.mxu0 0.0
      %2280 = vmatpush2.msra.mxu0 0.0
      %2281 = vmatprep.subr.mxu0 0.0
      %2282 = vmatpush2.msra.mxu0 0.0
      %2283 = vmatprep.subr.mxu0 0.0
      %2284 = vmatpush2.msra.mxu0 0.0
      %2285 = vmatprep.subr.mxu0 0.0
      %2286 = vmatpush2.msra.mxu0 0.0
      %2287 = vmatprep.subr.mxu0 0.0
      %2288 = vmatpush2.msra.mxu0 0.0
      %2289 = vmatprep.subr.mxu0 0.0
      %2290 = vmatpush2.msra.mxu0 0.0
      %2291 = vmatprep.subr.mxu0 0.0
      %2292 = vmatpush2.msra.mxu0 0.0
      %2293 = vmatprep.subr.mxu0 0.0
      %2294 = vmatpush2.msra.mxu0 0.0
      %2295 = vmatprep.subr.mxu0 0.0
      %2296 = vmatpush2.msra.mxu0 0.0
      %2297 = vmatprep.subr.mxu0 0.0
      %2298 = vmatpush2.msra.mxu0 0.0
      %2299 = vmatprep.subr.mxu0 0.0
      %2300 = vmatpush2.msra.mxu0 0.0
      %2301 = vmatprep.mubr.f32.mxu0 0.0
      %2302 = vmatmul.mubr.f32.gmra.mxu0 %v2214
      %v2303 = vpop.f32.mrf.mxu0
      %v2304 = vadd.f32 0.0, %v2303
      %v2305 = vpop.f32.mrf.mxu0
      %2306 = vmatprep.mubr.f32.mxu0 0.0
      %2307 = vmatmul.mubr.f32.gmra.mxu0 %v2217
      %v2308 = vpop.f32.mrf.mxu0
      %v2309 = vadd.f32 0.0, %v2308
      %v2310 = vpop.f32.mrf.mxu0
      %2311 = vmatprep.mubr.f32.mxu0 0.0
      %2312 = vmatmul.mubr.f32.gmra.mxu0 %v2220
      %v2313 = vpop.f32.mrf.mxu0
      %v2314 = vadd.f32 0.0, %v2313
      %v2315 = vpop.f32.mrf.mxu0
      %2316 = vmatprep.mubr.f32.mxu0 0.0
      %2317 = vmatmul.mubr.f32.gmra.mxu0 %v2223
      %v2318 = vpop.f32.mrf.mxu0
      %v2319 = vadd.f32 0.0, %v2318
      %v2320 = vpop.f32.mrf.mxu0
      %2321 = vmatprep.mubr.f32.mxu0 0.0
      %2322 = vmatmul.mubr.f32.gmra.mxu0 %v2226
      %v2323 = vpop.f32.mrf.mxu0
      %v2324 = vadd.f32 0.0, %v2323
      %v2325 = vpop.f32.mrf.mxu0
      %2326 = vmatprep.mubr.f32.mxu0 0.0
      %2327 = vmatmul.mubr.f32.gmra.mxu0 %v2229
      %v2328 = vpop.f32.mrf.mxu0
      %v2329 = vadd.f32 0.0, %v2328
      %v2330 = vpop.f32.mrf.mxu0
      %2331 = vmatprep.mubr.f32.mxu0 0.0
      %2332 = vmatmul.mubr.f32.gmra.mxu0 %v2232
      %v2333 = vpop.f32.mrf.mxu0
      %v2334 = vadd.f32 0.0, %v2333
      %v2335 = vpop.f32.mrf.mxu0
      %2336 = vmatprep.mubr.f32.mxu0 0.0
      %2337 = vmatmul.mubr.f32.gmra.mxu0 %v2235
      %v2338 = vpop.f32.mrf.mxu0
      %v2339 = vadd.f32 0.0, %v2338
      %v2340 = vpop.f32.mrf.mxu0
      %2341 = vdwg.mxu0
      %v2342 = vlog2.pop %v2304
      %v2343 = vmul.f32 %v2342, 0.6931472
      %v2344 = vlog2.pop %v2309
      %v2345 = vmul.f32 %v2344, 0.6931472
      %v2346 = vlog2.pop %v2314
      %v2347 = vmul.f32 %v2346, 0.6931472
      %v2348 = vlog2.pop %v2319
      %v2349 = vmul.f32 %v2348, 0.6931472
      %v2350 = vlog2.pop %v2324
      %v2351 = vmul.f32 %v2350, 0.6931472
      %v2352 = vlog2.pop %v2329
      %v2353 = vmul.f32 %v2352, 0.6931472
      %v2354 = vlog2.pop %v2334
      %v2355 = vmul.f32 %v2354, 0.6931472
      %v2356 = vlog2.pop %v2339
      %v2357 = vmul.f32 %v2356, 0.6931472
      %v2358 = vadd.f32 %v2167, %v2343
      %v2359 = vadd.f32 %v2170, %v2345
      %v2360 = vadd.f32 %v2173, %v2347
      %v2361 = vadd.f32 %v2176, %v2349
      %v2362 = vadd.f32 %v2179, %v2351
      %v2363 = vadd.f32 %v2182, %v2353
      %v2364 = vadd.f32 %v2185, %v2355
      %v2365 = vadd.f32 %v2188, %v2357
      %v2366 = vsub.f32 0.0, %v2358
      %v2367 = vsub.f32 0.0, %v2359
      %v2368 = vsub.f32 0.0, %v2360
      %v2369 = vsub.f32 0.0, %v2361
      %v2370 = vsub.f32 0.0, %v2362
      %v2371 = vsub.f32 0.0, %v2363
      %v2372 = vsub.f32 0.0, %v2364
      %v2373 = vsub.f32 0.0, %v2365
      %v2374 = vmin.f32 %v2366, 1000000.0
      %v2375 = vmin.f32 %v2367, 1000000.0
      %v2376 = vmin.f32 %v2368, 1000000.0
      %v2377 = vmin.f32 %v2369, 1000000.0
      %v2378 = vmin.f32 %v2370, 1000000.0
      %v2379 = vmin.f32 %v2371, 1000000.0
      %v2380 = vmin.f32 %v2372, 1000000.0
      %v2381 = vmin.f32 %v2373, 1000000.0
      %2383 = vset.pattern.permute.xlu0 0
      %2384 = vperm.xlu0 %2383, %v2374
      %v2385 = vpop.permute.xlu0 %2384
      %2388 = vset.pattern.permute.xlu0 0
      %2389 = vperm.xlu0 %2388, %v2375
      %v2390 = vpop.permute.xlu0 %2389
      %2393 = vset.pattern.permute.xlu0 0
      %2394 = vperm.xlu0 %2393, %v2376
      %v2395 = vpop.permute.xlu0 %2394
      %2398 = vset.pattern.permute.xlu0 0
      %2399 = vperm.xlu0 %2398, %v2377
      %v2400 = vpop.permute.xlu0 %2399
      %2403 = vset.pattern.permute.xlu0 0
      %2404 = vperm.xlu0 %2403, %v2378
      %v2405 = vpop.permute.xlu0 %2404
      %2408 = vset.pattern.permute.xlu0 0
      %2409 = vperm.xlu0 %2408, %v2379
      %v2410 = vpop.permute.xlu0 %2409
      %2413 = vset.pattern.permute.xlu0 0
      %2414 = vperm.xlu0 %2413, %v2380
      %v2415 = vpop.permute.xlu0 %2414
      %2418 = vset.pattern.permute.xlu0 0
      %2419 = vperm.xlu0 %2418, %v2381
      %v2420 = vpop.permute.xlu0 %2419
      %v2422 = vadd.f32 %v2157, %v2385
      %v2423 = vadd.f32 %v2158, %v2390
      %v2424 = vadd.f32 %v2159, %v2395
      %v2425 = vadd.f32 %v2160, %v2400
      %v2426 = vadd.f32 %v2161, %v2405
      %v2427 = vadd.f32 %v2162, %v2410
      %v2428 = vadd.f32 %v2163, %v2415
      %v2429 = vadd.f32 %v2164, %v2420
      %v2430 = vmul.f32 %v2422, 1.442695
      %v2431 = vpow.pop %v2430
      %v2432 = vmul.f32 %v2423, 1.442695
      %v2433 = vpow.pop %v2432
      %v2434 = vmul.f32 %v2424, 1.442695
      %v2435 = vpow.pop %v2434
      %v2436 = vmul.f32 %v2425, 1.442695
      %v2437 = vpow.pop %v2436
      %v2438 = vmul.f32 %v2426, 1.442695
      %v2439 = vpow.pop %v2438
      %v2440 = vmul.f32 %v2427, 1.442695
      %v2441 = vpow.pop %v2440
      %v2442 = vmul.f32 %v2428, 1.442695
      %v2443 = vpow.pop %v2442
      %v2444 = vmul.f32 %v2429, 1.442695
      %v2445 = vpow.pop %v2444
      %v2447 = vsel %vm441, %v270, 0
      %2449 = vmatprep.subr.mxu0 0.0
      %2450 = vmatpush1.msra.mxu0 0.0
      %2451 = vmatprep.subr.mxu0 0.0
      %2452 = vmatpush1.msra.mxu0 0.0
      %2453 = vmatprep.subr.mxu0 0.0
      %2454 = vmatpush1.msra.mxu0 0.0
      %2455 = vmatprep.subr.mxu0 0.0
      %2456 = vmatpush1.msra.mxu0 0.0
      %2457 = vmatprep.subr.mxu0 0.0
      %2458 = vmatpush1.msra.mxu0 0.0
      %2459 = vmatprep.subr.mxu0 0.0
      %2460 = vmatpush1.msra.mxu0 0.0
      %2461 = vmatprep.subr.mxu0 0.0
      %2462 = vmatpush1.msra.mxu0 0.0
      %2463 = vmatprep.subr.mxu0 0.0
      %2464 = vmatpush1.msra.mxu0 0.0
      %2465 = vmatprep.subr.mxu0 0.0
      %2466 = vmatpush1.msra.mxu0 %v2445
      %2467 = vmatprep.subr.mxu0 0.0
      %2468 = vmatpush1.msra.mxu0 %v2443
      %2469 = vmatprep.subr.mxu0 0.0
      %2470 = vmatpush1.msra.mxu0 %v2441
      %2471 = vmatprep.subr.mxu0 0.0
      %2472 = vmatpush1.msra.mxu0 %v2439
      %2473 = vmatprep.subr.mxu0 0.0
      %2474 = vmatpush1.msra.mxu0 %v2437
      %2475 = vmatprep.subr.mxu0 0.0
      %2476 = vmatpush1.msra.mxu0 %v2435
      %2477 = vmatprep.subr.mxu0 0.0
      %2478 = vmatpush1.msra.mxu0 %v2433
      %2479 = vmatprep.subr.mxu0 0.0
      %2480 = vmatpush1.msra.mxu0 %v2431
      %2481 = vmatprep.subr.mxu0 0.0
      %2482 = vmatpush2.msra.mxu0 0.0
      %2483 = vmatprep.subr.mxu0 0.0
      %2484 = vmatpush2.msra.mxu0 0.0
      %2485 = vmatprep.subr.mxu0 0.0
      %2486 = vmatpush2.msra.mxu0 0.0
      %2487 = vmatprep.subr.mxu0 0.0
      %2488 = vmatpush2.msra.mxu0 0.0
      %2489 = vmatprep.subr.mxu0 0.0
      %2490 = vmatpush2.msra.mxu0 0.0
      %2491 = vmatprep.subr.mxu0 0.0
      %2492 = vmatpush2.msra.mxu0 0.0
      %2493 = vmatprep.subr.mxu0 0.0
      %2494 = vmatpush2.msra.mxu0 0.0
      %2495 = vmatprep.subr.mxu0 0.0
      %2496 = vmatpush2.msra.mxu0 0.0
      %2497 = vmatprep.subr.mxu0 0.0
      %2498 = vmatpush2.msra.mxu0 0.0
      %2499 = vmatprep.subr.mxu0 0.0
      %2500 = vmatpush2.msra.mxu0 0.0
      %2501 = vmatprep.subr.mxu0 0.0
      %2502 = vmatpush2.msra.mxu0 0.0
      %2503 = vmatprep.subr.mxu0 0.0
      %2504 = vmatpush2.msra.mxu0 0.0
      %2505 = vmatprep.subr.mxu0 0.0
      %2506 = vmatpush2.msra.mxu0 0.0
      %2507 = vmatprep.subr.mxu0 0.0
      %2508 = vmatpush2.msra.mxu0 0.0
      %2509 = vmatprep.subr.mxu0 0.0
      %2510 = vmatpush2.msra.mxu0 0.0
      %2511 = vmatprep.subr.mxu0 0.0
      %2512 = vmatpush2.msra.mxu0 0.0
      %2513 = vmatprep.mubr.f32.mxu0 0.0
      %2514 = vmatmul.mubr.f32.gmra.mxu0 %v2447
      %v2515 = vpop.f32.mrf.mxu0
      %v2516 = vadd.f32 0.0, %v2515
      %v2517 = vpop.f32.mrf.mxu0
      %2518 = vdwg.mxu0
      %v2519 = vadd.f32 %v2516, 1e-08
      %v2520 = vrcp.pop %v2519
      %v2521 = vlaneseq
      %v2522 = vshrl.u32 %v2521, 7
      %v2523 = vsub.s32 2, %v2522
      %v2524 = vrot.slane %v2520, %v2523
      %v2525 = vmul.f32 %v2516, %v2524
      %vm2526 = vcmask 1041408
      %v2527 = vsel %vm2526, %v2525, %v2516
      %vm2528 = vcmask 518144
      %2529 = vst.msk [vmem:[%s252] sm:$0x7] %vm2528, %v2527
      %p2530 = scmp.lt.s32.totalorder %s15, 1
      %s2531 = scalar_select %p2530, %s15, 1
      %s2532 = smul.addr %s2531, 4
      %s2533 = scalar_lea.vmem %s4, %s2532
      // Predicated region
      $region37: #{ransac_matcher.2} parent=35 // pred_check
        %p2534 = pneg %p137
      $region38: #{ransac_matcher.2} parent=35 // pred_check_branch
        %2536 = sbr.rel (%p2534) target = $region40
      $region39: #{ransac_matcher.2} parent=35 // pred_region
        _
      $region40: #{ransac_matcher.2} parent=35 // pred_fallthru
        _
    $region36: #{ransac_matcher.2} parent=5 // pred_fallthru
      _
    %p2537 = scmp.le.s32.totalorder 2, %s10
    // Predicated region
    $region41: #{ransac_matcher.2} parent=5 // pred_check
      %p2538 = pneg %p2537
    $region42: #{ransac_matcher.2} parent=5 // pred_check_branch
      %2540 = sbr.rel (%p2538) target = $region44
    $region43: #{ransac_matcher.2} parent=5 // pred_region
      %s2541 = ssub.s32 %s10, 2
      // Predicated region
      $region45: #{ransac_matcher.2} parent=43 // pred_check
        %p2542 = pneg %p143
      $region46: #{ransac_matcher.2} parent=43 // pred_check_branch
        %2544 = sbr.rel (%p2542) target = $region48
      $region47: #{ransac_matcher.2} parent=43 // pred_region
        %p2545 = scmp.lt.s32.totalorder %s16, 1
        %s2546 = scalar_select %p2545, %s16, 1
        %s2547 = smul.addr %s2546, 4
        %s2548 = scalar_lea.vmem %s4, %s2547
      $region48: #{ransac_matcher.2} parent=43 // pred_fallthru
        _
    $region44: #{ransac_matcher.2} parent=5 // pred_fallthru
      _
  $region6: #{ransac_matcher.2} parent=0 // loop_footer
    %s14 = sadd.s32 1, %s10
  $region7: #{ransac_matcher.2} parent=0 // loop_footer_branch
    %9 = sbr.rel target = $region3
  $region8: #{ransac_matcher.2} parent=0 // loop_exit
    _

// kernel: squeeze.31
$region0: #{squeeze.31}
  %s0 = inlined_call_operand.vmem [shape: f32[2,6], index: 0, kind: input, shape index: {}]
  %s1 = inlined_call_operand.hbm [shape: f32[2,2,3], index: 1, kind: output, shape index: {}]
  $region1: #{squeeze.31} parent=0
    #allocation0 [shape = 'u8[2048]{0}', space=vmem, size = 0x800, scoped, tag = 'operand span for operand 1']
    #allocation1 [shape = 's32[1]{0}', space=sflag, size = 0x4, scoped, tag = 'scoped memory for squeeze.31']
    #allocation2 [shape = 'u8[8192]{0}', space=vmem, size = 0x2000, scoped, tag = 'scoped mem for output reshape']
    #allocation3 [shape = 'u8[4096]{0}', space=vmem, size = 0x1000, scoped, tag = 'scoped mem for input reshape']
    %2 = vsyncpa [#allocation1], 0
    %s4 = sshll.u32 1, 2
    %s5 = ssub.s32 %s4, 1
    %v6 = vld [vmem:[%s0] sm:%s5]
    %7 = vst [vmem:[#allocation3] sm:%s5] %v6
    %v8 = vld [vmem:[#allocation3] sm:$0x3]
    %vm9 = vcmask 23552
    %10 = vst.msk [vmem:[#allocation2] ss:$8 sm:$0x3] %vm9, %v8
    %v11 = vld [vmem:[#allocation3] sm:$0x3]
    %12 = vrot.lane.b32.xlu0 %v11, 125
    %v13 = vpop.permute.xlu0 %12
    %vm14 = vcmask 23552
    %s15 = scalar_lea.vmem [#allocation2], 1
    %16 = vst.msk [vmem:[%s15] ss:$8 sm:$0x3] %vm14, %v13
    %s18 = sshll.u32 1, 2
    %s19 = ssub.s32 %s18, 1
    %v21 = vld [vmem:[#allocation2] sm:%s19]
    %s22 = sshll.u32 1, 2
    %s23 = ssub.s32 %s22, 1
    %24 = vst [vmem:[#allocation0] sm:%s23] %v21
    %s25 = scalar_lea.vmem [#allocation2], 8
    %v26 = vld [vmem:[%s25] sm:%s19]
    %s27 = sshll.u32 1, 2
    %s28 = ssub.s32 %s27, 1
    %s29 = scalar_lea.vmem [#allocation0], 2
    %30 = vst [vmem:[%s29] sm:%s28] %v26
    %s32 = ssub.s32 64, 64
    %33 = vsyncadd [#allocation1], %s32
    %s35 = sshll.u32 [#allocation0], 4
    %s36 = int_to_ptr.vmem [resolvable:$true] %s35
    %38 = dma.vmem_to_hbm [thread:$0]  %s36, 64, %s1, [#allocation1]
    %39 = dma.done [#allocation1], 64
    %40 = vsyncpa [#allocation1], 1

// kernel: ransac_matcher.3
$region0: #{ransac_matcher.3}
  #allocation0 [shape = 'u32[]', space=smem, size = 0x4, offset = 0x4, fixed_abs, tag = 'smem constant byte address 0x4 - core index']
  #allocation1 [shape = 'u32[144,128]{1,0:T(1,128)}', space=vmem, size = 0x12000, scoped, tag = 'internal scratch']
  %s0 = inlined_call_operand.vmem [shape: f32[2,3,64], index: 0, kind: input, shape index: {}]
  %s1 = inlined_call_operand.vmem [shape: f32[2,3,64], index: 1, kind: input, shape index: {}]
  %s2 = inlined_call_operand.vmem [shape: f32[2,32,3], index: 2, kind: input, shape index: {}]
  %s3 = inlined_call_operand.vmem [shape: f32[2,1,256], index: 3, kind: output, shape index: {}]
  %s4 = sld [smem:[#allocation0]]
  $region45: #{ransac_matcher.3} parent=0
    _
  %s6 = ssub.s32 1, %s4
  %s7 = scalar_select 0, %s6, %s4
  loop: start=0, step=1, limit=4
  $region2: #{ransac_matcher.3} parent=0 // loop_pre_header
    _
  $region3: #{ransac_matcher.3} parent=0 // loop_header
    %s9 = sphi 0, %s13
    %p10 = scmp.ge.s32.totalorder %s9, 4
    %s19 = sphi 0, %s21
    %s22 = sphi 0, %s19
    %s23 = sphi 0, %s22
    %s39 = sphi 0, %s23
    %s45 = sphi 0, %s47
    %s48 = sphi 0, %s45
    %s49 = sphi 0, %s48
    %s65 = sphi 0, %s49
    %s71 = sphi 0, %s73
    %s74 = sphi 0, %s71
    %s75 = sphi 0, %s74
    %s91 = sphi 0, %s75
    %s97 = sphi 0, %s99
    %s100 = sphi 0, %s97
    %s101 = sphi 0, %s100
    %s117 = sphi 0, %s101
  $region4: #{ransac_matcher.3} parent=0 // loop_header_branch
    %12 = sbr.rel (%p10) target = $region8
  $region5: #{ransac_matcher.3} parent=0 // loop_body
    %s14 = ssub.s32 %s9, 1
    %s15 = ssub.s32 %s9, 2
    %s16 = sadd.s32 %s9, 1
    %s17 = ssub.s32 %s9, %s16
    %p18 = scmp.eq.s32.totalorder %s17, 0
    %s20 = sadd.s32 %s19, 1
    %s21 = scalar_select %p18, %s19, %s20
    %p24 = pneg %p18
    %p25 = scmp.eq.s32.totalorder %s9, 1
    %p26 = por %p24, %p25
    %p27 = scmp.ne.s32.totalorder %s19, %s22
    %p28 = scmp.eq.s32.totalorder %s9, 0
    %p29 = por %p27, %p28
    %p30 = scmp.ne.s32.totalorder %s19, %s22
    %p31 = scmp.eq.s32.totalorder %s14, 1
    %p32 = por %p30, %p31
    %p33 = scmp.ne.s32.totalorder %s22, %s23
    %p34 = scmp.eq.s32.totalorder %s14, 0
    %p35 = por %p33, %p34
    %p36 = scmp.ne.s32.totalorder %s22, %s23
    %p37 = scmp.eq.s32.totalorder %s15, 1
    %p38 = por %p36, %p37
    %p40 = scmp.ne.s32.totalorder %s23, %s39
    %p41 = scmp.eq.s32.totalorder %s15, 0
    %p42 = por %p40, %p41
    %s43 = ssub.s32 %s9, %s16
    %p44 = scmp.eq.s32.totalorder %s43, 0
    %s46 = sadd.s32 %s45, 1
    %s47 = scalar_select %p44, %s45, %s46
    %p50 = pneg %p44
    %p51 = scmp.eq.s32.totalorder %s9, 1
    %p52 = por %p50, %p51
    %p53 = scmp.ne.s32.totalorder %s45, %s48
    %p54 = scmp.eq.s32.totalorder %s9, 0
    %p55 = por %p53, %p54
    %p56 = scmp.ne.s32.totalorder %s45, %s48
    %p57 = scmp.eq.s32.totalorder %s14, 1
    %p58 = por %p56, %p57
    %p59 = scmp.ne.s32.totalorder %s48, %s49
    %p60 = scmp.eq.s32.totalorder %s14, 0
    %p61 = por %p59, %p60
    %p62 = scmp.ne.s32.totalorder %s48, %s49
    %p63 = scmp.eq.s32.totalorder %s15, 1
    %p64 = por %p62, %p63
    %p66 = scmp.ne.s32.totalorder %s49, %s65
    %p67 = scmp.eq.s32.totalorder %s15, 0
    %p68 = por %p66, %p67
    %s69 = ssub.s32 %s9, %s16
    %p70 = scmp.eq.s32.totalorder %s69, 0
    %s72 = sadd.s32 %s71, 1
    %s73 = scalar_select %p70, %s71, %s72
    %p76 = pneg %p70
    %p77 = scmp.eq.s32.totalorder %s9, 1
    %p78 = por %p76, %p77
    %p79 = scmp.ne.s32.totalorder %s71, %s74
    %p80 = scmp.eq.s32.totalorder %s9, 0
    %p81 = por %p79, %p80
    %p82 = scmp.ne.s32.totalorder %s71, %s74
    %p83 = scmp.eq.s32.totalorder %s14, 1
    %p84 = por %p82, %p83
    %p85 = scmp.ne.s32.totalorder %s74, %s75
    %p86 = scmp.eq.s32.totalorder %s14, 0
    %p87 = por %p85, %p86
    %p88 = scmp.ne.s32.totalorder %s74, %s75
    %p89 = scmp.eq.s32.totalorder %s15, 1
    %p90 = por %p88, %p89
    %p92 = scmp.ne.s32.totalorder %s75, %s91
    %p93 = scmp.eq.s32.totalorder %s15, 0
    %p94 = por %p92, %p93
    %s95 = ssub.s32 %s9, %s16
    %p96 = scmp.eq.s32.totalorder %s95, 0
    %s98 = sadd.s32 %s97, 1
    %s99 = scalar_select %p96, %s97, %s98
    %p102 = pneg %p96
    %p103 = scmp.eq.s32.totalorder %s9, 1
    %p104 = por %p102, %p103
    %p105 = scmp.ne.s32.totalorder %s97, %s100
    %p106 = scmp.eq.s32.totalorder %s9, 0
    %p107 = por %p105, %p106
    %p108 = scmp.ne.s32.totalorder %s97, %s100
    %p109 = scmp.eq.s32.totalorder %s14, 1
    %p110 = por %p108, %p109
    %p111 = scmp.ne.s32.totalorder %s100, %s101
    %p112 = scmp.eq.s32.totalorder %s14, 0
    %p113 = por %p111, %p112
    %p114 = scmp.ne.s32.totalorder %s100, %s101
    %p115 = scmp.eq.s32.totalorder %s15, 1
    %p116 = por %p114, %p115
    %p118 = scmp.ne.s32.totalorder %s101, %s117
    %p119 = scmp.eq.s32.totalorder %s15, 0
    %p120 = por %p118, %p119
    %p121 = scmp.le.s32.totalorder 1, %s9
    %p122 = scmp.lt.s32.totalorder %s9, 3
    %p123 = pnand %p121, %p122
    %p124 = pneg %p123
    // Predicated region
    $region9: #{ransac_matcher.3} parent=5 // pred_check
      _
    $region10: #{ransac_matcher.3} parent=5 // pred_check_branch
      %126 = sbr.rel (%p123) target = $region12
    $region11: #{ransac_matcher.3} parent=5 // pred_region
      %s127 = ssub.s32 %s9, 1
    $region12: #{ransac_matcher.3} parent=5 // pred_fallthru
      _
    %p128 = scmp.lt.s32.totalorder %s9, 2
    // Predicated region
    $region13: #{ransac_matcher.3} parent=5 // pred_check
      %p129 = pneg %p128
    $region14: #{ransac_matcher.3} parent=5 // pred_check_branch
      %131 = sbr.rel (%p129) target = $region16
    $region15: #{ransac_matcher.3} parent=5 // pred_region
      // Predicated region
      $region17: #{ransac_matcher.3} parent=15 // pred_check
        %p132 = pneg %p29
      $region18: #{ransac_matcher.3} parent=15 // pred_check_branch
        %134 = sbr.rel (%p132) target = $region20
      $region19: #{ransac_matcher.3} parent=15 // pred_region
        %p135 = scmp.lt.s32.totalorder %s9, 1
        %s136 = scalar_select %p135, %s9, 1
        %s137 = smul.addr %s136, 4
        %s138 = scalar_lea.vmem %s0, %s137
      $region20: #{ransac_matcher.3} parent=15 // pred_fallthru
        _
      // Predicated region
      $region21: #{ransac_matcher.3} parent=15 // pred_check
        %p139 = pneg %p55
      $region22: #{ransac_matcher.3} parent=15 // pred_check_branch
        %141 = sbr.rel (%p139) target = $region24
      $region23: #{ransac_matcher.3} parent=15 // pred_region
        %p142 = scmp.lt.s32.totalorder %s9, 1
        %s143 = scalar_select %p142, %s9, 1
        %s144 = smul.addr %s143, 4
        %s145 = scalar_lea.vmem %s1, %s144
      $region24: #{ransac_matcher.3} parent=15 // pred_fallthru
        _
      // Predicated region
      $region25: #{ransac_matcher.3} parent=15 // pred_check
        %p146 = pneg %p81
      $region26: #{ransac_matcher.3} parent=15 // pred_check_branch
        %148 = sbr.rel (%p146) target = $region28
      $region27: #{ransac_matcher.3} parent=15 // pred_region
        %p149 = scmp.lt.s32.totalorder %s9, 1
        %s150 = scalar_select %p149, %s9, 1
        %s151 = smul.addr %s150, 4
        %s152 = smul.addr %s151, 8
        %s153 = scalar_lea.vmem %s2, %s152
      $region28: #{ransac_matcher.3} parent=15 // pred_fallthru
        _
    $region16: #{ransac_matcher.3} parent=5 // pred_fallthru
      _
    %p154 = scmp.le.s32.totalorder 1, %s9
    %p155 = scmp.lt.s32.totalorder %s9, 3
    %p156 = pnand %p154, %p155
    %p157 = pneg %p156
    // Predicated region
    $region29: #{ransac_matcher.3} parent=5 // pred_check
      _
    $region30: #{ransac_matcher.3} parent=5 // pred_check_branch
      %159 = sbr.rel (%p156) target = $region32
    $region31: #{ransac_matcher.3} parent=5 // pred_region
      %s160 = ssub.s32 %s9, 1
      %p161 = scmp.lt.s32.totalorder %s14, 1
      %s162 = scalar_select %p161, %s14, 1
      %s163 = smul.addr %s162, 4
      %s164 = scalar_lea.vmem %s0, %s163
      %p165 = pneg %p35
      %p166 = pneg %p32
      %p167 = scmp.lt.s32.totalorder %s14, 1
      %s168 = scalar_select %p167, %s14, 1
      %s169 = smul.addr %s168, 4
      %s170 = scalar_lea.vmem %s1, %s169
      %p171 = pneg %p61
      %p172 = pneg %p58
      %p173 = scmp.lt.s32.totalorder %s14, 1
      %s174 = scalar_select %p173, %s14, 1
      %s175 = smul.addr %s174, 4
      %s176 = smul.addr %s175, 8
      %s177 = scalar_lea.vmem %s2, %s176
      %p178 = pneg %p87
      %p179 = pneg %p84
      %p180 = pneg %p113
      %p181 = pneg %p110
      %p182 = scmp.lt.s32.totalorder %s14, 1
      %s183 = scalar_select %p182, %s14, 1
      %s184 = smul.addr %s183, 2
      %s185 = scalar_lea.vmem %s3, %s184
      %p186 = scmp.lt.s32.totalorder %s14, 1
      %s187 = scalar_select %p186, %s14, 1
      %s188 = smul.addr %s187, 4
      %s189 = scalar_lea.vmem %s0, %s188
      %p190 = scmp.lt.s32.totalorder %s14, 1
      %s191 = scalar_select %p190, %s14, 1
      %s192 = smul.addr %s191, 4
      %s193 = scalar_lea.vmem %s1, %s192
      %p194 = scmp.lt.s32.totalorder %s14, 1
      %s195 = scalar_select %p194, %s14, 1
      %s196 = smul.addr %s195, 4
      %s197 = smul.addr %s196, 8
      %s198 = scalar_lea.vmem %s2, %s197
      %p199 = scmp.lt.s32.totalorder %s14, 1
      %s200 = scalar_select %p199, %s14, 1
      %s201 = smul.addr %s200, 2
      %s202 = scalar_lea.vmem %s3, %s201
      %v203 = vld [vmem:[%s189] sm:$0x7]
      %v204 = vld [vmem:[%s193] sm:$0x7]
      %v205 = vld [vmem:[%s198] sm:$0xff]
      %v206 = vld [vmem:[%s198 + $0x8] sm:$0xff]
      %v207 = vld [vmem:[%s198 + $0x10] sm:$0xff]
      %v208 = vld [vmem:[%s198 + $0x18] sm:$0xff]
      %vm209 = vcmask 23552
      %v211 = vsel %vm209, %v205, 0
      %v214 = vsel %vm209, %v206, 0
      %v217 = vsel %vm209, %v207, 0
      %v220 = vsel %vm209, %v208, 0
      %vm222 = vcmask 1042432
      %v224 = vsel %vm222, %v203, 0
      %226 = vmatprep.subr.mxu0 0.0
      %227 = vmatpush1.msra.mxu0 0.0
      %228 = vmatprep.subr.mxu0 0.0
      %229 = vmatpush1.msra.mxu0 0.0
      %230 = vmatprep.subr.mxu0 0.0
      %231 = vmatpush1.msra.mxu0 0.0
      %232 = vmatprep.subr.mxu0 0.0
      %233 = vmatpush1.msra.mxu0 0.0
      %234 = vmatprep.subr.mxu0 0.0
      %235 = vmatpush1.msra.mxu0 0.0
      %236 = vmatprep.subr.mxu0 0.0
      %237 = vmatpush1.msra.mxu0 0.0
      %238 = vmatprep.subr.mxu0 0.0
      %239 = vmatpush1.msra.mxu0 0.0
      %240 = vmatprep.subr.mxu0 0.0
      %241 = vmatpush1.msra.mxu0 0.0
      %242 = vmatprep.subr.mxu0 0.0
      %243 = vmatpush1.msra.mxu0 0.0
      %244 = vmatprep.subr.mxu0 0.0
      %245 = vmatpush1.msra.mxu0 0.0
      %246 = vmatprep.subr.mxu0 0.0
      %247 = vmatpush1.msra.mxu0 0.0
      %248 = vmatprep.subr.mxu0 0.0
      %249 = vmatpush1.msra.mxu0 0.0
      %250 = vmatprep.subr.mxu0 0.0
      %251 = vmatpush1.msra.mxu0 0.0
      %252 = vmatprep.subr.mxu0 0.0
      %253 = vmatpush1.msra.mxu0 0.0
      %254 = vmatprep.subr.mxu0 0.0
      %255 = vmatpush1.msra.mxu0 0.0
      %256 = vmatprep.subr.mxu0 0.0
      %257 = vmatpush1.msra.mxu0 %v224
      %258 = vmatprep.subr.mxu0 0.0
      %259 = vmatpush2.msra.mxu0 0.0
      %260 = vmatprep.subr.mxu0 0.0
      %261 = vmatpush2.msra.mxu0 0.0
      %262 = vmatprep.subr.mxu0 0.0
      %263 = vmatpush2.msra.mxu0 0.0
      %264 = vmatprep.subr.mxu0 0.0
      %265 = vmatpush2.msra.mxu0 0.0
      %266 = vmatprep.subr.mxu0 0.0
      %267 = vmatpush2.msra.mxu0 0.0
      %268 = vmatprep.subr.mxu0 0.0
      %269 = vmatpush2.msra.mxu0 0.0
      %270 = vmatprep.subr.mxu0 0.0
      %271 = vmatpush2.msra.mxu0 0.0
      %272 = vmatprep.subr.mxu0 0.0
      %273 = vmatpush2.msra.mxu0 0.0
      %274 = vmatprep.subr.mxu0 0.0
      %275 = vmatpush2.msra.mxu0 0.0
      %276 = vmatprep.subr.mxu0 0.0
      %277 = vmatpush2.msra.mxu0 0.0
      %278 = vmatprep.subr.mxu0 0.0
      %279 = vmatpush2.msra.mxu0 0.0
      %280 = vmatprep.subr.mxu0 0.0
      %281 = vmatpush2.msra.mxu0 0.0
      %282 = vmatprep.subr.mxu0 0.0
      %283 = vmatpush2.msra.mxu0 0.0
      %284 = vmatprep.subr.mxu0 0.0
      %285 = vmatpush2.msra.mxu0 0.0
      %286 = vmatprep.subr.mxu0 0.0
      %287 = vmatpush2.msra.mxu0 0.0
      %288 = vmatprep.subr.mxu0 0.0
      %289 = vmatpush2.msra.mxu0 0.0
      %290 = vmatprep.mubr.f32.mxu0 0.0
      %291 = vmatmul.mubr.f32.gmra.mxu0 %v211
      %v292 = vpop.f32.mrf.mxu0
      %v293 = vadd.f32 0.0, %v292
      %v294 = vpop.f32.mrf.mxu0
      %295 = vmatprep.mubr.f32.mxu0 0.0
      %296 = vmatmul.mubr.f32.gmra.mxu0 %v214
      %v297 = vpop.f32.mrf.mxu0
      %v298 = vadd.f32 0.0, %v297
      %v299 = vpop.f32.mrf.mxu0
      %300 = vmatprep.mubr.f32.mxu0 0.0
      %301 = vmatmul.mubr.f32.gmra.mxu0 %v217
      %v302 = vpop.f32.mrf.mxu0
      %v303 = vadd.f32 0.0, %v302
      %v304 = vpop.f32.mrf.mxu0
      %305 = vmatprep.mubr.f32.mxu0 0.0
      %306 = vmatmul.mubr.f32.gmra.mxu0 %v220
      %v307 = vpop.f32.mrf.mxu0
      %v308 = vadd.f32 0.0, %v307
      %v309 = vpop.f32.mrf.mxu0
      %310 = vdwg.mxu0
      %v311 = vlaneseq
      %v312 = vshrl.u32 %v311, 7
      %v313 = vsub.s32 0, %v312
      %v314 = vrot.slane %v204, %v313
      %v315 = vsub.f32 %v293, %v314
      %v316 = vsub.f32 %v298, %v314
      %v317 = vlaneseq
      %v318 = vshrl.u32 %v317, 7
      %v319 = vsub.s32 1, %v318
      %v320 = vrot.slane %v204, %v319
      %v321 = vsub.f32 %v303, %v320
      %v322 = vsub.f32 %v308, %v320
      %v323 = vmul.f32 %v315, %v315
      %v324 = vmul.f32 %v316, %v316
      %v325 = vmul.f32 %v321, %v321
      %v326 = vmul.f32 %v322, %v322
      %v327 = vadd.f32 %v323, %v325
      %v328 = vadd.f32 %v324, %v326
      %vm329 = vcmp.lt.f32.partialorder %v327, 0.5625
      %vm330 = vcmp.lt.f32.partialorder %v328, 0.5625
      %v331 = vsel %vm329, 1, 0
      %v332 = vsel %vm330, 1, 0
      %v333 = vcvt.s32.f32 %v331
      %v334 = vcvt.s32.f32 %v332
      %v335 = vlaneseq
      %v336 = vshrl.u32 %v335, 7
      %v337 = vsub.s32 2, %v336
      %v338 = vrot.slane %v204, %v337
      %v339 = vmul.f32 %v333, %v338
      %v340 = vmul.f32 %v334, %v338
      %vm341 = vcmask 523264
      %v343 = vsel %vm341, %v339, 0
      %v346 = vsel %vm341, %v340, 0
      %348 = vmatprep.subr.mxu0 0.0
      %349 = vmatpush1.msra.mxu0 0.0
      %350 = vmatprep.subr.mxu0 0.0
      %351 = vmatpush1.msra.mxu0 0.0
      %352 = vmatprep.subr.mxu0 0.0
      %353 = vmatpush1.msra.mxu0 0.0
      %354 = vmatprep.subr.mxu0 0.0
      %355 = vmatpush1.msra.mxu0 0.0
      %356 = vmatprep.subr.mxu0 0.0
      %357 = vmatpush1.msra.mxu0 0.0
      %358 = vmatprep.subr.mxu0 0.0
      %359 = vmatpush1.msra.mxu0 0.0
      %360 = vmatprep.subr.mxu0 0.0
      %361 = vmatpush1.msra.mxu0 0.0
      %362 = vmatprep.subr.mxu0 0.0
      %363 = vmatpush1.msra.mxu0 0.0
      %364 = vmatprep.subr.mxu0 0.0
      %365 = vmatpush1.msra.mxu0 1.0
      %366 = vmatprep.subr.mxu0 0.0
      %367 = vmatpush1.msra.mxu0 1.0
      %368 = vmatprep.subr.mxu0 0.0
      %369 = vmatpush1.msra.mxu0 1.0
      %370 = vmatprep.subr.mxu0 0.0
      %371 = vmatpush1.msra.mxu0 1.0
      %372 = vmatprep.subr.mxu0 0.0
      %373 = vmatpush1.msra.mxu0 1.0
      %374 = vmatprep.subr.mxu0 0.0
      %375 = vmatpush1.msra.mxu0 1.0
      %376 = vmatprep.subr.mxu0 0.0
      %377 = vmatpush1.msra.mxu0 1.0
      %378 = vmatprep.subr.mxu0 0.0
      %379 = vmatpush1.msra.mxu0 1.0
      %380 = vmatprep.subr.mxu0 0.0
      %381 = vmatpush2.msra.mxu0 0.0
      %382 = vmatprep.subr.mxu0 0.0
      %383 = vmatpush2.msra.mxu0 0.0
      %384 = vmatprep.subr.mxu0 0.0
      %385 = vmatpush2.msra.mxu0 0.0
      %386 = vmatprep.subr.mxu0 0.0
      %387 = vmatpush2.msra.mxu0 0.0
      %388 = vmatprep.subr.mxu0 0.0
      %389 = vmatpush2.msra.mxu0 0.0
      %390 = vmatprep.subr.mxu0 0.0
      %391 = vmatpush2.msra.mxu0 0.0
      %392 = vmatprep.subr.mxu0 0.0
      %393 = vmatpush2.msra.mxu0 0.0
      %394 = vmatprep.subr.mxu0 0.0
      %395 = vmatpush2.msra.mxu0 0.0
      %396 = vmatprep.subr.mxu0 0.0
      %397 = vmatpush2.msra.mxu0 0.0
      %398 = vmatprep.subr.mxu0 0.0
      %399 = vmatpush2.msra.mxu0 0.0
      %400 = vmatprep.subr.mxu0 0.0
      %401 = vmatpush2.msra.mxu0 0.0
      %402 = vmatprep.subr.mxu0 0.0
      %403 = vmatpush2.msra.mxu0 0.0
      %404 = vmatprep.subr.mxu0 0.0
      %405 = vmatpush2.msra.mxu0 0.0
      %406 = vmatprep.subr.mxu0 0.0
      %407 = vmatpush2.msra.mxu0 0.0
      %408 = vmatprep.subr.mxu0 0.0
      %409 = vmatpush2.msra.mxu0 0.0
      %410 = vmatprep.subr.mxu0 0.0
      %411 = vmatpush2.msra.mxu0 0.0
      %412 = vmatprep.mubr.f32.mxu0 0.0
      %413 = vmatmul.mubr.f32.gmra.mxu0 %v343
      %v414 = vpop.f32.mrf.mxu0
      %v415 = vadd.f32 0.0, %v414
      %v416 = vpop.f32.mrf.mxu0
      %417 = vmatprep.mubr.f32.mxu0 0.0
      %418 = vmatmul.mubr.f32.gmra.mxu0 %v346
      %v419 = vpop.f32.mrf.mxu0
      %v420 = vadd.f32 0.0, %v419
      %v421 = vpop.f32.mrf.mxu0
      %422 = vdwg.mxu0
      %vm423 = vcmask 7168
      %v424 = vsel %vm423, %v415, -inf
      %v425 = vsel %vm423, %v420, -inf
      %v426 = vmax.f32 %v424, %v425
      %427 = vmax.xlane.f32.xlu0 %v426
      %v428 = vpop.xlane.xlu0 %427
      %v429 = vrot.slane %v428, 4
      %v430 = vmax.f32 %v428, %v429
      %v431 = vrot.slane %v430, 2
      %v432 = vmax.f32 %v430, %v431
      %v433 = vrot.slane %v432, 1
      %v434 = vmax.f32 %v432, %v433
      %s435 = vtos %v434
      %v436 = vlaneseq
      %v437 = vshrl.u32 %v436, 7
      %v438 = vadd.s32 %v437, 8
      %v439 = vstv %s435
      %vm440 = vcmp.ge.f32.partialorder %v415, %v439
      %vm441 = vcmp.ge.f32.partialorder %v420, %v439
      %v442 = vsel %vm440, %v437, 17
      %v443 = vsel %vm441, %v438, 17
      %v444 = vsel %vm423, %v442, 2147483647
      %v445 = vsel %vm423, %v443, 2147483647
      %vm446 = vcmp.lt.s32.totalorder %v444, %v445
      %v447 = vsel %vm446, %v444, %v445
      %v448 = vand.u32 %v447, 65535
      %v449 = vshra.s32 %v447, 16
      %v450 = vcvt.s32.f32 %v448
      %v451 = vcvt.s32.f32 %v449
      %452 = vmin.xlane.f32.xlu0 %v451
      %v453 = vpop.xlane.xlu0 %452
      %vm454 = vcmp.eq.f32.partialorder %v451, %v453
      %v455 = vsel %vm454, %v450, inf
      %456 = vmin.xlane.f32.xlu0 %v455
      %v457 = vpop.xlane.xlu0 %456
      %v458 = vcvt.f32.s32 %v457
      %v459 = vcvt.f32.s32 %v453
      %v460 = vshll.u32 %v459, 16
      %v461 = vadd.s32 %v460, %v458
      %v462 = vrot.slane %v461, 4
      %vm463 = vcmp.lt.s32.totalorder %v461, %v462
      %v464 = vsel %vm463, %v461, %v462
      %v465 = vrot.slane %v464, 2
      %vm466 = vcmp.lt.s32.totalorder %v464, %v465
      %v467 = vsel %vm466, %v464, %v465
      %v468 = vrot.slane %v467, 1
      %vm469 = vcmp.lt.s32.totalorder %v467, %v468
      %v470 = vsel %vm469, %v467, %v468
      %s471 = vtos %v470
      %v472 = vlaneseq
      %v473 = vand.u32 %v472, 127
      %v474 = vstv %s471
      %vm475 = vcmp.eq.s32.totalorder %v473, %v474
      %v476 = vsel %vm475, 1, 0
      %v477 = vcvt.s32.f32 %v476
      %vm478 = vcmask 130048
      %v480 = vsel %vm478, %v477, 0
      %482 = vmatprep.subr.mxu0 0.0
      %483 = vmatpush1.msra.mxu0 0.0
      %484 = vmatprep.subr.mxu0 0.0
      %485 = vmatpush1.msra.mxu0 0.0
      %486 = vmatprep.subr.mxu0 0.0
      %487 = vmatpush1.msra.mxu0 0.0
      %488 = vmatprep.subr.mxu0 0.0
      %489 = vmatpush1.msra.mxu0 0.0
      %490 = vmatprep.subr.mxu0 0.0
      %491 = vmatpush1.msra.mxu0 0.0
      %492 = vmatprep.subr.mxu0 0.0
      %493 = vmatpush1.msra.mxu0 0.0
      %494 = vmatprep.subr.mxu0 0.0
      %495 = vmatpush1.msra.mxu0 0.0
      %496 = vmatprep.subr.mxu0 0.0
      %497 = vmatpush1.msra.mxu0 0.0
      %498 = vmatprep.subr.mxu0 0.0
      %499 = vmatpush1.msra.mxu0 0.0
      %500 = vmatprep.subr.mxu0 0.0
      %501 = vmatpush1.msra.mxu0 0.0
      %502 = vmatprep.subr.mxu0 0.0
      %503 = vmatpush1.msra.mxu0 0.0
      %504 = vmatprep.subr.mxu0 0.0
      %505 = vmatpush1.msra.mxu0 0.0
      %506 = vmatprep.subr.mxu0 0.0
      %507 = vmatpush1.msra.mxu0 0.0
      %508 = vmatprep.subr.mxu0 0.0
      %509 = vmatpush1.msra.mxu0 0.0
      %510 = vmatprep.subr.mxu0 0.0
      %511 = vmatpush1.msra.mxu0 %v328
      %512 = vmatprep.subr.mxu0 0.0
      %513 = vmatpush1.msra.mxu0 %v327
      %514 = vmatprep.subr.mxu0 0.0
      %515 = vmatpush2.msra.mxu0 0.0
      %516 = vmatprep.subr.mxu0 0.0
      %517 = vmatpush2.msra.mxu0 0.0
      %518 = vmatprep.subr.mxu0 0.0
      %519 = vmatpush2.msra.mxu0 0.0
      %520 = vmatprep.subr.mxu0 0.0
      %521 = vmatpush2.msra.mxu0 0.0
      %522 = vmatprep.subr.mxu0 0.0
      %523 = vmatpush2.msra.mxu0 0.0
      %524 = vmatprep.subr.mxu0 0.0
      %525 = vmatpush2.msra.mxu0 0.0
      %526 = vmatprep.subr.mxu0 0.0
      %527 = vmatpush2.msra.mxu0 0.0
      %528 = vmatprep.subr.mxu0 0.0
      %529 = vmatpush2.msra.mxu0 0.0
      %530 = vmatprep.subr.mxu0 0.0
      %531 = vmatpush2.msra.mxu0 0.0
      %532 = vmatprep.subr.mxu0 0.0
      %533 = vmatpush2.msra.mxu0 0.0
      %534 = vmatprep.subr.mxu0 0.0
      %535 = vmatpush2.msra.mxu0 0.0
      %536 = vmatprep.subr.mxu0 0.0
      %537 = vmatpush2.msra.mxu0 0.0
      %538 = vmatprep.subr.mxu0 0.0
      %539 = vmatpush2.msra.mxu0 0.0
      %540 = vmatprep.subr.mxu0 0.0
      %541 = vmatpush2.msra.mxu0 0.0
      %542 = vmatprep.subr.mxu0 0.0
      %543 = vmatpush2.msra.mxu0 0.0
      %544 = vmatprep.subr.mxu0 0.0
      %545 = vmatpush2.msra.mxu0 0.0
      %546 = vmatprep.mubr.f32.mxu0 0.0
      %547 = vmatmul.mubr.f32.gmra.mxu0 %v480
      %v548 = vpop.f32.mrf.mxu0
      %v549 = vadd.f32 0.0, %v548
      %v550 = vpop.f32.mrf.mxu0
      %551 = vdwg.mxu0
      %552 = vmatprep.subr.mxu0 0.0
      %553 = vmatpush1.msra.mxu0 0.0
      %554 = vmatprep.subr.mxu0 0.0
      %555 = vmatpush1.msra.mxu0 0.0
      %556 = vmatprep.subr.mxu0 0.0
      %557 = vmatpush1.msra.mxu0 0.0
      %558 = vmatprep.subr.mxu0 0.0
      %559 = vmatpush1.msra.mxu0 0.0
      %560 = vmatprep.subr.mxu0 0.0
      %561 = vmatpush1.msra.mxu0 0.0
      %562 = vmatprep.subr.mxu0 0.0
      %563 = vmatpush1.msra.mxu0 0.0
      %564 = vmatprep.subr.mxu0 0.0
      %565 = vmatpush1.msra.mxu0 0.0
      %566 = vmatprep.subr.mxu0 0.0
      %567 = vmatpush1.msra.mxu0 0.0
      %568 = vmatprep.subr.mxu0 0.0
      %569 = vmatpush1.msra.mxu0 0.0
      %570 = vmatprep.subr.mxu0 0.0
      %571 = vmatpush1.msra.mxu0 0.0
      %572 = vmatprep.subr.mxu0 0.0
      %573 = vmatpush1.msra.mxu0 0.0
      %574 = vmatprep.subr.mxu0 0.0
      %575 = vmatpush1.msra.mxu0 0.0
      %576 = vmatprep.subr.mxu0 0.0
      %577 = vmatpush1.msra.mxu0 0.0
      %578 = vmatprep.subr.mxu0 0.0
      %579 = vmatpush1.msra.mxu0 0.0
      %580 = vmatprep.subr.mxu0 0.0
      %581 = vmatpush1.msra.mxu0 %v334
      %582 = vmatprep.subr.mxu0 0.0
      %583 = vmatpush1.msra.mxu0 %v333
      %584 = vmatprep.subr.mxu0 0.0
      %585 = vmatpush2.msra.mxu0 0.0
      %586 = vmatprep.subr.mxu0 0.0
      %587 = vmatpush2.msra.mxu0 0.0
      %588 = vmatprep.subr.mxu0 0.0
      %589 = vmatpush2.msra.mxu0 0.0
      %590 = vmatprep.subr.mxu0 0.0
      %591 = vmatpush2.msra.mxu0 0.0
      %592 = vmatprep.subr.mxu0 0.0
      %593 = vmatpush2.msra.mxu0 0.0
      %594 = vmatprep.subr.mxu0 0.0
      %595 = vmatpush2.msra.mxu0 0.0
      %596 = vmatprep.subr.mxu0 0.0
      %597 = vmatpush2.msra.mxu0 0.0
      %598 = vmatprep.subr.mxu0 0.0
      %599 = vmatpush2.msra.mxu0 0.0
      %600 = vmatprep.subr.mxu0 0.0
      %601 = vmatpush2.msra.mxu0 0.0
      %602 = vmatprep.subr.mxu0 0.0
      %603 = vmatpush2.msra.mxu0 0.0
      %604 = vmatprep.subr.mxu0 0.0
      %605 = vmatpush2.msra.mxu0 0.0
      %606 = vmatprep.subr.mxu0 0.0
      %607 = vmatpush2.msra.mxu0 0.0
      %608 = vmatprep.subr.mxu0 0.0
      %609 = vmatpush2.msra.mxu0 0.0
      %610 = vmatprep.subr.mxu0 0.0
      %611 = vmatpush2.msra.mxu0 0.0
      %612 = vmatprep.subr.mxu0 0.0
      %613 = vmatpush2.msra.mxu0 0.0
      %614 = vmatprep.subr.mxu0 0.0
      %615 = vmatpush2.msra.mxu0 0.0
      %616 = vmatprep.mubr.f32.mxu0 0.0
      %617 = vmatmul.mubr.f32.gmra.mxu0 %v480
      %v618 = vpop.f32.mrf.mxu0
      %v619 = vadd.f32 0.0, %v618
      %v620 = vpop.f32.mrf.mxu0
      %621 = vdwg.mxu0
      %s622 = sadd.s32 %s471, 16
      %v623 = vstv %s622
      %vm624 = vcmp.eq.s32.totalorder %v473, %v623
      %v625 = vsel %vm624, 1, 0
      %v626 = vcvt.s32.f32 %v625
      %vm627 = vcmask 261120
      %v628 = vsel %vm627, %v477, 0
      %630 = vmatprep.subr.mxu0 0.0
      %631 = vmatpush1.msra.mxu0 0.0
      %632 = vmatprep.subr.mxu0 0.0
      %633 = vmatpush1.msra.mxu0 0.0
      %634 = vmatprep.subr.mxu0 0.0
      %635 = vmatpush1.msra.mxu0 0.0
      %636 = vmatprep.subr.mxu0 0.0
      %637 = vmatpush1.msra.mxu0 0.0
      %638 = vmatprep.subr.mxu0 0.0
      %639 = vmatpush1.msra.mxu0 0.0
      %640 = vmatprep.subr.mxu0 0.0
      %641 = vmatpush1.msra.mxu0 0.0
      %642 = vmatprep.subr.mxu0 0.0
      %643 = vmatpush1.msra.mxu0 0.0
      %644 = vmatprep.subr.mxu0 0.0
      %645 = vmatpush1.msra.mxu0 0.0
      %646 = vmatprep.subr.mxu0 0.0
      %647 = vmatpush1.msra.mxu0 0.0
      %648 = vmatprep.subr.mxu0 0.0
      %649 = vmatpush1.msra.mxu0 0.0
      %650 = vmatprep.subr.mxu0 0.0
      %651 = vmatpush1.msra.mxu0 0.0
      %652 = vmatprep.subr.mxu0 0.0
      %653 = vmatpush1.msra.mxu0 0.0
      %654 = vmatprep.subr.mxu0 0.0
      %655 = vmatpush1.msra.mxu0 %v208
      %656 = vmatprep.subr.mxu0 0.0
      %657 = vmatpush1.msra.mxu0 %v207
      %658 = vmatprep.subr.mxu0 0.0
      %659 = vmatpush1.msra.mxu0 %v206
      %660 = vmatprep.subr.mxu0 0.0
      %661 = vmatpush1.msra.mxu0 %v205
      %662 = vmatprep.subr.mxu0 0.0
      %663 = vmatpush2.msra.mxu0 0.0
      %664 = vmatprep.subr.mxu0 0.0
      %665 = vmatpush2.msra.mxu0 0.0
      %666 = vmatprep.subr.mxu0 0.0
      %667 = vmatpush2.msra.mxu0 0.0
      %668 = vmatprep.subr.mxu0 0.0
      %669 = vmatpush2.msra.mxu0 0.0
      %670 = vmatprep.subr.mxu0 0.0
      %671 = vmatpush2.msra.mxu0 0.0
      %672 = vmatprep.subr.mxu0 0.0
      %673 = vmatpush2.msra.mxu0 0.0
      %674 = vmatprep.subr.mxu0 0.0
      %675 = vmatpush2.msra.mxu0 0.0
      %676 = vmatprep.subr.mxu0 0.0
      %677 = vmatpush2.msra.mxu0 0.0
      %678 = vmatprep.subr.mxu0 0.0
      %679 = vmatpush2.msra.mxu0 0.0
      %680 = vmatprep.subr.mxu0 0.0
      %681 = vmatpush2.msra.mxu0 0.0
      %682 = vmatprep.subr.mxu0 0.0
      %683 = vmatpush2.msra.mxu0 0.0
      %684 = vmatprep.subr.mxu0 0.0
      %685 = vmatpush2.msra.mxu0 0.0
      %686 = vmatprep.subr.mxu0 0.0
      %687 = vmatpush2.msra.mxu0 0.0
      %688 = vmatprep.subr.mxu0 0.0
      %689 = vmatpush2.msra.mxu0 0.0
      %690 = vmatprep.subr.mxu0 0.0
      %691 = vmatpush2.msra.mxu0 0.0
      %692 = vmatprep.subr.mxu0 0.0
      %693 = vmatpush2.msra.mxu0 0.0
      %694 = vmatprep.mubr.f32.mxu0 0.0
      %695 = vmatmul.mubr.f32.gmra.mxu0 %v628
      %v696 = vpop.f32.mrf.mxu0
      %v697 = vadd.f32 0.0, %v696
      %v698 = vpop.f32.mrf.mxu0
      %699 = vdwg.mxu0
      %v701 = vsel %vm627, %v626, 0
      %703 = vmatprep.subr.mxu0 0.0
      %704 = vmatpush1.msra.mxu0 0.0
      %705 = vmatprep.subr.mxu0 0.0
      %706 = vmatpush1.msra.mxu0 0.0
      %707 = vmatprep.subr.mxu0 0.0
      %708 = vmatpush1.msra.mxu0 0.0
      %709 = vmatprep.subr.mxu0 0.0
      %710 = vmatpush1.msra.mxu0 0.0
      %711 = vmatprep.subr.mxu0 0.0
      %712 = vmatpush1.msra.mxu0 0.0
      %713 = vmatprep.subr.mxu0 0.0
      %714 = vmatpush1.msra.mxu0 0.0
      %715 = vmatprep.subr.mxu0 0.0
      %716 = vmatpush1.msra.mxu0 0.0
      %717 = vmatprep.subr.mxu0 0.0
      %718 = vmatpush1.msra.mxu0 0.0
      %719 = vmatprep.subr.mxu0 0.0
      %720 = vmatpush1.msra.mxu0 0.0
      %721 = vmatprep.subr.mxu0 0.0
      %722 = vmatpush1.msra.mxu0 0.0
      %723 = vmatprep.subr.mxu0 0.0
      %724 = vmatpush1.msra.mxu0 0.0
      %725 = vmatprep.subr.mxu0 0.0
      %726 = vmatpush1.msra.mxu0 0.0
      %727 = vmatprep.subr.mxu0 0.0
      %728 = vmatpush1.msra.mxu0 %v208
      %729 = vmatprep.subr.mxu0 0.0
      %730 = vmatpush1.msra.mxu0 %v207
      %731 = vmatprep.subr.mxu0 0.0
      %732 = vmatpush1.msra.mxu0 %v206
      %733 = vmatprep.subr.mxu0 0.0
      %734 = vmatpush1.msra.mxu0 %v205
      %735 = vmatprep.subr.mxu0 0.0
      %736 = vmatpush2.msra.mxu0 0.0
      %737 = vmatprep.subr.mxu0 0.0
      %738 = vmatpush2.msra.mxu0 0.0
      %739 = vmatprep.subr.mxu0 0.0
      %740 = vmatpush2.msra.mxu0 0.0
      %741 = vmatprep.subr.mxu0 0.0
      %742 = vmatpush2.msra.mxu0 0.0
      %743 = vmatprep.subr.mxu0 0.0
      %744 = vmatpush2.msra.mxu0 0.0
      %745 = vmatprep.subr.mxu0 0.0
      %746 = vmatpush2.msra.mxu0 0.0
      %747 = vmatprep.subr.mxu0 0.0
      %748 = vmatpush2.msra.mxu0 0.0
      %749 = vmatprep.subr.mxu0 0.0
      %750 = vmatpush2.msra.mxu0 0.0
      %751 = vmatprep.subr.mxu0 0.0
      %752 = vmatpush2.msra.mxu0 0.0
      %753 = vmatprep.subr.mxu0 0.0
      %754 = vmatpush2.msra.mxu0 0.0
      %755 = vmatprep.subr.mxu0 0.0
      %756 = vmatpush2.msra.mxu0 0.0
      %757 = vmatprep.subr.mxu0 0.0
      %758 = vmatpush2.msra.mxu0 0.0
      %759 = vmatprep.subr.mxu0 0.0
      %760 = vmatpush2.msra.mxu0 0.0
      %761 = vmatprep.subr.mxu0 0.0
      %762 = vmatpush2.msra.mxu0 0.0
      %763 = vmatprep.subr.mxu0 0.0
      %764 = vmatpush2.msra.mxu0 0.0
      %765 = vmatprep.subr.mxu0 0.0
      %766 = vmatpush2.msra.mxu0 0.0
      %767 = vmatprep.mubr.f32.mxu0 0.0
      %768 = vmatmul.mubr.f32.gmra.mxu0 %v701
      %v769 = vpop.f32.mrf.mxu0
      %v770 = vadd.f32 0.0, %v769
      %v771 = vpop.f32.mrf.mxu0
      %772 = vdwg.mxu0
      %v773 = vadd.s32 %v473, 128
      %v774 = vadd.s32 %v437, 16
      %v775 = vadd.s32 %v437, 24
      %v776 = vadd.s32 %v437, 32
      %v777 = vadd.s32 %v437, 40
      %v778 = vadd.s32 %v437, 48
      %v779 = vadd.s32 %v437, 56
      %vm780 = vcmp.eq.s32.totalorder %v473, %v437
      %vm781 = vcmp.eq.s32.totalorder %v773, %v437
      %vm782 = vcmp.eq.s32.totalorder %v473, %v438
      %vm783 = vcmp.eq.s32.totalorder %v773, %v438
      %vm784 = vcmp.eq.s32.totalorder %v473, %v774
      %vm785 = vcmp.eq.s32.totalorder %v773, %v774
      %vm786 = vcmp.eq.s32.totalorder %v473, %v775
      %vm787 = vcmp.eq.s32.totalorder %v773, %v775
      %vm788 = vcmp.eq.s32.totalorder %v473, %v776
      %vm789 = vcmp.eq.s32.totalorder %v773, %v776
      %vm790 = vcmp.eq.s32.totalorder %v473, %v777
      %vm791 = vcmp.eq.s32.totalorder %v773, %v777
      %vm792 = vcmp.eq.s32.totalorder %v473, %v778
      %vm793 = vcmp.eq.s32.totalorder %v773, %v778
      %vm794 = vcmp.eq.s32.totalorder %v473, %v779
      %vm795 = vcmp.eq.s32.totalorder %v773, %v779
      %v796 = vsel %vm780, 1, 0
      %v797 = vsel %vm781, 1, 0
      %v798 = vsel %vm782, 1, 0
      %v799 = vsel %vm783, 1, 0
      %v800 = vsel %vm784, 1, 0
      %v801 = vsel %vm785, 1, 0
      %v802 = vsel %vm786, 1, 0
      %v803 = vsel %vm787, 1, 0
      %v804 = vsel %vm788, 1, 0
      %v805 = vsel %vm789, 1, 0
      %v806 = vsel %vm790, 1, 0
      %v807 = vsel %vm791, 1, 0
      %v808 = vsel %vm792, 1, 0
      %v809 = vsel %vm793, 1, 0
      %v810 = vsel %vm794, 1, 0
      %v811 = vsel %vm795, 1, 0
      %v812 = vcvt.s32.f32 %v796
      %v813 = vcvt.s32.f32 %v797
      %v814 = vcvt.s32.f32 %v798
      %v815 = vcvt.s32.f32 %v799
      %v816 = vcvt.s32.f32 %v800
      %v817 = vcvt.s32.f32 %v801
      %v818 = vcvt.s32.f32 %v802
      %v819 = vcvt.s32.f32 %v803
      %v820 = vcvt.s32.f32 %v804
      %v821 = vcvt.s32.f32 %v805
      %v822 = vcvt.s32.f32 %v806
      %v823 = vcvt.s32.f32 %v807
      %v824 = vcvt.s32.f32 %v808
      %v825 = vcvt.s32.f32 %v809
      %v826 = vcvt.s32.f32 %v810
      %v827 = vcvt.s32.f32 %v811
      %v828 = vadd.s32 %v437, 64
      %v829 = vadd.s32 %v438, 64
      %v830 = vadd.s32 %v774, 64
      %v831 = vadd.s32 %v775, 64
      %v832 = vadd.s32 %v776, 64
      %v833 = vadd.s32 %v777, 64
      %v834 = vadd.s32 %v778, 64
      %v835 = vadd.s32 %v779, 64
      %vm836 = vcmp.eq.s32.totalorder %v473, %v828
      %vm837 = vcmp.eq.s32.totalorder %v773, %v828
      %vm838 = vcmp.eq.s32.totalorder %v473, %v829
      %vm839 = vcmp.eq.s32.totalorder %v773, %v829
      %vm840 = vcmp.eq.s32.totalorder %v473, %v830
      %vm841 = vcmp.eq.s32.totalorder %v773, %v830
      %vm842 = vcmp.eq.s32.totalorder %v473, %v831
      %vm843 = vcmp.eq.s32.totalorder %v773, %v831
      %vm844 = vcmp.eq.s32.totalorder %v473, %v832
      %vm845 = vcmp.eq.s32.totalorder %v773, %v832
      %vm846 = vcmp.eq.s32.totalorder %v473, %v833
      %vm847 = vcmp.eq.s32.totalorder %v773, %v833
      %vm848 = vcmp.eq.s32.totalorder %v473, %v834
      %vm849 = vcmp.eq.s32.totalorder %v773, %v834
      %vm850 = vcmp.eq.s32.totalorder %v473, %v835
      %vm851 = vcmp.eq.s32.totalorder %v773, %v835
      %v852 = vsel %vm836, 1, 0
      %v853 = vsel %vm837, 1, 0
      %v854 = vsel %vm838, 1, 0
      %v855 = vsel %vm839, 1, 0
      %v856 = vsel %vm840, 1, 0
      %v857 = vsel %vm841, 1, 0
      %v858 = vsel %vm842, 1, 0
      %v859 = vsel %vm843, 1, 0
      %v860 = vsel %vm844, 1, 0
      %v861 = vsel %vm845, 1, 0
      %v862 = vsel %vm846, 1, 0
      %v863 = vsel %vm847, 1, 0
      %v864 = vsel %vm848, 1, 0
      %v865 = vsel %vm849, 1, 0
      %v866 = vsel %vm850, 1, 0
      %v867 = vsel %vm851, 1, 0
      %v868 = vcvt.s32.f32 %v852
      %v869 = vcvt.s32.f32 %v853
      %v870 = vcvt.s32.f32 %v854
      %v871 = vcvt.s32.f32 %v855
      %v872 = vcvt.s32.f32 %v856
      %v873 = vcvt.s32.f32 %v857
      %v874 = vcvt.s32.f32 %v858
      %v875 = vcvt.s32.f32 %v859
      %v876 = vcvt.s32.f32 %v860
      %v877 = vcvt.s32.f32 %v861
      %v878 = vcvt.s32.f32 %v862
      %v879 = vcvt.s32.f32 %v863
      %v880 = vcvt.s32.f32 %v864
      %v881 = vcvt.s32.f32 %v865
      %v882 = vcvt.s32.f32 %v866
      %v883 = vcvt.s32.f32 %v867
      %v884 = vadd.s32 %v437, 128
      %vm885 = vcmp.eq.s32.totalorder %v473, %v884
      %vm886 = vcmp.eq.s32.totalorder %v773, %v884
      %v887 = vsel %vm885, 1, 0
      %v888 = vsel %vm886, 1, 0
      %v889 = vcvt.s32.f32 %v887
      %v890 = vcvt.s32.f32 %v888
      %v891 = vadd.s32 %v884, 3
      %vm892 = vcmp.eq.s32.totalorder %v473, %v891
      %vm893 = vcmp.eq.s32.totalorder %v773, %v891
      %v894 = vsel %vm892, 1, 0
      %v895 = vsel %vm893, 1, 0
      %v896 = vcvt.s32.f32 %v894
      %v897 = vcvt.s32.f32 %v895
      %v899 = vsel %vm341, %v619, 0
      %901 = vmatprep.subr.mxu0 0.0
      %902 = vmatpush1.msra.mxu0 0.0
      %903 = vmatprep.subr.mxu0 0.0
      %904 = vmatpush1.msra.mxu0 0.0
      %905 = vmatprep.subr.mxu0 0.0
      %906 = vmatpush1.msra.mxu0 0.0
      %907 = vmatprep.subr.mxu0 0.0
      %908 = vmatpush1.msra.mxu0 0.0
      %909 = vmatprep.subr.mxu0 0.0
      %910 = vmatpush1.msra.mxu0 0.0
      %911 = vmatprep.subr.mxu0 0.0
      %912 = vmatpush1.msra.mxu0 0.0
      %913 = vmatprep.subr.mxu0 0.0
      %914 = vmatpush1.msra.mxu0 0.0
      %915 = vmatprep.subr.mxu0 0.0
      %916 = vmatpush1.msra.mxu0 0.0
      %917 = vmatprep.subr.mxu0 %v883
      %918 = vmatpush1.msra.mxu0 %v882
      %919 = vmatprep.subr.mxu0 %v881
      %920 = vmatpush1.msra.mxu0 %v880
      %921 = vmatprep.subr.mxu0 %v879
      %922 = vmatpush1.msra.mxu0 %v878
      %923 = vmatprep.subr.mxu0 %v877
      %924 = vmatpush1.msra.mxu0 %v876
      %925 = vmatprep.subr.mxu0 %v875
      %926 = vmatpush1.msra.mxu0 %v874
      %927 = vmatprep.subr.mxu0 %v873
      %928 = vmatpush1.msra.mxu0 %v872
      %929 = vmatprep.subr.mxu0 %v871
      %930 = vmatpush1.msra.mxu0 %v870
      %931 = vmatprep.subr.mxu0 %v869
      %932 = vmatpush1.msra.mxu0 %v868
      %933 = vmatprep.subr.mxu0 0.0
      %934 = vmatpush2.msra.mxu0 0.0
      %935 = vmatprep.subr.mxu0 0.0
      %936 = vmatpush2.msra.mxu0 0.0
      %937 = vmatprep.subr.mxu0 0.0
      %938 = vmatpush2.msra.mxu0 0.0
      %939 = vmatprep.subr.mxu0 0.0
      %940 = vmatpush2.msra.mxu0 0.0
      %941 = vmatprep.subr.mxu0 0.0
      %942 = vmatpush2.msra.mxu0 0.0
      %943 = vmatprep.subr.mxu0 0.0
      %944 = vmatpush2.msra.mxu0 0.0
      %945 = vmatprep.subr.mxu0 0.0
      %946 = vmatpush2.msra.mxu0 0.0
      %947 = vmatprep.subr.mxu0 0.0
      %948 = vmatpush2.msra.mxu0 0.0
      %949 = vmatprep.subr.mxu0 0.0
      %950 = vmatpush2.msra.mxu0 0.0
      %951 = vmatprep.subr.mxu0 0.0
      %952 = vmatpush2.msra.mxu0 0.0
      %953 = vmatprep.subr.mxu0 0.0
      %954 = vmatpush2.msra.mxu0 0.0
      %955 = vmatprep.subr.mxu0 0.0
      %956 = vmatpush2.msra.mxu0 0.0
      %957 = vmatprep.subr.mxu0 0.0
      %958 = vmatpush2.msra.mxu0 0.0
      %959 = vmatprep.subr.mxu0 0.0
      %960 = vmatpush2.msra.mxu0 0.0
      %961 = vmatprep.subr.mxu0 0.0
      %962 = vmatpush2.msra.mxu0 0.0
      %963 = vmatprep.subr.mxu0 0.0
      %964 = vmatpush2.msra.mxu0 0.0
      %965 = vmatprep.mubr.f32.mxu0 0.0
      %966 = vmatmul.mubr.f32.gmra.mxu0 %v899
      %v967 = vpop.f32.mrf.mxu0
      %v968 = vadd.f32 0.0, %v967
      %v969 = vpop.f32.mrf.mxu0
      %v970 = vadd.f32 0.0, %v969
      %971 = vdwg.mxu0
      %v973 = vsel %vm341, %v549, 0
      %975 = vmatprep.subr.mxu0 0.0
      %976 = vmatpush1.msra.mxu0 0.0
      %977 = vmatprep.subr.mxu0 0.0
      %978 = vmatpush1.msra.mxu0 0.0
      %979 = vmatprep.subr.mxu0 0.0
      %980 = vmatpush1.msra.mxu0 0.0
      %981 = vmatprep.subr.mxu0 0.0
      %982 = vmatpush1.msra.mxu0 0.0
      %983 = vmatprep.subr.mxu0 0.0
      %984 = vmatpush1.msra.mxu0 0.0
      %985 = vmatprep.subr.mxu0 0.0
      %986 = vmatpush1.msra.mxu0 0.0
      %987 = vmatprep.subr.mxu0 0.0
      %988 = vmatpush1.msra.mxu0 0.0
      %989 = vmatprep.subr.mxu0 0.0
      %990 = vmatpush1.msra.mxu0 0.0
      %991 = vmatprep.subr.mxu0 %v827
      %992 = vmatpush1.msra.mxu0 %v826
      %993 = vmatprep.subr.mxu0 %v825
      %994 = vmatpush1.msra.mxu0 %v824
      %995 = vmatprep.subr.mxu0 %v823
      %996 = vmatpush1.msra.mxu0 %v822
      %997 = vmatprep.subr.mxu0 %v821
      %998 = vmatpush1.msra.mxu0 %v820
      %999 = vmatprep.subr.mxu0 %v819
      %1000 = vmatpush1.msra.mxu0 %v818
      %1001 = vmatprep.subr.mxu0 %v817
      %1002 = vmatpush1.msra.mxu0 %v816
      %1003 = vmatprep.subr.mxu0 %v815
      %1004 = vmatpush1.msra.mxu0 %v814
      %1005 = vmatprep.subr.mxu0 %v813
      %1006 = vmatpush1.msra.mxu0 %v812
      %1007 = vmatprep.subr.mxu0 0.0
      %1008 = vmatpush2.msra.mxu0 0.0
      %1009 = vmatprep.subr.mxu0 0.0
      %1010 = vmatpush2.msra.mxu0 0.0
      %1011 = vmatprep.subr.mxu0 0.0
      %1012 = vmatpush2.msra.mxu0 0.0
      %1013 = vmatprep.subr.mxu0 0.0
      %1014 = vmatpush2.msra.mxu0 0.0
      %1015 = vmatprep.subr.mxu0 0.0
      %1016 = vmatpush2.msra.mxu0 0.0
      %1017 = vmatprep.subr.mxu0 0.0
      %1018 = vmatpush2.msra.mxu0 0.0
      %1019 = vmatprep.subr.mxu0 0.0
      %1020 = vmatpush2.msra.mxu0 0.0
      %1021 = vmatprep.subr.mxu0 0.0
      %1022 = vmatpush2.msra.mxu0 0.0
      %1023 = vmatprep.subr.mxu0 0.0
      %1024 = vmatpush2.msra.mxu0 0.0
      %1025 = vmatprep.subr.mxu0 0.0
      %1026 = vmatpush2.msra.mxu0 0.0
      %1027 = vmatprep.subr.mxu0 0.0
      %1028 = vmatpush2.msra.mxu0 0.0
      %1029 = vmatprep.subr.mxu0 0.0
      %1030 = vmatpush2.msra.mxu0 0.0
      %1031 = vmatprep.subr.mxu0 0.0
      %1032 = vmatpush2.msra.mxu0 0.0
      %1033 = vmatprep.subr.mxu0 0.0
      %1034 = vmatpush2.msra.mxu0 0.0
      %1035 = vmatprep.subr.mxu0 0.0
      %1036 = vmatpush2.msra.mxu0 0.0
      %1037 = vmatprep.subr.mxu0 0.0
      %1038 = vmatpush2.msra.mxu0 0.0
      %1039 = vmatprep.mubr.f32.mxu0 0.0
      %1040 = vmatmul.mubr.f32.gmra.mxu0 %v973
      %v1041 = vpop.f32.mrf.mxu0
      %v1042 = vadd.f32 %v968, %v1041
      %v1043 = vpop.f32.mrf.mxu0
      %v1044 = vadd.f32 %v970, %v1043
      %1045 = vdwg.mxu0
      %v1047 = vsel %vm209, %v697, 0
      %v1050 = vsel %vm222, %v889, 0
      %v1053 = vsel %vm222, %v890, 0
      %1055 = vmatprep.subr.mxu0 0.0
      %1056 = vmatpush1.msra.mxu0 0.0
      %1057 = vmatprep.subr.mxu0 0.0
      %1058 = vmatpush1.msra.mxu0 0.0
      %1059 = vmatprep.subr.mxu0 0.0
      %1060 = vmatpush1.msra.mxu0 0.0
      %1061 = vmatprep.subr.mxu0 0.0
      %1062 = vmatpush1.msra.mxu0 0.0
      %1063 = vmatprep.subr.mxu0 0.0
      %1064 = vmatpush1.msra.mxu0 0.0
      %1065 = vmatprep.subr.mxu0 0.0
      %1066 = vmatpush1.msra.mxu0 0.0
      %1067 = vmatprep.subr.mxu0 0.0
      %1068 = vmatpush1.msra.mxu0 0.0
      %1069 = vmatprep.subr.mxu0 0.0
      %1070 = vmatpush1.msra.mxu0 0.0
      %1071 = vmatprep.subr.mxu0 0.0
      %1072 = vmatpush1.msra.mxu0 0.0
      %1073 = vmatprep.subr.mxu0 0.0
      %1074 = vmatpush1.msra.mxu0 0.0
      %1075 = vmatprep.subr.mxu0 0.0
      %1076 = vmatpush1.msra.mxu0 0.0
      %1077 = vmatprep.subr.mxu0 0.0
      %1078 = vmatpush1.msra.mxu0 0.0
      %1079 = vmatprep.subr.mxu0 0.0
      %1080 = vmatpush1.msra.mxu0 0.0
      %1081 = vmatprep.subr.mxu0 0.0
      %1082 = vmatpush1.msra.mxu0 0.0
      %1083 = vmatprep.subr.mxu0 0.0
      %1084 = vmatpush1.msra.mxu0 0.0
      %1085 = vmatprep.subr.mxu0 %v1053
      %1086 = vmatpush1.msra.mxu0 %v1050
      %1087 = vmatprep.subr.mxu0 0.0
      %1088 = vmatpush2.msra.mxu0 0.0
      %1089 = vmatprep.subr.mxu0 0.0
      %1090 = vmatpush2.msra.mxu0 0.0
      %1091 = vmatprep.subr.mxu0 0.0
      %1092 = vmatpush2.msra.mxu0 0.0
      %1093 = vmatprep.subr.mxu0 0.0
      %1094 = vmatpush2.msra.mxu0 0.0
      %1095 = vmatprep.subr.mxu0 0.0
      %1096 = vmatpush2.msra.mxu0 0.0
      %1097 = vmatprep.subr.mxu0 0.0
      %1098 = vmatpush2.msra.mxu0 0.0
      %1099 = vmatprep.subr.mxu0 0.0
      %1100 = vmatpush2.msra.mxu0 0.0
      %1101 = vmatprep.subr.mxu0 0.0
      %1102 = vmatpush2.msra.mxu0 0.0
      %1103 = vmatprep.subr.mxu0 0.0
      %1104 = vmatpush2.msra.mxu0 0.0
      %1105 = vmatprep.subr.mxu0 0.0
      %1106 = vmatpush2.msra.mxu0 0.0
      %1107 = vmatprep.subr.mxu0 0.0
      %1108 = vmatpush2.msra.mxu0 0.0
      %1109 = vmatprep.subr.mxu0 0.0
      %1110 = vmatpush2.msra.mxu0 0.0
      %1111 = vmatprep.subr.mxu0 0.0
      %1112 = vmatpush2.msra.mxu0 0.0
      %1113 = vmatprep.subr.mxu0 0.0
      %1114 = vmatpush2.msra.mxu0 0.0
      %1115 = vmatprep.subr.mxu0 0.0
      %1116 = vmatpush2.msra.mxu0 0.0
      %1117 = vmatprep.subr.mxu0 0.0
      %1118 = vmatpush2.msra.mxu0 0.0
      %1119 = vmatprep.mubr.f32.mxu0 0.0
      %1120 = vmatmul.mubr.f32.gmra.mxu0 %v1047
      %v1121 = vpop.f32.mrf.mxu0
      %v1122 = vadd.f32 0.0, %v1121
      %v1123 = vpop.f32.mrf.mxu0
      %v1124 = vadd.f32 0.0, %v1123
      %1125 = vdwg.mxu0
      %v1126 = vadd.f32 %v1042, %v1122
      %v1127 = vadd.f32 %v1044, %v1124
      %v1129 = vsel %vm209, %v770, 0
      %v1132 = vsel %vm222, %v896, 0
      %v1135 = vsel %vm222, %v897, 0
      %1137 = vmatprep.subr.mxu0 0.0
      %1138 = vmatpush1.msra.mxu0 0.0
      %1139 = vmatprep.subr.mxu0 0.0
      %1140 = vmatpush1.msra.mxu0 0.0
      %1141 = vmatprep.subr.mxu0 0.0
      %1142 = vmatpush1.msra.mxu0 0.0
      %1143 = vmatprep.subr.mxu0 0.0
      %1144 = vmatpush1.msra.mxu0 0.0
      %1145 = vmatprep.subr.mxu0 0.0
      %1146 = vmatpush1.msra.mxu0 0.0
      %1147 = vmatprep.subr.mxu0 0.0
      %1148 = vmatpush1.msra.mxu0 0.0
      %1149 = vmatprep.subr.mxu0 0.0
      %1150 = vmatpush1.msra.mxu0 0.0
      %1151 = vmatprep.subr.mxu0 0.0
      %1152 = vmatpush1.msra.mxu0 0.0
      %1153 = vmatprep.subr.mxu0 0.0
      %1154 = vmatpush1.msra.mxu0 0.0
      %1155 = vmatprep.subr.mxu0 0.0
      %1156 = vmatpush1.msra.mxu0 0.0
      %1157 = vmatprep.subr.mxu0 0.0
      %1158 = vmatpush1.msra.mxu0 0.0
      %1159 = vmatprep.subr.mxu0 0.0
      %1160 = vmatpush1.msra.mxu0 0.0
      %1161 = vmatprep.subr.mxu0 0.0
      %1162 = vmatpush1.msra.mxu0 0.0
      %1163 = vmatprep.subr.mxu0 0.0
      %1164 = vmatpush1.msra.mxu0 0.0
      %1165 = vmatprep.subr.mxu0 0.0
      %1166 = vmatpush1.msra.mxu0 0.0
      %1167 = vmatprep.subr.mxu0 %v1135
      %1168 = vmatpush1.msra.mxu0 %v1132
      %1169 = vmatprep.subr.mxu0 0.0
      %1170 = vmatpush2.msra.mxu0 0.0
      %1171 = vmatprep.subr.mxu0 0.0
      %1172 = vmatpush2.msra.mxu0 0.0
      %1173 = vmatprep.subr.mxu0 0.0
      %1174 = vmatpush2.msra.mxu0 0.0
      %1175 = vmatprep.subr.mxu0 0.0
      %1176 = vmatpush2.msra.mxu0 0.0
      %1177 = vmatprep.subr.mxu0 0.0
      %1178 = vmatpush2.msra.mxu0 0.0
      %1179 = vmatprep.subr.mxu0 0.0
      %1180 = vmatpush2.msra.mxu0 0.0
      %1181 = vmatprep.subr.mxu0 0.0
      %1182 = vmatpush2.msra.mxu0 0.0
      %1183 = vmatprep.subr.mxu0 0.0
      %1184 = vmatpush2.msra.mxu0 0.0
      %1185 = vmatprep.subr.mxu0 0.0
      %1186 = vmatpush2.msra.mxu0 0.0
      %1187 = vmatprep.subr.mxu0 0.0
      %1188 = vmatpush2.msra.mxu0 0.0
      %1189 = vmatprep.subr.mxu0 0.0
      %1190 = vmatpush2.msra.mxu0 0.0
      %1191 = vmatprep.subr.mxu0 0.0
      %1192 = vmatpush2.msra.mxu0 0.0
      %1193 = vmatprep.subr.mxu0 0.0
      %1194 = vmatpush2.msra.mxu0 0.0
      %1195 = vmatprep.subr.mxu0 0.0
      %1196 = vmatpush2.msra.mxu0 0.0
      %1197 = vmatprep.subr.mxu0 0.0
      %1198 = vmatpush2.msra.mxu0 0.0
      %1199 = vmatprep.subr.mxu0 0.0
      %1200 = vmatpush2.msra.mxu0 0.0
      %1201 = vmatprep.mubr.f32.mxu0 0.0
      %1202 = vmatmul.mubr.f32.gmra.mxu0 %v1129
      %v1203 = vpop.f32.mrf.mxu0
      %v1204 = vadd.f32 0.0, %v1203
      %v1205 = vpop.f32.mrf.mxu0
      %v1206 = vadd.f32 0.0, %v1205
      %1207 = vdwg.mxu0
      %v1208 = vadd.f32 %v1126, %v1204
      %v1209 = vadd.f32 %v1127, %v1206
      %v1212 = vcombine.low %v1208, %v1209
      %v1214 = vunpack.c.l.s4 1966171168
      %v1215 = vunpack.c.0.s8 %v1214
      %v1216 = vlaneseq
      %v1217 = vshrl.u32 %v1216, 7
      %v1218 = vsub.s32 %v1215, %v1217
      %v1219 = vrot.slane %v1212, %v1218
      %v1221 = vunpack.c.l.s4 1966171168
      %v1222 = vunpack.c.0.s8 %v1221
      %v1223 = vlaneseq
      %v1224 = vshrl.u32 %v1223, 7
      %v1225 = vsub.s32 %v1222, %v1224
      %v1226 = vrot.slane %v1219, %v1225
      %v1228 = vlaneseq
      %vm1229 = vcmp.ge.s32.totalorder %v1228, 0
      %vm1230 = vcmp.lt.s32.totalorder %v1228, 256
      %vm1231 = vmand %vm1229, %vm1230
      %1232 = vst.msk [vmem:[%s202] sm:$0x3] %vm1231, %v1226
      %p1233 = scmp.lt.s32.totalorder %s14, 1
      %s1234 = scalar_select %p1233, %s14, 1
      %s1235 = smul.addr %s1234, 2
      %s1236 = scalar_lea.vmem %s3, %s1235
      // Predicated region
      $region33: #{ransac_matcher.3} parent=31 // pred_check
        %p1237 = pneg %p110
      $region34: #{ransac_matcher.3} parent=31 // pred_check_branch
        %1239 = sbr.rel (%p1237) target = $region36
      $region35: #{ransac_matcher.3} parent=31 // pred_region
        _
      $region36: #{ransac_matcher.3} parent=31 // pred_fallthru
        _
    $region32: #{ransac_matcher.3} parent=5 // pred_fallthru
      _
    %p1240 = scmp.le.s32.totalorder 2, %s9
    // Predicated region
    $region37: #{ransac_matcher.3} parent=5 // pred_check
      %p1241 = pneg %p1240
    $region38: #{ransac_matcher.3} parent=5 // pred_check_branch
      %1243 = sbr.rel (%p1241) target = $region40
    $region39: #{ransac_matcher.3} parent=5 // pred_region
      %s1244 = ssub.s32 %s9, 2
      // Predicated region
      $region41: #{ransac_matcher.3} parent=39 // pred_check
        %p1245 = pneg %p116
      $region42: #{ransac_matcher.3} parent=39 // pred_check_branch
        %1247 = sbr.rel (%p1245) target = $region44
      $region43: #{ransac_matcher.3} parent=39 // pred_region
        %p1248 = scmp.lt.s32.totalorder %s15, 1
        %s1249 = scalar_select %p1248, %s15, 1
        %s1250 = smul.addr %s1249, 2
        %s1251 = scalar_lea.vmem %s3, %s1250
      $region44: #{ransac_matcher.3} parent=39 // pred_fallthru
        _
    $region40: #{ransac_matcher.3} parent=5 // pred_fallthru
      _
  $region6: #{ransac_matcher.3} parent=0 // loop_footer
    %s13 = sadd.s32 1, %s9
  $region7: #{ransac_matcher.3} parent=0 // loop_footer_branch
    %8 = sbr.rel target = $region3
  $region8: #{ransac_matcher.3} parent=0 // loop_exit
    _

</llo_original>
